<compile_context>
chip_gen: v7x
topology: tpu7x:2x2x1
jax: 0.10.0
libtpu: 0.0.40
codegen_flags: <defaults>
</compile_context>

<pallas_src>
import jax
import jax.numpy as jnp
from jax import lax
from jax.experimental import pallas as pl
from jax.experimental.pallas import tpu as pltpu

D_FEAT = 6
HIDDEN = 64
NUM_LAYERS = 2   # kernel hardcodes the 2-layer stack of the reference module
B = 4
T = 16
LN_EPS = 1e-5

# ---- packed parameter-slab layout (row offsets; every block 8-row aligned) ---
NIN = ((D_FEAT + 1 + 7) // 8) * 8      # x columns: features + ones col + pad = 8
ROW_WIH = 0                            # rows [0, NIN)         : Wih0_aug (NIN, 8H)
ROW_SMALL = NIN                        # rows [NIN, NIN+8)     : gamma/beta/wfc/bfc
ROW_WBIG = NIN + 8                     # rows [NIN+8, NIN+8+2H): Wbig (2H, 8H)
N_ROWS = ROW_WBIG + 2 * HIDDEN         # 144


def lstm_model_kernel(x_ref,           # (T*B, NIN)   time-major, ones col folded in
                      p_ref,           # (N_ROWS, 8H) packed parameter slab
                      out_ref,         # (B, 1)
                      xp_ref):         # scratch (T*B, 8H) VMEM
    H = HIDDEN
    H2, H4, H6, H8 = 2 * H, 4 * H, 6 * H, 8 * H
    Bx = out_ref.shape[0]
    T_ = x_ref.shape[0] // Bx

    # ---- Input projection (+ all gate biases) for ALL timesteps: 1 matmul. ---
    # x carries a trailing ones column, so Wih0_aug's bias row folds both
    # layers' (pre-scaled) biases in; the layer-1 weight columns are zero, so
    # every row block of xp also carries layer-1's bias for the fused step.
    xp_ref[...] = jnp.dot(x_ref[...], p_ref[pl.ds(ROW_WIH, NIN), :],
                          preferred_element_type=jnp.float32)

    def fused_gates(z, c):
        """z: (B, 8H) pre-activations, columns [i0 i1 | f0 f1 | g0 g1 | o0 o1];
        i/f/o columns are pre-scaled by 0.5 so sigmoid(a) = 0.5*tanh(a/2)+0.5."""
        t = jnp.tanh(z)                     # single EUP pass over all 8H lanes
        s = 0.5 * t + 0.5                   # sigmoid lanes (cheap VPU FMA)
        i = s[:, 0:H2]                      # packed [i0 | i1]
        f = s[:, H2:H4]
        g = t[:, H4:H6]                     # g lanes use the raw tanh
        o = s[:, H6:H8]
        c_new = f * c + i * g               # packed (B, 2H) = [c0 | c1]
        h_new = o * jnp.tanh(c_new)         # ONE tanh(c) push for both layers
        return h_new, c_new

    def step(addend, h, c):
        z = addend + jnp.dot(h, p_ref[pl.ds(ROW_WBIG, H2), :],
                             preferred_element_type=jnp.float32)
        return fused_gates(z, c)

    zeros = jnp.zeros((Bx, H2), jnp.float32)
    keep_l0 = (lax.broadcasted_iota(jnp.int32, (Bx, H2), 1) < H).astype(jnp.float32)

    # t = 0 prologue: the packed h-state is all zeros so the recurrent matmul
    # vanishes; layer-1's half of the result is junk and is masked back to 0.
    h, c = fused_gates(xp_ref[pl.ds(0, Bx), :], zeros)
    h = h * keep_l0
    c = c * keep_l0

    # Skewed fused stack: iteration t computes layer0(t) and layer1(t-1) with
    # ONE matmul, consuming h = [h0(t-1) | h1(t-2)], c = [c0(t-1) | c1(t-2)].
    for t in range(1, T_):
        h, c = step(xp_ref[pl.ds(t * Bx, Bx), :], h, c)

    # Drain: one more fused step; only its layer-1 half (h1(T-1)) is used.
    # xp row-block 0's layer-1 columns hold exactly layer-1's (scaled) bias.
    h, _ = step(xp_ref[pl.ds(0, Bx), :], h, c)
    h1 = h[:, H:H2]                                    # (B, H) last hidden state

    # ---- LayerNorm over hidden dim + fc_out on the last timestep. ------------
    small = p_ref[pl.ds(ROW_SMALL, 8), pl.ds(0, H)]    # (8, H) single small load
    gamma, beta, wfc = small[0:1, :], small[1:2, :], small[2:3, :]
    bfc = small[3:4, 0:1]

    mean = jnp.mean(h1, axis=-1, keepdims=True)
    var = jnp.mean((h1 - mean) ** 2, axis=-1, keepdims=True)
    normed = (h1 - mean) * lax.rsqrt(var + LN_EPS)
    normed = normed * gamma + beta
    out_ref[...] = jnp.sum(normed * wfc, axis=-1, keepdims=True) + bfc


def init_params(key):
    """Deterministic PyTorch-style uniform init (-1/sqrt(H), 1/sqrt(H))."""
    H, F = HIDDEN, D_FEAT
    bound = 1.0 / jnp.sqrt(jnp.float32(H))
    ks = jax.random.split(key, 12)

    def u(k, shape):
        return jax.random.uniform(k, shape, jnp.float32, -bound, bound)

    return dict(
        w_ih0=u(ks[0], (4 * H, F)),
        w_hh0=u(ks[1], (4 * H, H)),
        b_ih0=u(ks[2], (4 * H,)),
        b_hh0=u(ks[3], (4 * H,)),
        w_ih1=u(ks[4], (4 * H, H)),
        w_hh1=u(ks[5], (4 * H, H)),
        b_ih1=u(ks[6], (4 * H,)),
        b_hh1=u(ks[7], (4 * H,)),
        ln_gamma=jnp.ones((H,), jnp.float32),
        ln_beta=jnp.zeros((H,), jnp.float32),
        w_fc=u(ks[8], (1, H)),
        b_fc=u(ks[9], (1,)),
    )


def _interleave_gates(l0, l1):
    """(R, 4H) per layer in PyTorch order [i f g o] ->
       (R, 8H) with columns [i0 i1 | f0 f1 | g0 g1 | o0 o1]."""
    H = HIDDEN
    R = l0.shape[0]
    a = l0.reshape(R, 4, H)
    b = l1.reshape(R, 4, H)
    return jnp.stack([a, b], axis=2).reshape(R, 8 * H)


def _pack_params(params):
    """Build the single (N_ROWS, 8H) f32 parameter slab consumed by the kernel."""
    H, F = HIDDEN, D_FEAT
    f32 = jnp.float32

    # sigmoid(a) = 0.5*tanh(a/2) + 0.5  ->  pre-scale i/f/o columns by 0.5.
    scale = jnp.concatenate([jnp.full((4 * H,), 0.5, f32),        # i, f blocks
                             jnp.ones((2 * H,), f32),             # g block
                             jnp.full((2 * H,), 0.5, f32)])[None, :]   # o block

    b0 = (params["b_ih0"] + params["b_hh0"])[None, :]             # (1, 4H)
    b1 = (params["b_ih1"] + params["b_hh1"])[None, :]             # (1, 4H)

    # Input-projection block (both layers' biases folded via x's ones column).
    wih0_ext = _interleave_gates(params["w_ih0"].T.astype(f32),
                                 jnp.zeros((F, 4 * H), f32))      # (F, 8H)
    b_ext = _interleave_gates(b0, b1)                             # (1, 8H)
    pad = NIN - (F + 1)
    wih0_aug = jnp.concatenate(
        [wih0_ext, b_ext, jnp.zeros((pad, 8 * H), f32)], axis=0) * scale

    # Small block: LayerNorm + fc_out parameters (cols 0:H of rows ROW_SMALL..).
    small = jnp.zeros((8, 8 * H), f32)
    small = small.at[0, 0:H].set(params["ln_gamma"])
    small = small.at[1, 0:H].set(params["ln_beta"])
    small = small.at[2, 0:H].set(params["w_fc"][0])
    small = small.at[3, 0].set(params["b_fc"][0])

    # Fused recurrent block weight: [[Whh0^T, Wih1^T], [0, Whh1^T]]  (2H, 8H).
    wbig = jnp.concatenate(
        [_interleave_gates(params["w_hh0"].T, params["w_ih1"].T),
         _interleave_gates(jnp.zeros((H, 4 * H), f32), params["w_hh1"].T)],
        axis=0) * scale

    return jnp.concatenate([wih0_aug, small, wbig], axis=0)       # (N_ROWS, 8H)


def lstm_model_forward(x, params):
    """x: (B, D_FEAT * T) float32, like the PyTorch module's input."""
    H, F = HIDDEN, D_FEAT
    Bn = x.shape[0]
    xr = x.reshape(Bn, F, -1)                  # (B, F, T)   (PyTorch reshape)
    xt = jnp.transpose(xr, (2, 0, 1))          # (T, B, F)   time-major
    Tn = xt.shape[0]
    x_flat = xt.reshape(Tn * Bn, F).astype(jnp.float32)
    # Ones column folds the gate biases into the input projection; pad K to NIN.
    x_aug = jnp.concatenate(
        [x_flat, jnp.ones((Tn * Bn, 1), jnp.float32),
         jnp.zeros((Tn * Bn, NIN - F - 1), jnp.float32)], axis=1)     # (T*B, NIN)

    pslab = _pack_params(params)                                      # (N_ROWS, 8H)

    vmem = pl.BlockSpec(memory_space=pltpu.MemorySpace.VMEM)
    out = pl.pallas_call(
        lstm_model_kernel,
        out_shape=jax.ShapeDtypeStruct((Bn, 1), jnp.float32),
        in_specs=[vmem, vmem],
        out_specs=vmem,
        scratch_shapes=[pltpu.VMEM((Tn * Bn, 8 * H), jnp.float32)],
    )(x_aug, pslab)
    return out[:, 0]   # squeeze -> (B,)


def reference_forward(x, params):
    """Pure-JAX reference mirroring the PyTorch forward, for a sanity check."""
    H = HIDDEN
    Bn = x.shape[0]
    xr = jnp.transpose(x.reshape(Bn, D_FEAT, -1), (0, 2, 1))   # (B, T, F)

    def run_layer(seq, w_ih, w_hh, b_ih, b_hh):
        def step(carry, x_t):
            h, c = carry
            z = x_t @ w_ih.T + h @ w_hh.T + b_ih + b_hh
            i = jax.nn.sigmoid(z[:, 0:H])
            f = jax.nn.sigmoid(z[:, H:2 * H])
            g = jnp.tanh(z[:, 2 * H:3 * H])
            o = jax.nn.sigmoid(z[:, 3 * H:4 * H])
            c = f * c + i * g
            h = o * jnp.tanh(c)
            return (h, c), h
        init = (jnp.zeros((Bn, H)), jnp.zeros((Bn, H)))
        _, hs = lax.scan(step, init, jnp.transpose(seq, (1, 0, 2)))
        return jnp.transpose(hs, (1, 0, 2))

    h = run_layer(xr, params["w_ih0"], params["w_hh0"],
                  params["b_ih0"], params["b_hh0"])
    h = run_layer(h, params["w_ih1"], params["w_hh1"],
                  params["b_ih1"], params["b_hh1"])
    last = h[:, -1, :]
    mean = jnp.mean(last, axis=-1, keepdims=True)
    var = jnp.mean((last - mean) ** 2, axis=-1, keepdims=True)
    normed = (last - mean) / jnp.sqrt(var + LN_EPS)
    normed = normed * params["ln_gamma"] + params["ln_beta"]
    return (normed @ params["w_fc"].T + params["b_fc"])[:, 0]


if __name__ == "__main__":
    key = jax.random.PRNGKey(0)
    k_param, k_x = jax.random.split(key)
    params = init_params(k_param)

    x = jax.random.normal(k_x, (B, D_FEAT * T), jnp.float32)

    out = lstm_model_forward(x, params)
    out = jax.block_until_ready(out)

    ref = reference_forward(x, params)
    assert out.shape == (B,)
    # Tolerance leaves headroom for the tanh-based sigmoid vs jax.nn.sigmoid
    # transcendental approximation differences over 16 recurrent steps.
    assert jnp.allclose(out, ref, atol=2e-4, rtol=2e-4), (out, ref)

    print("KERNEL_OK")
</pallas_src>

<mosaic_0001>
module attributes {stable_mosaic.version = 11 : i64} {
  func.func @lstm_model_kernel(%arg0: memref<64x8xf32, #tpu.memory_space<vmem>>, %arg1: memref<144x512xf32, #tpu.memory_space<vmem>>, %arg2: memref<4x1xf32, #tpu.memory_space<vmem>>, %arg3: memref<64x512xf32, #tpu.memory_space<vmem>>) attributes {dimension_semantics = [], scalar_prefetch = 0 : i64, scratch_operands = 1 : i64, tpu.core_type = #tpu.core_type<tc>} {
    %c0 = arith.constant 0 : index
    %c0_0 = arith.constant 0 : index
    %0 = vector.load %arg0[%c0, %c0_0] : memref<64x8xf32, #tpu.memory_space<vmem>>, vector<64x8xf32>
    %c0_1 = arith.constant 0 : index
    %c0_2 = arith.constant 0 : index
    %1 = vector.load %arg1[%c0_1, %c0_2] : memref<144x512xf32, #tpu.memory_space<vmem>>, vector<8x512xf32>
    %cst = arith.constant dense<0.000000e+00> : vector<64x512xf32>
    %2 = tpu.matmul %0, %1, %cst {dimension_numbers = #tpu.dot_dimension_numbers<[1], [0], [0], [1], [0, 0, 1, 1], [], []>} : vector<64x8xf32>, vector<8x512xf32>, vector<64x512xf32> -> vector<64x512xf32>
    %c0_3 = arith.constant 0 : index
    %c0_4 = arith.constant 0 : index
    %3 = vector.load %arg3[%c0_3, %c0_4] : memref<64x512xf32, #tpu.memory_space<vmem>>, vector<64x512xf32>
    tpu.vector_store %arg3[%c0_3, %c0_4], %2 {strides = array<i32>} : memref<64x512xf32, #tpu.memory_space<vmem>>, vector<64x512xf32>,
    %cst_5 = arith.constant 0.000000e+00 : f32
    %4 = vector.broadcast %cst_5 : f32 to vector<4x128xf32>
    %5 = tpu.iota {dimensions = array<i32: 1>} : vector<4x128xi32>
    %c64_i32 = arith.constant 64 : i32
    %6 = vector.broadcast %c64_i32 : i32 to vector<4x128xi32>
    %7 = arith.cmpi slt, %5, %6 : vector<4x128xi32>
    %8 = arith.extui %7 : vector<4x128xi1> to vector<4x128xi32>
    %9 = arith.sitofp %8 : vector<4x128xi32> to vector<4x128xf32>
    %c0_6 = arith.constant 0 : index
    %c0_7 = arith.constant 0 : index
    %10 = vector.load %arg3[%c0_6, %c0_7] : memref<64x512xf32, #tpu.memory_space<vmem>>, vector<4x512xf32>
    %11 = math.tanh %10 : vector<4x512xf32>
    %cst_8 = arith.constant 5.000000e-01 : f32
    %12 = vector.broadcast %cst_8 : f32 to vector<4x512xf32>
    %13 = arith.mulf %12, %11 : vector<4x512xf32>
    %cst_9 = arith.constant 5.000000e-01 : f32
    %14 = vector.broadcast %cst_9 : f32 to vector<4x512xf32>
    %15 = arith.addf %13, %14 : vector<4x512xf32>
    %16 = vector.extract_strided_slice %15 {offsets = [0, 0], sizes = [4, 128], strides = [1, 1]} : vector<4x512xf32> to vector<4x128xf32>
    %17 = vector.extract_strided_slice %15 {offsets = [0, 128], sizes = [4, 128], strides = [1, 1]} : vector<4x512xf32> to vector<4x128xf32>
    %18 = vector.extract_strided_slice %11 {offsets = [0, 256], sizes = [4, 128], strides = [1, 1]} : vector<4x512xf32> to vector<4x128xf32>
    %19 = vector.extract_strided_slice %15 {offsets = [0, 384], sizes = [4, 128], strides = [1, 1]} : vector<4x512xf32> to vector<4x128xf32>
    %20 = arith.mulf %17, %4 : vector<4x128xf32>
    %21 = arith.mulf %16, %18 : vector<4x128xf32>
    %22 = arith.addf %20, %21 : vector<4x128xf32>
    %23 = math.tanh %22 : vector<4x128xf32>
    %24 = arith.mulf %19, %23 : vector<4x128xf32>
    %25 = arith.mulf %24, %9 : vector<4x128xf32>
    %26 = arith.mulf %22, %9 : vector<4x128xf32>
    %c4 = arith.constant 4 : index
    %c0_10 = arith.constant 0 : index
    %27 = vector.load %arg3[%c4, %c0_10] : memref<64x512xf32, #tpu.memory_space<vmem>>, vector<4x512xf32>
    %c16 = arith.constant 16 : index
    %c0_11 = arith.constant 0 : index
    %28 = vector.load %arg1[%c16, %c0_11] : memref<144x512xf32, #tpu.memory_space<vmem>>, vector<128x512xf32>
    %cst_12 = arith.constant dense<0.000000e+00> : vector<4x512xf32>
    %29 = tpu.matmul %25, %28, %cst_12 {dimension_numbers = #tpu.dot_dimension_numbers<[1], [0], [0], [1], [0, 0, 1, 1], [], []>} : vector<4x128xf32>, vector<128x512xf32>, vector<4x512xf32> -> vector<4x512xf32>
    %30 = arith.addf %27, %29 : vector<4x512xf32>
    %31 = math.tanh %30 : vector<4x512xf32>
    %cst_13 = arith.constant 5.000000e-01 : f32
    %32 = vector.broadcast %cst_13 : f32 to vector<4x512xf32>
    %33 = arith.mulf %32, %31 : vector<4x512xf32>
    %cst_14 = arith.constant 5.000000e-01 : f32
    %34 = vector.broadcast %cst_14 : f32 to vector<4x512xf32>
    %35 = arith.addf %33, %34 : vector<4x512xf32>
    %36 = vector.extract_strided_slice %35 {offsets = [0, 0], sizes = [4, 128], strides = [1, 1]} : vector<4x512xf32> to vector<4x128xf32>
    %37 = vector.extract_strided_slice %35 {offsets = [0, 128], sizes = [4, 128], strides = [1, 1]} : vector<4x512xf32> to vector<4x128xf32>
    %38 = vector.extract_strided_slice %31 {offsets = [0, 256], sizes = [4, 128], strides = [1, 1]} : vector<4x512xf32> to vector<4x128xf32>
    %39 = vector.extract_strided_slice %35 {offsets = [0, 384], sizes = [4, 128], strides = [1, 1]} : vector<4x512xf32> to vector<4x128xf32>
    %40 = arith.mulf %37, %26 : vector<4x128xf32>
    %41 = arith.mulf %36, %38 : vector<4x128xf32>
    %42 = arith.addf %40, %41 : vector<4x128xf32>
    %43 = math.tanh %42 : vector<4x128xf32>
    %44 = arith.mulf %39, %43 : vector<4x128xf32>
    %c8 = arith.constant 8 : index
    %c0_15 = arith.constant 0 : index
    %45 = vector.load %arg3[%c8, %c0_15] : memref<64x512xf32, #tpu.memory_space<vmem>>, vector<4x512xf32>
    %c16_16 = arith.constant 16 : index
    %c0_17 = arith.constant 0 : index
    %46 = vector.load %arg1[%c16_16, %c0_17] : memref<144x512xf32, #tpu.memory_space<vmem>>, vector<128x512xf32>
    %cst_18 = arith.constant dense<0.000000e+00> : vector<4x512xf32>
    %47 = tpu.matmul %44, %46, %cst_18 {dimension_numbers = #tpu.dot_dimension_numbers<[1], [0], [0], [1], [0, 0, 1, 1], [], []>} : vector<4x128xf32>, vector<128x512xf32>, vector<4x512xf32> -> vector<4x512xf32>
    %48 = arith.addf %45, %47 : vector<4x512xf32>
    %49 = math.tanh %48 : vector<4x512xf32>
    %cst_19 = arith.constant 5.000000e-01 : f32
    %50 = vector.broadcast %cst_19 : f32 to vector<4x512xf32>
    %51 = arith.mulf %50, %49 : vector<4x512xf32>
    %cst_20 = arith.constant 5.000000e-01 : f32
    %52 = vector.broadcast %cst_20 : f32 to vector<4x512xf32>
    %53 = arith.addf %51, %52 : vector<4x512xf32>
    %54 = vector.extract_strided_slice %53 {offsets = [0, 0], sizes = [4, 128], strides = [1, 1]} : vector<4x512xf32> to vector<4x128xf32>
    %55 = vector.extract_strided_slice %53 {offsets = [0, 128], sizes = [4, 128], strides = [1, 1]} : vector<4x512xf32> to vector<4x128xf32>
    %56 = vector.extract_strided_slice %49 {offsets = [0, 256], sizes = [4, 128], strides = [1, 1]} : vector<4x512xf32> to vector<4x128xf32>
    %57 = vector.extract_strided_slice %53 {offsets = [0, 384], sizes = [4, 128], strides = [1, 1]} : vector<4x512xf32> to vector<4x128xf32>
    %58 = arith.mulf %55, %42 : vector<4x128xf32>
    %59 = arith.mulf %54, %56 : vector<4x128xf32>
    %60 = arith.addf %58, %59 : vector<4x128xf32>
    %61 = math.tanh %60 : vector<4x128xf32>
    %62 = arith.mulf %57, %61 : vector<4x128xf32>
    %c12 = arith.constant 12 : index
    %c0_21 = arith.constant 0 : index
    %63 = vector.load %arg3[%c12, %c0_21] : memref<64x512xf32, #tpu.memory_space<vmem>>, vector<4x512xf32>
    %c16_22 = arith.constant 16 : index
    %c0_23 = arith.constant 0 : index
    %64 = vector.load %arg1[%c16_22, %c0_23] : memref<144x512xf32, #tpu.memory_space<vmem>>, vector<128x512xf32>
    %cst_24 = arith.constant dense<0.000000e+00> : vector<4x512xf32>
    %65 = tpu.matmul %62, %64, %cst_24 {dimension_numbers = #tpu.dot_dimension_numbers<[1], [0], [0], [1], [0, 0, 1, 1], [], []>} : vector<4x128xf32>, vector<128x512xf32>, vector<4x512xf32> -> vector<4x512xf32>
    %66 = arith.addf %63, %65 : vector<4x512xf32>
    %67 = math.tanh %66 : vector<4x512xf32>
    %cst_25 = arith.constant 5.000000e-01 : f32
    %68 = vector.broadcast %cst_25 : f32 to vector<4x512xf32>
    %69 = arith.mulf %68, %67 : vector<4x512xf32>
    %cst_26 = arith.constant 5.000000e-01 : f32
    %70 = vector.broadcast %cst_26 : f32 to vector<4x512xf32>
    %71 = arith.addf %69, %70 : vector<4x512xf32>
    %72 = vector.extract_strided_slice %71 {offsets = [0, 0], sizes = [4, 128], strides = [1, 1]} : vector<4x512xf32> to vector<4x128xf32>
    %73 = vector.extract_strided_slice %71 {offsets = [0, 128], sizes = [4, 128], strides = [1, 1]} : vector<4x512xf32> to vector<4x128xf32>
    %74 = vector.extract_strided_slice %67 {offsets = [0, 256], sizes = [4, 128], strides = [1, 1]} : vector<4x512xf32> to vector<4x128xf32>
    %75 = vector.extract_strided_slice %71 {offsets = [0, 384], sizes = [4, 128], strides = [1, 1]} : vector<4x512xf32> to vector<4x128xf32>
    %76 = arith.mulf %73, %60 : vector<4x128xf32>
    %77 = arith.mulf %72, %74 : vector<4x128xf32>
    %78 = arith.addf %76, %77 : vector<4x128xf32>
    %79 = math.tanh %78 : vector<4x128xf32>
    %80 = arith.mulf %75, %79 : vector<4x128xf32>
    %c16_27 = arith.constant 16 : index
    %c0_28 = arith.constant 0 : index
    %81 = vector.load %arg3[%c16_27, %c0_28] : memref<64x512xf32, #tpu.memory_space<vmem>>, vector<4x512xf32>
    %c16_29 = arith.constant 16 : index
    %c0_30 = arith.constant 0 : index
    %82 = vector.load %arg1[%c16_29, %c0_30] : memref<144x512xf32, #tpu.memory_space<vmem>>, vector<128x512xf32>
    %cst_31 = arith.constant dense<0.000000e+00> : vector<4x512xf32>
    %83 = tpu.matmul %80, %82, %cst_31 {dimension_numbers = #tpu.dot_dimension_numbers<[1], [0], [0], [1], [0, 0, 1, 1], [], []>} : vector<4x128xf32>, vector<128x512xf32>, vector<4x512xf32> -> vector<4x512xf32>
    %84 = arith.addf %81, %83 : vector<4x512xf32>
    %85 = math.tanh %84 : vector<4x512xf32>
    %cst_32 = arith.constant 5.000000e-01 : f32
    %86 = vector.broadcast %cst_32 : f32 to vector<4x512xf32>
    %87 = arith.mulf %86, %85 : vector<4x512xf32>
    %cst_33 = arith.constant 5.000000e-01 : f32
    %88 = vector.broadcast %cst_33 : f32 to vector<4x512xf32>
    %89 = arith.addf %87, %88 : vector<4x512xf32>
    %90 = vector.extract_strided_slice %89 {offsets = [0, 0], sizes = [4, 128], strides = [1, 1]} : vector<4x512xf32> to vector<4x128xf32>
    %91 = vector.extract_strided_slice %89 {offsets = [0, 128], sizes = [4, 128], strides = [1, 1]} : vector<4x512xf32> to vector<4x128xf32>
    %92 = vector.extract_strided_slice %85 {offsets = [0, 256], sizes = [4, 128], strides = [1, 1]} : vector<4x512xf32> to vector<4x128xf32>
    %93 = vector.extract_strided_slice %89 {offsets = [0, 384], sizes = [4, 128], strides = [1, 1]} : vector<4x512xf32> to vector<4x128xf32>
    %94 = arith.mulf %91, %78 : vector<4x128xf32>
    %95 = arith.mulf %90, %92 : vector<4x128xf32>
    %96 = arith.addf %94, %95 : vector<4x128xf32>
    %97 = math.tanh %96 : vector<4x128xf32>
    %98 = arith.mulf %93, %97 : vector<4x128xf32>
    %c20 = arith.constant 20 : index
    %c0_34 = arith.constant 0 : index
    %99 = vector.load %arg3[%c20, %c0_34] : memref<64x512xf32, #tpu.memory_space<vmem>>, vector<4x512xf32>
    %c16_35 = arith.constant 16 : index
    %c0_36 = arith.constant 0 : index
    %100 = vector.load %arg1[%c16_35, %c0_36] : memref<144x512xf32, #tpu.memory_space<vmem>>, vector<128x512xf32>
    %cst_37 = arith.constant dense<0.000000e+00> : vector<4x512xf32>
    %101 = tpu.matmul %98, %100, %cst_37 {dimension_numbers = #tpu.dot_dimension_numbers<[1], [0], [0], [1], [0, 0, 1, 1], [], []>} : vector<4x128xf32>, vector<128x512xf32>, vector<4x512xf32> -> vector<4x512xf32>
    %102 = arith.addf %99, %101 : vector<4x512xf32>
    %103 = math.tanh %102 : vector<4x512xf32>
    %cst_38 = arith.constant 5.000000e-01 : f32
    %104 = vector.broadcast %cst_38 : f32 to vector<4x512xf32>
    %105 = arith.mulf %104, %103 : vector<4x512xf32>
    %cst_39 = arith.constant 5.000000e-01 : f32
    %106 = vector.broadcast %cst_39 : f32 to vector<4x512xf32>
    %107 = arith.addf %105, %106 : vector<4x512xf32>
    %108 = vector.extract_strided_slice %107 {offsets = [0, 0], sizes = [4, 128], strides = [1, 1]} : vector<4x512xf32> to vector<4x128xf32>
    %109 = vector.extract_strided_slice %107 {offsets = [0, 128], sizes = [4, 128], strides = [1, 1]} : vector<4x512xf32> to vector<4x128xf32>
    %110 = vector.extract_strided_slice %103 {offsets = [0, 256], sizes = [4, 128], strides = [1, 1]} : vector<4x512xf32> to vector<4x128xf32>
    %111 = vector.extract_strided_slice %107 {offsets = [0, 384], sizes = [4, 128], strides = [1, 1]} : vector<4x512xf32> to vector<4x128xf32>
    %112 = arith.mulf %109, %96 : vector<4x128xf32>
    %113 = arith.mulf %108, %110 : vector<4x128xf32>
    %114 = arith.addf %112, %113 : vector<4x128xf32>
    %115 = math.tanh %114 : vector<4x128xf32>
    %116 = arith.mulf %111, %115 : vector<4x128xf32>
    %c24 = arith.constant 24 : index
    %c0_40 = arith.constant 0 : index
    %117 = vector.load %arg3[%c24, %c0_40] : memref<64x512xf32, #tpu.memory_space<vmem>>, vector<4x512xf32>
    %c16_41 = arith.constant 16 : index
    %c0_42 = arith.constant 0 : index
    %118 = vector.load %arg1[%c16_41, %c0_42] : memref<144x512xf32, #tpu.memory_space<vmem>>, vector<128x512xf32>
    %cst_43 = arith.constant dense<0.000000e+00> : vector<4x512xf32>
    %119 = tpu.matmul %116, %118, %cst_43 {dimension_numbers = #tpu.dot_dimension_numbers<[1], [0], [0], [1], [0, 0, 1, 1], [], []>} : vector<4x128xf32>, vector<128x512xf32>, vector<4x512xf32> -> vector<4x512xf32>
    %120 = arith.addf %117, %119 : vector<4x512xf32>
    %121 = math.tanh %120 : vector<4x512xf32>
    %cst_44 = arith.constant 5.000000e-01 : f32
    %122 = vector.broadcast %cst_44 : f32 to vector<4x512xf32>
    %123 = arith.mulf %122, %121 : vector<4x512xf32>
    %cst_45 = arith.constant 5.000000e-01 : f32
    %124 = vector.broadcast %cst_45 : f32 to vector<4x512xf32>
    %125 = arith.addf %123, %124 : vector<4x512xf32>
    %126 = vector.extract_strided_slice %125 {offsets = [0, 0], sizes = [4, 128], strides = [1, 1]} : vector<4x512xf32> to vector<4x128xf32>
    %127 = vector.extract_strided_slice %125 {offsets = [0, 128], sizes = [4, 128], strides = [1, 1]} : vector<4x512xf32> to vector<4x128xf32>
    %128 = vector.extract_strided_slice %121 {offsets = [0, 256], sizes = [4, 128], strides = [1, 1]} : vector<4x512xf32> to vector<4x128xf32>
    %129 = vector.extract_strided_slice %125 {offsets = [0, 384], sizes = [4, 128], strides = [1, 1]} : vector<4x512xf32> to vector<4x128xf32>
    %130 = arith.mulf %127, %114 : vector<4x128xf32>
    %131 = arith.mulf %126, %128 : vector<4x128xf32>
    %132 = arith.addf %130, %131 : vector<4x128xf32>
    %133 = math.tanh %132 : vector<4x128xf32>
    %134 = arith.mulf %129, %133 : vector<4x128xf32>
    %c28 = arith.constant 28 : index
    %c0_46 = arith.constant 0 : index
    %135 = vector.load %arg3[%c28, %c0_46] : memref<64x512xf32, #tpu.memory_space<vmem>>, vector<4x512xf32>
    %c16_47 = arith.constant 16 : index
    %c0_48 = arith.constant 0 : index
    %136 = vector.load %arg1[%c16_47, %c0_48] : memref<144x512xf32, #tpu.memory_space<vmem>>, vector<128x512xf32>
    %cst_49 = arith.constant dense<0.000000e+00> : vector<4x512xf32>
    %137 = tpu.matmul %134, %136, %cst_49 {dimension_numbers = #tpu.dot_dimension_numbers<[1], [0], [0], [1], [0, 0, 1, 1], [], []>} : vector<4x128xf32>, vector<128x512xf32>, vector<4x512xf32> -> vector<4x512xf32>
    %138 = arith.addf %135, %137 : vector<4x512xf32>
    %139 = math.tanh %138 : vector<4x512xf32>
    %cst_50 = arith.constant 5.000000e-01 : f32
    %140 = vector.broadcast %cst_50 : f32 to vector<4x512xf32>
    %141 = arith.mulf %140, %139 : vector<4x512xf32>
    %cst_51 = arith.constant 5.000000e-01 : f32
    %142 = vector.broadcast %cst_51 : f32 to vector<4x512xf32>
    %143 = arith.addf %141, %142 : vector<4x512xf32>
    %144 = vector.extract_strided_slice %143 {offsets = [0, 0], sizes = [4, 128], strides = [1, 1]} : vector<4x512xf32> to vector<4x128xf32>
    %145 = vector.extract_strided_slice %143 {offsets = [0, 128], sizes = [4, 128], strides = [1, 1]} : vector<4x512xf32> to vector<4x128xf32>
    %146 = vector.extract_strided_slice %139 {offsets = [0, 256], sizes = [4, 128], strides = [1, 1]} : vector<4x512xf32> to vector<4x128xf32>
    %147 = vector.extract_strided_slice %143 {offsets = [0, 384], sizes = [4, 128], strides = [1, 1]} : vector<4x512xf32> to vector<4x128xf32>
    %148 = arith.mulf %145, %132 : vector<4x128xf32>
    %149 = arith.mulf %144, %146 : vector<4x128xf32>
    %150 = arith.addf %148, %149 : vector<4x128xf32>
    %151 = math.tanh %150 : vector<4x128xf32>
    %152 = arith.mulf %147, %151 : vector<4x128xf32>
    %c32 = arith.constant 32 : index
    %c0_52 = arith.constant 0 : index
    %153 = vector.load %arg3[%c32, %c0_52] : memref<64x512xf32, #tpu.memory_space<vmem>>, vector<4x512xf32>
    %c16_53 = arith.constant 16 : index
    %c0_54 = arith.constant 0 : index
    %154 = vector.load %arg1[%c16_53, %c0_54] : memref<144x512xf32, #tpu.memory_space<vmem>>, vector<128x512xf32>
    %cst_55 = arith.constant dense<0.000000e+00> : vector<4x512xf32>
    %155 = tpu.matmul %152, %154, %cst_55 {dimension_numbers = #tpu.dot_dimension_numbers<[1], [0], [0], [1], [0, 0, 1, 1], [], []>} : vector<4x128xf32>, vector<128x512xf32>, vector<4x512xf32> -> vector<4x512xf32>
    %156 = arith.addf %153, %155 : vector<4x512xf32>
    %157 = math.tanh %156 : vector<4x512xf32>
    %cst_56 = arith.constant 5.000000e-01 : f32
    %158 = vector.broadcast %cst_56 : f32 to vector<4x512xf32>
    %159 = arith.mulf %158, %157 : vector<4x512xf32>
    %cst_57 = arith.constant 5.000000e-01 : f32
    %160 = vector.broadcast %cst_57 : f32 to vector<4x512xf32>
    %161 = arith.addf %159, %160 : vector<4x512xf32>
    %162 = vector.extract_strided_slice %161 {offsets = [0, 0], sizes = [4, 128], strides = [1, 1]} : vector<4x512xf32> to vector<4x128xf32>
    %163 = vector.extract_strided_slice %161 {offsets = [0, 128], sizes = [4, 128], strides = [1, 1]} : vector<4x512xf32> to vector<4x128xf32>
    %164 = vector.extract_strided_slice %157 {offsets = [0, 256], sizes = [4, 128], strides = [1, 1]} : vector<4x512xf32> to vector<4x128xf32>
    %165 = vector.extract_strided_slice %161 {offsets = [0, 384], sizes = [4, 128], strides = [1, 1]} : vector<4x512xf32> to vector<4x128xf32>
    %166 = arith.mulf %163, %150 : vector<4x128xf32>
    %167 = arith.mulf %162, %164 : vector<4x128xf32>
    %168 = arith.addf %166, %167 : vector<4x128xf32>
    %169 = math.tanh %168 : vector<4x128xf32>
    %170 = arith.mulf %165, %169 : vector<4x128xf32>
    %c36 = arith.constant 36 : index
    %c0_58 = arith.constant 0 : index
    %171 = vector.load %arg3[%c36, %c0_58] : memref<64x512xf32, #tpu.memory_space<vmem>>, vector<4x512xf32>
    %c16_59 = arith.constant 16 : index
    %c0_60 = arith.constant 0 : index
    %172 = vector.load %arg1[%c16_59, %c0_60] : memref<144x512xf32, #tpu.memory_space<vmem>>, vector<128x512xf32>
    %cst_61 = arith.constant dense<0.000000e+00> : vector<4x512xf32>
    %173 = tpu.matmul %170, %172, %cst_61 {dimension_numbers = #tpu.dot_dimension_numbers<[1], [0], [0], [1], [0, 0, 1, 1], [], []>} : vector<4x128xf32>, vector<128x512xf32>, vector<4x512xf32> -> vector<4x512xf32>
    %174 = arith.addf %171, %173 : vector<4x512xf32>
    %175 = math.tanh %174 : vector<4x512xf32>
    %cst_62 = arith.constant 5.000000e-01 : f32
    %176 = vector.broadcast %cst_62 : f32 to vector<4x512xf32>
    %177 = arith.mulf %176, %175 : vector<4x512xf32>
    %cst_63 = arith.constant 5.000000e-01 : f32
    %178 = vector.broadcast %cst_63 : f32 to vector<4x512xf32>
    %179 = arith.addf %177, %178 : vector<4x512xf32>
    %180 = vector.extract_strided_slice %179 {offsets = [0, 0], sizes = [4, 128], strides = [1, 1]} : vector<4x512xf32> to vector<4x128xf32>
    %181 = vector.extract_strided_slice %179 {offsets = [0, 128], sizes = [4, 128], strides = [1, 1]} : vector<4x512xf32> to vector<4x128xf32>
    %182 = vector.extract_strided_slice %175 {offsets = [0, 256], sizes = [4, 128], strides = [1, 1]} : vector<4x512xf32> to vector<4x128xf32>
    %183 = vector.extract_strided_slice %179 {offsets = [0, 384], sizes = [4, 128], strides = [1, 1]} : vector<4x512xf32> to vector<4x128xf32>
    %184 = arith.mulf %181, %168 : vector<4x128xf32>
    %185 = arith.mulf %180, %182 : vector<4x128xf32>
    %186 = arith.addf %184, %185 : vector<4x128xf32>
    %187 = math.tanh %186 : vector<4x128xf32>
    %188 = arith.mulf %183, %187 : vector<4x128xf32>
    %c40 = arith.constant 40 : index
    %c0_64 = arith.constant 0 : index
    %189 = vector.load %arg3[%c40, %c0_64] : memref<64x512xf32, #tpu.memory_space<vmem>>, vector<4x512xf32>
    %c16_65 = arith.constant 16 : index
    %c0_66 = arith.constant 0 : index
    %190 = vector.load %arg1[%c16_65, %c0_66] : memref<144x512xf32, #tpu.memory_space<vmem>>, vector<128x512xf32>
    %cst_67 = arith.constant dense<0.000000e+00> : vector<4x512xf32>
    %191 = tpu.matmul %188, %190, %cst_67 {dimension_numbers = #tpu.dot_dimension_numbers<[1], [0], [0], [1], [0, 0, 1, 1], [], []>} : vector<4x128xf32>, vector<128x512xf32>, vector<4x512xf32> -> vector<4x512xf32>
    %192 = arith.addf %189, %191 : vector<4x512xf32>
    %193 = math.tanh %192 : vector<4x512xf32>
    %cst_68 = arith.constant 5.000000e-01 : f32
    %194 = vector.broadcast %cst_68 : f32 to vector<4x512xf32>
    %195 = arith.mulf %194, %193 : vector<4x512xf32>
    %cst_69 = arith.constant 5.000000e-01 : f32
    %196 = vector.broadcast %cst_69 : f32 to vector<4x512xf32>
    %197 = arith.addf %195, %196 : vector<4x512xf32>
    %198 = vector.extract_strided_slice %197 {offsets = [0, 0], sizes = [4, 128], strides = [1, 1]} : vector<4x512xf32> to vector<4x128xf32>
    %199 = vector.extract_strided_slice %197 {offsets = [0, 128], sizes = [4, 128], strides = [1, 1]} : vector<4x512xf32> to vector<4x128xf32>
    %200 = vector.extract_strided_slice %193 {offsets = [0, 256], sizes = [4, 128], strides = [1, 1]} : vector<4x512xf32> to vector<4x128xf32>
    %201 = vector.extract_strided_slice %197 {offsets = [0, 384], sizes = [4, 128], strides = [1, 1]} : vector<4x512xf32> to vector<4x128xf32>
    %202 = arith.mulf %199, %186 : vector<4x128xf32>
    %203 = arith.mulf %198, %200 : vector<4x128xf32>
    %204 = arith.addf %202, %203 : vector<4x128xf32>
    %205 = math.tanh %204 : vector<4x128xf32>
    %206 = arith.mulf %201, %205 : vector<4x128xf32>
    %c44 = arith.constant 44 : index
    %c0_70 = arith.constant 0 : index
    %207 = vector.load %arg3[%c44, %c0_70] : memref<64x512xf32, #tpu.memory_space<vmem>>, vector<4x512xf32>
    %c16_71 = arith.constant 16 : index
    %c0_72 = arith.constant 0 : index
    %208 = vector.load %arg1[%c16_71, %c0_72] : memref<144x512xf32, #tpu.memory_space<vmem>>, vector<128x512xf32>
    %cst_73 = arith.constant dense<0.000000e+00> : vector<4x512xf32>
    %209 = tpu.matmul %206, %208, %cst_73 {dimension_numbers = #tpu.dot_dimension_numbers<[1], [0], [0], [1], [0, 0, 1, 1], [], []>} : vector<4x128xf32>, vector<128x512xf32>, vector<4x512xf32> -> vector<4x512xf32>
    %210 = arith.addf %207, %209 : vector<4x512xf32>
    %211 = math.tanh %210 : vector<4x512xf32>
    %cst_74 = arith.constant 5.000000e-01 : f32
    %212 = vector.broadcast %cst_74 : f32 to vector<4x512xf32>
    %213 = arith.mulf %212, %211 : vector<4x512xf32>
    %cst_75 = arith.constant 5.000000e-01 : f32
    %214 = vector.broadcast %cst_75 : f32 to vector<4x512xf32>
    %215 = arith.addf %213, %214 : vector<4x512xf32>
    %216 = vector.extract_strided_slice %215 {offsets = [0, 0], sizes = [4, 128], strides = [1, 1]} : vector<4x512xf32> to vector<4x128xf32>
    %217 = vector.extract_strided_slice %215 {offsets = [0, 128], sizes = [4, 128], strides = [1, 1]} : vector<4x512xf32> to vector<4x128xf32>
    %218 = vector.extract_strided_slice %211 {offsets = [0, 256], sizes = [4, 128], strides = [1, 1]} : vector<4x512xf32> to vector<4x128xf32>
    %219 = vector.extract_strided_slice %215 {offsets = [0, 384], sizes = [4, 128], strides = [1, 1]} : vector<4x512xf32> to vector<4x128xf32>
    %220 = arith.mulf %217, %204 : vector<4x128xf32>
    %221 = arith.mulf %216, %218 : vector<4x128xf32>
    %222 = arith.addf %220, %221 : vector<4x128xf32>
    %223 = math.tanh %222 : vector<4x128xf32>
    %224 = arith.mulf %219, %223 : vector<4x128xf32>
    %c48 = arith.constant 48 : index
    %c0_76 = arith.constant 0 : index
    %225 = vector.load %arg3[%c48, %c0_76] : memref<64x512xf32, #tpu.memory_space<vmem>>, vector<4x512xf32>
    %c16_77 = arith.constant 16 : index
    %c0_78 = arith.constant 0 : index
    %226 = vector.load %arg1[%c16_77, %c0_78] : memref<144x512xf32, #tpu.memory_space<vmem>>, vector<128x512xf32>
    %cst_79 = arith.constant dense<0.000000e+00> : vector<4x512xf32>
    %227 = tpu.matmul %224, %226, %cst_79 {dimension_numbers = #tpu.dot_dimension_numbers<[1], [0], [0], [1], [0, 0, 1, 1], [], []>} : vector<4x128xf32>, vector<128x512xf32>, vector<4x512xf32> -> vector<4x512xf32>
    %228 = arith.addf %225, %227 : vector<4x512xf32>
    %229 = math.tanh %228 : vector<4x512xf32>
    %cst_80 = arith.constant 5.000000e-01 : f32
    %230 = vector.broadcast %cst_80 : f32 to vector<4x512xf32>
    %231 = arith.mulf %230, %229 : vector<4x512xf32>
    %cst_81 = arith.constant 5.000000e-01 : f32
    %232 = vector.broadcast %cst_81 : f32 to vector<4x512xf32>
    %233 = arith.addf %231, %232 : vector<4x512xf32>
    %234 = vector.extract_strided_slice %233 {offsets = [0, 0], sizes = [4, 128], strides = [1, 1]} : vector<4x512xf32> to vector<4x128xf32>
    %235 = vector.extract_strided_slice %233 {offsets = [0, 128], sizes = [4, 128], strides = [1, 1]} : vector<4x512xf32> to vector<4x128xf32>
    %236 = vector.extract_strided_slice %229 {offsets = [0, 256], sizes = [4, 128], strides = [1, 1]} : vector<4x512xf32> to vector<4x128xf32>
    %237 = vector.extract_strided_slice %233 {offsets = [0, 384], sizes = [4, 128], strides = [1, 1]} : vector<4x512xf32> to vector<4x128xf32>
    %238 = arith.mulf %235, %222 : vector<4x128xf32>
    %239 = arith.mulf %234, %236 : vector<4x128xf32>
    %240 = arith.addf %238, %239 : vector<4x128xf32>
    %241 = math.tanh %240 : vector<4x128xf32>
    %242 = arith.mulf %237, %241 : vector<4x128xf32>
    %c52 = arith.constant 52 : index
    %c0_82 = arith.constant 0 : index
    %243 = vector.load %arg3[%c52, %c0_82] : memref<64x512xf32, #tpu.memory_space<vmem>>, vector<4x512xf32>
    %c16_83 = arith.constant 16 : index
    %c0_84 = arith.constant 0 : index
    %244 = vector.load %arg1[%c16_83, %c0_84] : memref<144x512xf32, #tpu.memory_space<vmem>>, vector<128x512xf32>
    %cst_85 = arith.constant dense<0.000000e+00> : vector<4x512xf32>
    %245 = tpu.matmul %242, %244, %cst_85 {dimension_numbers = #tpu.dot_dimension_numbers<[1], [0], [0], [1], [0, 0, 1, 1], [], []>} : vector<4x128xf32>, vector<128x512xf32>, vector<4x512xf32> -> vector<4x512xf32>
    %246 = arith.addf %243, %245 : vector<4x512xf32>
    %247 = math.tanh %246 : vector<4x512xf32>
    %cst_86 = arith.constant 5.000000e-01 : f32
    %248 = vector.broadcast %cst_86 : f32 to vector<4x512xf32>
    %249 = arith.mulf %248, %247 : vector<4x512xf32>
    %cst_87 = arith.constant 5.000000e-01 : f32
    %250 = vector.broadcast %cst_87 : f32 to vector<4x512xf32>
    %251 = arith.addf %249, %250 : vector<4x512xf32>
    %252 = vector.extract_strided_slice %251 {offsets = [0, 0], sizes = [4, 128], strides = [1, 1]} : vector<4x512xf32> to vector<4x128xf32>
    %253 = vector.extract_strided_slice %251 {offsets = [0, 128], sizes = [4, 128], strides = [1, 1]} : vector<4x512xf32> to vector<4x128xf32>
    %254 = vector.extract_strided_slice %247 {offsets = [0, 256], sizes = [4, 128], strides = [1, 1]} : vector<4x512xf32> to vector<4x128xf32>
    %255 = vector.extract_strided_slice %251 {offsets = [0, 384], sizes = [4, 128], strides = [1, 1]} : vector<4x512xf32> to vector<4x128xf32>
    %256 = arith.mulf %253, %240 : vector<4x128xf32>
    %257 = arith.mulf %252, %254 : vector<4x128xf32>
    %258 = arith.addf %256, %257 : vector<4x128xf32>
    %259 = math.tanh %258 : vector<4x128xf32>
    %260 = arith.mulf %255, %259 : vector<4x128xf32>
    %c56 = arith.constant 56 : index
    %c0_88 = arith.constant 0 : index
    %261 = vector.load %arg3[%c56, %c0_88] : memref<64x512xf32, #tpu.memory_space<vmem>>, vector<4x512xf32>
    %c16_89 = arith.constant 16 : index
    %c0_90 = arith.constant 0 : index
    %262 = vector.load %arg1[%c16_89, %c0_90] : memref<144x512xf32, #tpu.memory_space<vmem>>, vector<128x512xf32>
    %cst_91 = arith.constant dense<0.000000e+00> : vector<4x512xf32>
    %263 = tpu.matmul %260, %262, %cst_91 {dimension_numbers = #tpu.dot_dimension_numbers<[1], [0], [0], [1], [0, 0, 1, 1], [], []>} : vector<4x128xf32>, vector<128x512xf32>, vector<4x512xf32> -> vector<4x512xf32>
    %264 = arith.addf %261, %263 : vector<4x512xf32>
    %265 = math.tanh %264 : vector<4x512xf32>
    %cst_92 = arith.constant 5.000000e-01 : f32
    %266 = vector.broadcast %cst_92 : f32 to vector<4x512xf32>
    %267 = arith.mulf %266, %265 : vector<4x512xf32>
    %cst_93 = arith.constant 5.000000e-01 : f32
    %268 = vector.broadcast %cst_93 : f32 to vector<4x512xf32>
    %269 = arith.addf %267, %268 : vector<4x512xf32>
    %270 = vector.extract_strided_slice %269 {offsets = [0, 0], sizes = [4, 128], strides = [1, 1]} : vector<4x512xf32> to vector<4x128xf32>
    %271 = vector.extract_strided_slice %269 {offsets = [0, 128], sizes = [4, 128], strides = [1, 1]} : vector<4x512xf32> to vector<4x128xf32>
    %272 = vector.extract_strided_slice %265 {offsets = [0, 256], sizes = [4, 128], strides = [1, 1]} : vector<4x512xf32> to vector<4x128xf32>
    %273 = vector.extract_strided_slice %269 {offsets = [0, 384], sizes = [4, 128], strides = [1, 1]} : vector<4x512xf32> to vector<4x128xf32>
    %274 = arith.mulf %271, %258 : vector<4x128xf32>
    %275 = arith.mulf %270, %272 : vector<4x128xf32>
    %276 = arith.addf %274, %275 : vector<4x128xf32>
    %277 = math.tanh %276 : vector<4x128xf32>
    %278 = arith.mulf %273, %277 : vector<4x128xf32>
    %c60 = arith.constant 60 : index
    %c0_94 = arith.constant 0 : index
    %279 = vector.load %arg3[%c60, %c0_94] : memref<64x512xf32, #tpu.memory_space<vmem>>, vector<4x512xf32>
    %c16_95 = arith.constant 16 : index
    %c0_96 = arith.constant 0 : index
    %280 = vector.load %arg1[%c16_95, %c0_96] : memref<144x512xf32, #tpu.memory_space<vmem>>, vector<128x512xf32>
    %cst_97 = arith.constant dense<0.000000e+00> : vector<4x512xf32>
    %281 = tpu.matmul %278, %280, %cst_97 {dimension_numbers = #tpu.dot_dimension_numbers<[1], [0], [0], [1], [0, 0, 1, 1], [], []>} : vector<4x128xf32>, vector<128x512xf32>, vector<4x512xf32> -> vector<4x512xf32>
    %282 = arith.addf %279, %281 : vector<4x512xf32>
    %283 = math.tanh %282 : vector<4x512xf32>
    %cst_98 = arith.constant 5.000000e-01 : f32
    %284 = vector.broadcast %cst_98 : f32 to vector<4x512xf32>
    %285 = arith.mulf %284, %283 : vector<4x512xf32>
    %cst_99 = arith.constant 5.000000e-01 : f32
    %286 = vector.broadcast %cst_99 : f32 to vector<4x512xf32>
    %287 = arith.addf %285, %286 : vector<4x512xf32>
    %288 = vector.extract_strided_slice %287 {offsets = [0, 0], sizes = [4, 128], strides = [1, 1]} : vector<4x512xf32> to vector<4x128xf32>
    %289 = vector.extract_strided_slice %287 {offsets = [0, 128], sizes = [4, 128], strides = [1, 1]} : vector<4x512xf32> to vector<4x128xf32>
    %290 = vector.extract_strided_slice %283 {offsets = [0, 256], sizes = [4, 128], strides = [1, 1]} : vector<4x512xf32> to vector<4x128xf32>
    %291 = vector.extract_strided_slice %287 {offsets = [0, 384], sizes = [4, 128], strides = [1, 1]} : vector<4x512xf32> to vector<4x128xf32>
    %292 = arith.mulf %289, %276 : vector<4x128xf32>
    %293 = arith.mulf %288, %290 : vector<4x128xf32>
    %294 = arith.addf %292, %293 : vector<4x128xf32>
    %295 = math.tanh %294 : vector<4x128xf32>
    %296 = arith.mulf %291, %295 : vector<4x128xf32>
    %c0_100 = arith.constant 0 : index
    %c0_101 = arith.constant 0 : index
    %297 = vector.load %arg3[%c0_100, %c0_101] : memref<64x512xf32, #tpu.memory_space<vmem>>, vector<4x512xf32>
    %c16_102 = arith.constant 16 : index
    %c0_103 = arith.constant 0 : index
    %298 = vector.load %arg1[%c16_102, %c0_103] : memref<144x512xf32, #tpu.memory_space<vmem>>, vector<128x512xf32>
    %cst_104 = arith.constant dense<0.000000e+00> : vector<4x512xf32>
    %299 = tpu.matmul %296, %298, %cst_104 {dimension_numbers = #tpu.dot_dimension_numbers<[1], [0], [0], [1], [0, 0, 1, 1], [], []>} : vector<4x128xf32>, vector<128x512xf32>, vector<4x512xf32> -> vector<4x512xf32>
    %300 = arith.addf %297, %299 : vector<4x512xf32>
    %301 = math.tanh %300 : vector<4x512xf32>
    %cst_105 = arith.constant 5.000000e-01 : f32
    %302 = vector.broadcast %cst_105 : f32 to vector<4x512xf32>
    %303 = arith.mulf %302, %301 : vector<4x512xf32>
    %cst_106 = arith.constant 5.000000e-01 : f32
    %304 = vector.broadcast %cst_106 : f32 to vector<4x512xf32>
    %305 = arith.addf %303, %304 : vector<4x512xf32>
    %306 = vector.extract_strided_slice %305 {offsets = [0, 0], sizes = [4, 128], strides = [1, 1]} : vector<4x512xf32> to vector<4x128xf32>
    %307 = vector.extract_strided_slice %305 {offsets = [0, 128], sizes = [4, 128], strides = [1, 1]} : vector<4x512xf32> to vector<4x128xf32>
    %308 = vector.extract_strided_slice %301 {offsets = [0, 256], sizes = [4, 128], strides = [1, 1]} : vector<4x512xf32> to vector<4x128xf32>
    %309 = vector.extract_strided_slice %305 {offsets = [0, 384], sizes = [4, 128], strides = [1, 1]} : vector<4x512xf32> to vector<4x128xf32>
    %310 = arith.mulf %307, %294 : vector<4x128xf32>
    %311 = arith.mulf %306, %308 : vector<4x128xf32>
    %312 = arith.addf %310, %311 : vector<4x128xf32>
    %313 = math.tanh %312 : vector<4x128xf32>
    %314 = arith.mulf %309, %313 : vector<4x128xf32>
    %315 = vector.extract_strided_slice %314 {offsets = [0, 64], sizes = [4, 64], strides = [1, 1]} : vector<4x128xf32> to vector<4x64xf32>
    %c8_107 = arith.constant 8 : index
    %c0_108 = arith.constant 0 : index
    %316 = vector.load %arg1[%c8_107, %c0_108] : memref<144x512xf32, #tpu.memory_space<vmem>>, vector<8x64xf32>
    %317 = vector.extract_strided_slice %316 {offsets = [0, 0], sizes = [1, 64], strides = [1, 1]} : vector<8x64xf32> to vector<1x64xf32>
    %318 = vector.extract_strided_slice %316 {offsets = [1, 0], sizes = [1, 64], strides = [1, 1]} : vector<8x64xf32> to vector<1x64xf32>
    %319 = vector.extract_strided_slice %316 {offsets = [2, 0], sizes = [1, 64], strides = [1, 1]} : vector<8x64xf32> to vector<1x64xf32>
    %320 = vector.extract_strided_slice %316 {offsets = [3, 0], sizes = [1, 1], strides = [1, 1]} : vector<8x64xf32> to vector<1x1xf32>
    %cst_109 = arith.constant dense<0.000000e+00> : vector<4xf32>
    %321 = vector.multi_reduction <add>, %315, %cst_109 [1] : vector<4x64xf32> to vector<4xf32>
    %322 = vector.shape_cast %321 : vector<4xf32> to vector<4x1xf32>
    %cst_110 = arith.constant 6.400000e+01 : f32
    %323 = vector.broadcast %cst_110 : f32 to vector<4x1xf32>
    %324 = arith.divf %322, %323 : vector<4x1xf32>
    %325 = vector.broadcast %324 : vector<4x1xf32> to vector<4x64xf32>
    %326 = arith.subf %315, %325 : vector<4x64xf32>
    %327 = arith.mulf %326, %326 : vector<4x64xf32>
    %cst_111 = arith.constant dense<0.000000e+00> : vector<4xf32>
    %328 = vector.multi_reduction <add>, %327, %cst_111 [1] : vector<4x64xf32> to vector<4xf32>
    %329 = vector.shape_cast %328 : vector<4xf32> to vector<4x1xf32>
    %cst_112 = arith.constant 6.400000e+01 : f32
    %330 = vector.broadcast %cst_112 : f32 to vector<4x1xf32>
    %331 = arith.divf %329, %330 : vector<4x1xf32>
    %332 = vector.broadcast %324 : vector<4x1xf32> to vector<4x64xf32>
    %333 = arith.subf %315, %332 : vector<4x64xf32>
    %cst_113 = arith.constant 9.99999974E-6 : f32
    %334 = vector.broadcast %cst_113 : f32 to vector<4x1xf32>
    %335 = arith.addf %331, %334 : vector<4x1xf32>
    %336 = math.rsqrt %335 : vector<4x1xf32>
    %337 = vector.broadcast %336 : vector<4x1xf32> to vector<4x64xf32>
    %338 = arith.mulf %333, %337 : vector<4x64xf32>
    %339 = vector.broadcast %317 : vector<1x64xf32> to vector<4x64xf32>
    %340 = arith.mulf %338, %339 : vector<4x64xf32>
    %341 = vector.broadcast %318 : vector<1x64xf32> to vector<4x64xf32>
    %342 = arith.addf %340, %341 : vector<4x64xf32>
    %343 = vector.broadcast %319 : vector<1x64xf32> to vector<4x64xf32>
    %344 = arith.mulf %342, %343 : vector<4x64xf32>
    %cst_114 = arith.constant dense<0.000000e+00> : vector<4xf32>
    %345 = vector.multi_reduction <add>, %344, %cst_114 [1] : vector<4x64xf32> to vector<4xf32>
    %346 = vector.shape_cast %345 : vector<4xf32> to vector<4x1xf32>
    %347 = vector.broadcast %320 : vector<1x1xf32> to vector<4x1xf32>
    %348 = arith.addf %346, %347 : vector<4x1xf32>
    %c0_115 = arith.constant 0 : index
    %c0_116 = arith.constant 0 : index
    %349 = vector.load %arg2[%c0_115, %c0_116] : memref<4x1xf32, #tpu.memory_space<vmem>>, vector<4x1xf32>
    tpu.vector_store %arg2[%c0_115, %c0_116], %348 {strides = array<i32>} : memref<4x1xf32, #tpu.memory_space<vmem>>, vector<4x1xf32>,
    return
  }
}

</mosaic_0001>

<llo_original>
// kernel: tpu_custom_call.1
$region0: #{tpu_custom_call.1}
  #allocation0 [shape = 'u32[]', space=smem, size = 0x4, offset = 0x4, fixed_abs, tag = 'smem constant byte address 0x4 - core index']
  #allocation1 [shape = 'u32[144,128]{1,0:T(1,128)}', space=vmem, size = 0x12000, scoped, tag = 'internal scratch']
  #allocation2 [shape = 'f32[64,512]{1,0:T(8,128)}', space=vmem, size = 0x20000, scoped, tag = 'scratch operand']
  %s0 = inlined_call_operand.vmem [shape: f32[64,8], index: 0, kind: input, shape index: {}]
  %s1 = inlined_call_operand.hbm [shape: f32[144,512], index: 1, kind: input, shape index: {}]
  %s2 = inlined_call_operand.vmem [shape: f32[4,1], index: 2, kind: output, shape index: {}]
  %s3 = sld [smem:[#allocation0]]
  $region22: #{tpu_custom_call.1} parent=0
    _
  %s5 = ssub.s32 1, %s3
  %s6 = scalar_select 0, %s5, %s3
  $region1: #{tpu_custom_call.1} parent=0
    #allocation3 [shape = 'u8[294912]{0}', space=vmem, size = 0x48000, scoped, tag = 'input window, operand 1, single buffered']
    #allocation4 [shape = 's32[1]{0}', space=sflag, size = 0x4, scoped, tag = 'scoped memory for tpu_custom_call.1']
    %7 = vsyncpa [#allocation4], 0
    // Predicated region
    $region2: #{tpu_custom_call.1} parent=1 // pred_check
      _
    $region3: #{tpu_custom_call.1} parent=1 // pred_check_branch
      %9 = sbr.rel (0) target = $region5
    $region4: #{tpu_custom_call.1} parent=1 // pred_region
      _
    $region5: #{tpu_custom_call.1} parent=1 // pred_fallthru
      _
    // Predicated region
    $region6: #{tpu_custom_call.1} parent=1 // pred_check
      _
    $region7: #{tpu_custom_call.1} parent=1 // pred_check_branch
      %11 = sbr.rel (0) target = $region9
    $region8: #{tpu_custom_call.1} parent=1 // pred_region
      %s13 = ssub.s32 9216, 9216
      %14 = vsyncadd [#allocation4], %s13
      %s15 = sshll.u32 [#allocation3], 4
      %s16 = int_to_ptr.vmem [resolvable:$true] %s15
      %21 = dma.hbm_to_vmem [thread:$0]  %s1, 9216, %s16, [#allocation4], 512, 512, 32
    $region9: #{tpu_custom_call.1} parent=1 // pred_fallthru
      _
    // Predicated region
    $region10: #{tpu_custom_call.1} parent=1 // pred_check
      _
    $region11: #{tpu_custom_call.1} parent=1 // pred_check_branch
      %23 = sbr.rel (0) target = $region13
    $region12: #{tpu_custom_call.1} parent=1 // pred_region
      %24 = dma.done [#allocation4], 9216
    $region13: #{tpu_custom_call.1} parent=1 // pred_fallthru
      _
    %v25 = vld [vmem:[%s0] sm:$0xff]
    %v26 = vld [vmem:[%s0 + $0x8] sm:$0xff]
    %v27 = vld [vmem:[%s0 + $0x10] sm:$0xff]
    %v28 = vld [vmem:[%s0 + $0x18] sm:$0xff]
    %v29 = vld [vmem:[%s0 + $0x20] sm:$0xff]
    %v30 = vld [vmem:[%s0 + $0x28] sm:$0xff]
    %v31 = vld [vmem:[%s0 + $0x30] sm:$0xff]
    %v32 = vld [vmem:[%s0 + $0x38] sm:$0xff]
    %v33 = vld [vmem:[#allocation3] sm:$0xff]
    %v34 = vld [vmem:[#allocation3 + $0x8] sm:$0xff]
    %v35 = vld [vmem:[#allocation3 + $0x10] sm:$0xff]
    %v36 = vld [vmem:[#allocation3 + $0x18] sm:$0xff]
    %vm37 = vcmask 64512
    %v39 = vsel %vm37, %v25, 0
    %v42 = vsel %vm37, %v26, 0
    %v45 = vsel %vm37, %v27, 0
    %v48 = vsel %vm37, %v28, 0
    %v51 = vsel %vm37, %v29, 0
    %v54 = vsel %vm37, %v30, 0
    %v57 = vsel %vm37, %v31, 0
    %v60 = vsel %vm37, %v32, 0
    %62 = vmatprep.subr.mxu0 %v34
    %63 = vmatpush1.msra.mxu0 %v33
    %64 = vmatprep.subr.mxu0 0.0
    %65 = vmatpush1.msra.mxu0 0.0
    %66 = vmatprep.subr.mxu0 0.0
    %67 = vmatpush1.msra.mxu0 0.0
    %68 = vmatprep.subr.mxu0 0.0
    %69 = vmatpush1.msra.mxu0 0.0
    %70 = vmatprep.subr.mxu0 0.0
    %71 = vmatpush1.msra.mxu0 0.0
    %72 = vmatprep.subr.mxu0 0.0
    %73 = vmatpush1.msra.mxu0 0.0
    %74 = vmatprep.subr.mxu0 0.0
    %75 = vmatpush1.msra.mxu0 0.0
    %76 = vmatprep.subr.mxu0 0.0
    %77 = vmatpush1.msra.mxu0 0.0
    %78 = vmatprep.subr.mxu0 0.0
    %79 = vmatpush1.msra.mxu0 0.0
    %80 = vmatprep.subr.mxu0 0.0
    %81 = vmatpush1.msra.mxu0 0.0
    %82 = vmatprep.subr.mxu0 0.0
    %83 = vmatpush1.msra.mxu0 0.0
    %84 = vmatprep.subr.mxu0 0.0
    %85 = vmatpush1.msra.mxu0 0.0
    %86 = vmatprep.subr.mxu0 0.0
    %87 = vmatpush1.msra.mxu0 0.0
    %88 = vmatprep.subr.mxu0 0.0
    %89 = vmatpush1.msra.mxu0 0.0
    %90 = vmatprep.subr.mxu0 0.0
    %91 = vmatpush1.msra.mxu0 0.0
    %92 = vmatprep.subr.mxu0 0.0
    %93 = vmatpush1.msra.mxu0 0.0
    %94 = vmatprep.subr.mxu0 0.0
    %95 = vmatpush1.msra.mxu0 0.0
    %96 = vmatprep.subr.mxu0 0.0
    %97 = vmatpush1.msra.mxu0 0.0
    %98 = vmatprep.subr.mxu0 0.0
    %99 = vmatpush1.msra.mxu0 0.0
    %100 = vmatprep.subr.mxu0 0.0
    %101 = vmatpush1.msra.mxu0 0.0
    %102 = vmatprep.subr.mxu0 0.0
    %103 = vmatpush1.msra.mxu0 0.0
    %104 = vmatprep.subr.mxu0 0.0
    %105 = vmatpush1.msra.mxu0 0.0
    %106 = vmatprep.subr.mxu0 0.0
    %107 = vmatpush1.msra.mxu0 0.0
    %108 = vmatprep.subr.mxu0 0.0
    %109 = vmatpush1.msra.mxu0 0.0
    %110 = vmatprep.subr.mxu0 0.0
    %111 = vmatpush1.msra.mxu0 0.0
    %112 = vmatprep.subr.mxu0 0.0
    %113 = vmatpush1.msra.mxu0 0.0
    %114 = vmatprep.subr.mxu0 0.0
    %115 = vmatpush1.msra.mxu0 0.0
    %116 = vmatprep.subr.mxu0 0.0
    %117 = vmatpush1.msra.mxu0 0.0
    %118 = vmatprep.subr.mxu0 0.0
    %119 = vmatpush1.msra.mxu0 0.0
    %120 = vmatprep.subr.mxu0 0.0
    %121 = vmatpush1.msra.mxu0 0.0
    %122 = vmatprep.subr.mxu0 0.0
    %123 = vmatpush1.msra.mxu0 0.0
    %124 = vmatprep.subr.mxu0 0.0
    %125 = vmatpush1.msra.mxu0 0.0
    %126 = vmatprep.mubr.f32.mxu0 0.0
    %127 = vmatmul.mubr.f32.gmra.mrb[0].mxu0 %v39
    %v128 = vpop.f32.mrb[0].mxu0
    %v129 = vadd.f32 0.0, %v128
    %v130 = vpop.f32.mrb[0].mxu0
    %v131 = vadd.f32 0.0, %v130
    %132 = vmatprep.mubr.f32.mxu0 0.0
    %133 = vmatmul.mubr.f32.gmra.mrb[0].mxu0 %v42
    %v134 = vpop.f32.mrb[0].mxu0
    %v135 = vadd.f32 0.0, %v134
    %v136 = vpop.f32.mrb[0].mxu0
    %v137 = vadd.f32 0.0, %v136
    %138 = vmatprep.mubr.f32.mxu0 0.0
    %139 = vmatmul.mubr.f32.gmra.mrb[0].mxu0 %v45
    %v140 = vpop.f32.mrb[0].mxu0
    %v141 = vadd.f32 0.0, %v140
    %v142 = vpop.f32.mrb[0].mxu0
    %v143 = vadd.f32 0.0, %v142
    %144 = vmatprep.mubr.f32.mxu0 0.0
    %145 = vmatmul.mubr.f32.gmra.mrb[0].mxu0 %v48
    %v146 = vpop.f32.mrb[0].mxu0
    %v147 = vadd.f32 0.0, %v146
    %v148 = vpop.f32.mrb[0].mxu0
    %v149 = vadd.f32 0.0, %v148
    %150 = vmatprep.mubr.f32.mxu0 0.0
    %151 = vmatmul.mubr.f32.gmra.mrb[0].mxu0 %v51
    %v152 = vpop.f32.mrb[0].mxu0
    %v153 = vadd.f32 0.0, %v152
    %v154 = vpop.f32.mrb[0].mxu0
    %v155 = vadd.f32 0.0, %v154
    %156 = vmatprep.mubr.f32.mxu0 0.0
    %157 = vmatmul.mubr.f32.gmra.mrb[0].mxu0 %v54
    %v158 = vpop.f32.mrb[0].mxu0
    %v159 = vadd.f32 0.0, %v158
    %v160 = vpop.f32.mrb[0].mxu0
    %v161 = vadd.f32 0.0, %v160
    %162 = vmatprep.mubr.f32.mxu0 0.0
    %163 = vmatmul.mubr.f32.gmra.mrb[0].mxu0 %v57
    %v164 = vpop.f32.mrb[0].mxu0
    %v165 = vadd.f32 0.0, %v164
    %v166 = vpop.f32.mrb[0].mxu0
    %v167 = vadd.f32 0.0, %v166
    %168 = vmatprep.mubr.f32.mxu0 0.0
    %169 = vmatmul.mubr.f32.gmra.mrb[0].mxu0 %v60
    %v170 = vpop.f32.mrb[0].mxu0
    %v171 = vadd.f32 0.0, %v170
    %v172 = vpop.f32.mrb[0].mxu0
    %v173 = vadd.f32 0.0, %v172
    %174 = vdwg.mxu0
    %175 = vmatprep.subr.mxu0 %v36
    %176 = vmatpush1.msra.mxu0 %v35
    %177 = vmatprep.subr.mxu0 0.0
    %178 = vmatpush1.msra.mxu0 0.0
    %179 = vmatprep.subr.mxu0 0.0
    %180 = vmatpush1.msra.mxu0 0.0
    %181 = vmatprep.subr.mxu0 0.0
    %182 = vmatpush1.msra.mxu0 0.0
    %183 = vmatprep.subr.mxu0 0.0
    %184 = vmatpush1.msra.mxu0 0.0
    %185 = vmatprep.subr.mxu0 0.0
    %186 = vmatpush1.msra.mxu0 0.0
    %187 = vmatprep.subr.mxu0 0.0
    %188 = vmatpush1.msra.mxu0 0.0
    %189 = vmatprep.subr.mxu0 0.0
    %190 = vmatpush1.msra.mxu0 0.0
    %191 = vmatprep.subr.mxu0 0.0
    %192 = vmatpush1.msra.mxu0 0.0
    %193 = vmatprep.subr.mxu0 0.0
    %194 = vmatpush1.msra.mxu0 0.0
    %195 = vmatprep.subr.mxu0 0.0
    %196 = vmatpush1.msra.mxu0 0.0
    %197 = vmatprep.subr.mxu0 0.0
    %198 = vmatpush1.msra.mxu0 0.0
    %199 = vmatprep.subr.mxu0 0.0
    %200 = vmatpush1.msra.mxu0 0.0
    %201 = vmatprep.subr.mxu0 0.0
    %202 = vmatpush1.msra.mxu0 0.0
    %203 = vmatprep.subr.mxu0 0.0
    %204 = vmatpush1.msra.mxu0 0.0
    %205 = vmatprep.subr.mxu0 0.0
    %206 = vmatpush1.msra.mxu0 0.0
    %207 = vmatprep.subr.mxu0 0.0
    %208 = vmatpush1.msra.mxu0 0.0
    %209 = vmatprep.subr.mxu0 0.0
    %210 = vmatpush1.msra.mxu0 0.0
    %211 = vmatprep.subr.mxu0 0.0
    %212 = vmatpush1.msra.mxu0 0.0
    %213 = vmatprep.subr.mxu0 0.0
    %214 = vmatpush1.msra.mxu0 0.0
    %215 = vmatprep.subr.mxu0 0.0
    %216 = vmatpush1.msra.mxu0 0.0
    %217 = vmatprep.subr.mxu0 0.0
    %218 = vmatpush1.msra.mxu0 0.0
    %219 = vmatprep.subr.mxu0 0.0
    %220 = vmatpush1.msra.mxu0 0.0
    %221 = vmatprep.subr.mxu0 0.0
    %222 = vmatpush1.msra.mxu0 0.0
    %223 = vmatprep.subr.mxu0 0.0
    %224 = vmatpush1.msra.mxu0 0.0
    %225 = vmatprep.subr.mxu0 0.0
    %226 = vmatpush1.msra.mxu0 0.0
    %227 = vmatprep.subr.mxu0 0.0
    %228 = vmatpush1.msra.mxu0 0.0
    %229 = vmatprep.subr.mxu0 0.0
    %230 = vmatpush1.msra.mxu0 0.0
    %231 = vmatprep.subr.mxu0 0.0
    %232 = vmatpush1.msra.mxu0 0.0
    %233 = vmatprep.subr.mxu0 0.0
    %234 = vmatpush1.msra.mxu0 0.0
    %235 = vmatprep.subr.mxu0 0.0
    %236 = vmatpush1.msra.mxu0 0.0
    %237 = vmatprep.subr.mxu0 0.0
    %238 = vmatpush1.msra.mxu0 0.0
    %239 = vmatprep.mubr.f32.mxu0 0.0
    %240 = vmatmul.mubr.f32.gmra.mrb[0].mxu0 %v39
    %v241 = vpop.f32.mrb[0].mxu0
    %v242 = vadd.f32 0.0, %v241
    %v243 = vpop.f32.mrb[0].mxu0
    %v244 = vadd.f32 0.0, %v243
    %245 = vmatprep.mubr.f32.mxu0 0.0
    %246 = vmatmul.mubr.f32.gmra.mrb[0].mxu0 %v42
    %v247 = vpop.f32.mrb[0].mxu0
    %v248 = vadd.f32 0.0, %v247
    %v249 = vpop.f32.mrb[0].mxu0
    %v250 = vadd.f32 0.0, %v249
    %251 = vmatprep.mubr.f32.mxu0 0.0
    %252 = vmatmul.mubr.f32.gmra.mrb[0].mxu0 %v45
    %v253 = vpop.f32.mrb[0].mxu0
    %v254 = vadd.f32 0.0, %v253
    %v255 = vpop.f32.mrb[0].mxu0
    %v256 = vadd.f32 0.0, %v255
    %257 = vmatprep.mubr.f32.mxu0 0.0
    %258 = vmatmul.mubr.f32.gmra.mrb[0].mxu0 %v48
    %v259 = vpop.f32.mrb[0].mxu0
    %v260 = vadd.f32 0.0, %v259
    %v261 = vpop.f32.mrb[0].mxu0
    %v262 = vadd.f32 0.0, %v261
    %263 = vmatprep.mubr.f32.mxu0 0.0
    %264 = vmatmul.mubr.f32.gmra.mrb[0].mxu0 %v51
    %v265 = vpop.f32.mrb[0].mxu0
    %v266 = vadd.f32 0.0, %v265
    %v267 = vpop.f32.mrb[0].mxu0
    %v268 = vadd.f32 0.0, %v267
    %269 = vmatprep.mubr.f32.mxu0 0.0
    %270 = vmatmul.mubr.f32.gmra.mrb[0].mxu0 %v54
    %v271 = vpop.f32.mrb[0].mxu0
    %v272 = vadd.f32 0.0, %v271
    %v273 = vpop.f32.mrb[0].mxu0
    %v274 = vadd.f32 0.0, %v273
    %275 = vmatprep.mubr.f32.mxu0 0.0
    %276 = vmatmul.mubr.f32.gmra.mrb[0].mxu0 %v57
    %v277 = vpop.f32.mrb[0].mxu0
    %v278 = vadd.f32 0.0, %v277
    %v279 = vpop.f32.mrb[0].mxu0
    %v280 = vadd.f32 0.0, %v279
    %281 = vmatprep.mubr.f32.mxu0 0.0
    %282 = vmatmul.mubr.f32.gmra.mrb[0].mxu0 %v60
    %v283 = vpop.f32.mrb[0].mxu0
    %v284 = vadd.f32 0.0, %v283
    %v285 = vpop.f32.mrb[0].mxu0
    %v286 = vadd.f32 0.0, %v285
    %287 = vdwg.mxu0
    %288 = vst [vmem:[#allocation2] sm:$0xff] %v129
    %289 = vst [vmem:[#allocation2 + $0x8] sm:$0xff] %v131
    %290 = vst [vmem:[#allocation2 + $0x10] sm:$0xff] %v242
    %291 = vst [vmem:[#allocation2 + $0x18] sm:$0xff] %v244
    %292 = vst [vmem:[#allocation2 + $0x20] sm:$0xff] %v135
    %293 = vst [vmem:[#allocation2 + $0x28] sm:$0xff] %v137
    %294 = vst [vmem:[#allocation2 + $0x30] sm:$0xff] %v248
    %295 = vst [vmem:[#allocation2 + $0x38] sm:$0xff] %v250
    %296 = vst [vmem:[#allocation2 + $0x40] sm:$0xff] %v141
    %297 = vst [vmem:[#allocation2 + $0x48] sm:$0xff] %v143
    %298 = vst [vmem:[#allocation2 + $0x50] sm:$0xff] %v254
    %299 = vst [vmem:[#allocation2 + $0x58] sm:$0xff] %v256
    %300 = vst [vmem:[#allocation2 + $0x60] sm:$0xff] %v147
    %301 = vst [vmem:[#allocation2 + $0x68] sm:$0xff] %v149
    %302 = vst [vmem:[#allocation2 + $0x70] sm:$0xff] %v260
    %303 = vst [vmem:[#allocation2 + $0x78] sm:$0xff] %v262
    %304 = vst [vmem:[#allocation2 + $0x80] sm:$0xff] %v153
    %305 = vst [vmem:[#allocation2 + $0x88] sm:$0xff] %v155
    %306 = vst [vmem:[#allocation2 + $0x90] sm:$0xff] %v266
    %307 = vst [vmem:[#allocation2 + $0x98] sm:$0xff] %v268
    %308 = vst [vmem:[#allocation2 + $0xa0] sm:$0xff] %v159
    %309 = vst [vmem:[#allocation2 + $0xa8] sm:$0xff] %v161
    %310 = vst [vmem:[#allocation2 + $0xb0] sm:$0xff] %v272
    %311 = vst [vmem:[#allocation2 + $0xb8] sm:$0xff] %v274
    %312 = vst [vmem:[#allocation2 + $0xc0] sm:$0xff] %v165
    %313 = vst [vmem:[#allocation2 + $0xc8] sm:$0xff] %v167
    %314 = vst [vmem:[#allocation2 + $0xd0] sm:$0xff] %v278
    %315 = vst [vmem:[#allocation2 + $0xd8] sm:$0xff] %v280
    %316 = vst [vmem:[#allocation2 + $0xe0] sm:$0xff] %v171
    %317 = vst [vmem:[#allocation2 + $0xe8] sm:$0xff] %v173
    %318 = vst [vmem:[#allocation2 + $0xf0] sm:$0xff] %v284
    %319 = vst [vmem:[#allocation2 + $0xf8] sm:$0xff] %v286
    %v320 = vlaneseq
    %v321 = vand.u32 %v320, 127
    %vm322 = vcmp.lt.s32.totalorder %v321, 64
    %v323 = vsel %vm322, 1, 0
    %v324 = vcvt.s32.f32 %v323
    %v325 = vld [vmem:[#allocation2] sm:$0xf]
    %v326 = vld [vmem:[#allocation2 + $0x8] sm:$0xf]
    %v327 = vld [vmem:[#allocation2 + $0x10] sm:$0xf]
    %v328 = vld [vmem:[#allocation2 + $0x18] sm:$0xf]
    %v329 = vtanh.pop %v325
    %v330 = vtanh.pop %v326
    %v331 = vtanh.pop %v327
    %v332 = vtanh.pop %v328
    %v333 = vmul.f32 %v329, 0.5
    %v334 = vmul.f32 %v330, 0.5
    %v335 = vmul.f32 %v332, 0.5
    %v336 = vadd.f32 %v333, 0.5
    %v337 = vadd.f32 %v334, 0.5
    %v338 = vadd.f32 %v335, 0.5
    %v339 = vmul.f32 %v337, 0.0
    %v340 = vmul.f32 %v336, %v331
    %v341 = vadd.f32 %v339, %v340
    %v342 = vtanh.pop %v341
    %v343 = vmul.f32 %v338, %v342
    %v344 = vmul.f32 %v343, %v324
    %v345 = vmul.f32 %v341, %v324
    %v346 = vld [vmem:[#allocation2] sm:$0xf0]
    %v347 = vld [vmem:[#allocation2 + $0x8] sm:$0xf0]
    %v348 = vld [vmem:[#allocation2 + $0x10] sm:$0xf0]
    %v349 = vld [vmem:[#allocation2 + $0x18] sm:$0xf0]
    %v350 = vld [vmem:[#allocation3 + $0x40] sm:$0xff]
    %v351 = vld [vmem:[#allocation3 + $0x48] sm:$0xff]
    %v352 = vld [vmem:[#allocation3 + $0x50] sm:$0xff]
    %v353 = vld [vmem:[#allocation3 + $0x58] sm:$0xff]
    %v354 = vld [vmem:[#allocation3 + $0x60] sm:$0xff]
    %v355 = vld [vmem:[#allocation3 + $0x68] sm:$0xff]
    %v356 = vld [vmem:[#allocation3 + $0x70] sm:$0xff]
    %v357 = vld [vmem:[#allocation3 + $0x78] sm:$0xff]
    %v358 = vld [vmem:[#allocation3 + $0x80] sm:$0xff]
    %v359 = vld [vmem:[#allocation3 + $0x88] sm:$0xff]
    %v360 = vld [vmem:[#allocation3 + $0x90] sm:$0xff]
    %v361 = vld [vmem:[#allocation3 + $0x98] sm:$0xff]
    %v362 = vld [vmem:[#allocation3 + $0xa0] sm:$0xff]
    %v363 = vld [vmem:[#allocation3 + $0xa8] sm:$0xff]
    %v364 = vld [vmem:[#allocation3 + $0xb0] sm:$0xff]
    %v365 = vld [vmem:[#allocation3 + $0xb8] sm:$0xff]
    %v366 = vld [vmem:[#allocation3 + $0xc0] sm:$0xff]
    %v367 = vld [vmem:[#allocation3 + $0xc8] sm:$0xff]
    %v368 = vld [vmem:[#allocation3 + $0xd0] sm:$0xff]
    %v369 = vld [vmem:[#allocation3 + $0xd8] sm:$0xff]
    %v370 = vld [vmem:[#allocation3 + $0xe0] sm:$0xff]
    %v371 = vld [vmem:[#allocation3 + $0xe8] sm:$0xff]
    %v372 = vld [vmem:[#allocation3 + $0xf0] sm:$0xff]
    %v373 = vld [vmem:[#allocation3 + $0xf8] sm:$0xff]
    %v374 = vld [vmem:[#allocation3 + $0x100] sm:$0xff]
    %v375 = vld [vmem:[#allocation3 + $0x108] sm:$0xff]
    %v376 = vld [vmem:[#allocation3 + $0x110] sm:$0xff]
    %v377 = vld [vmem:[#allocation3 + $0x118] sm:$0xff]
    %v378 = vld [vmem:[#allocation3 + $0x120] sm:$0xff]
    %v379 = vld [vmem:[#allocation3 + $0x128] sm:$0xff]
    %v380 = vld [vmem:[#allocation3 + $0x130] sm:$0xff]
    %v381 = vld [vmem:[#allocation3 + $0x138] sm:$0xff]
    %v382 = vld [vmem:[#allocation3 + $0x140] sm:$0xff]
    %v383 = vld [vmem:[#allocation3 + $0x148] sm:$0xff]
    %v384 = vld [vmem:[#allocation3 + $0x150] sm:$0xff]
    %v385 = vld [vmem:[#allocation3 + $0x158] sm:$0xff]
    %v386 = vld [vmem:[#allocation3 + $0x160] sm:$0xff]
    %v387 = vld [vmem:[#allocation3 + $0x168] sm:$0xff]
    %v388 = vld [vmem:[#allocation3 + $0x170] sm:$0xff]
    %v389 = vld [vmem:[#allocation3 + $0x178] sm:$0xff]
    %v390 = vld [vmem:[#allocation3 + $0x180] sm:$0xff]
    %v391 = vld [vmem:[#allocation3 + $0x188] sm:$0xff]
    %v392 = vld [vmem:[#allocation3 + $0x190] sm:$0xff]
    %v393 = vld [vmem:[#allocation3 + $0x198] sm:$0xff]
    %v394 = vld [vmem:[#allocation3 + $0x1a0] sm:$0xff]
    %v395 = vld [vmem:[#allocation3 + $0x1a8] sm:$0xff]
    %v396 = vld [vmem:[#allocation3 + $0x1b0] sm:$0xff]
    %v397 = vld [vmem:[#allocation3 + $0x1b8] sm:$0xff]
    %v398 = vld [vmem:[#allocation3 + $0x1c0] sm:$0xff]
    %v399 = vld [vmem:[#allocation3 + $0x1c8] sm:$0xff]
    %v400 = vld [vmem:[#allocation3 + $0x1d0] sm:$0xff]
    %v401 = vld [vmem:[#allocation3 + $0x1d8] sm:$0xff]
    %v402 = vld [vmem:[#allocation3 + $0x1e0] sm:$0xff]
    %v403 = vld [vmem:[#allocation3 + $0x1e8] sm:$0xff]
    %v404 = vld [vmem:[#allocation3 + $0x1f0] sm:$0xff]
    %v405 = vld [vmem:[#allocation3 + $0x1f8] sm:$0xff]
    %v406 = vld [vmem:[#allocation3 + $0x200] sm:$0xff]
    %v407 = vld [vmem:[#allocation3 + $0x208] sm:$0xff]
    %v408 = vld [vmem:[#allocation3 + $0x210] sm:$0xff]
    %v409 = vld [vmem:[#allocation3 + $0x218] sm:$0xff]
    %v410 = vld [vmem:[#allocation3 + $0x220] sm:$0xff]
    %v411 = vld [vmem:[#allocation3 + $0x228] sm:$0xff]
    %v412 = vld [vmem:[#allocation3 + $0x230] sm:$0xff]
    %v413 = vld [vmem:[#allocation3 + $0x238] sm:$0xff]
    %414 = vmatprep.subr.mxu0 %v351
    %415 = vmatpush1.msra.mxu0 %v350
    %416 = vmatprep.subr.mxu0 %v355
    %417 = vmatpush1.msra.mxu0 %v354
    %418 = vmatprep.subr.mxu0 %v359
    %419 = vmatpush1.msra.mxu0 %v358
    %420 = vmatprep.subr.mxu0 %v363
    %421 = vmatpush1.msra.mxu0 %v362
    %422 = vmatprep.subr.mxu0 %v367
    %423 = vmatpush1.msra.mxu0 %v366
    %424 = vmatprep.subr.mxu0 %v371
    %425 = vmatpush1.msra.mxu0 %v370
    %426 = vmatprep.subr.mxu0 %v375
    %427 = vmatpush1.msra.mxu0 %v374
    %428 = vmatprep.subr.mxu0 %v379
    %429 = vmatpush1.msra.mxu0 %v378
    %430 = vmatprep.subr.mxu0 %v383
    %431 = vmatpush1.msra.mxu0 %v382
    %432 = vmatprep.subr.mxu0 %v387
    %433 = vmatpush1.msra.mxu0 %v386
    %434 = vmatprep.subr.mxu0 %v391
    %435 = vmatpush1.msra.mxu0 %v390
    %436 = vmatprep.subr.mxu0 %v395
    %437 = vmatpush1.msra.mxu0 %v394
    %438 = vmatprep.subr.mxu0 %v399
    %439 = vmatpush1.msra.mxu0 %v398
    %440 = vmatprep.subr.mxu0 %v403
    %441 = vmatpush1.msra.mxu0 %v402
    %442 = vmatprep.subr.mxu0 %v407
    %443 = vmatpush1.msra.mxu0 %v406
    %444 = vmatprep.subr.mxu0 %v411
    %445 = vmatpush1.msra.mxu0 %v410
    %446 = vmatprep.subr.mxu0 0.0
    %447 = vmatpush1.msra.mxu0 0.0
    %448 = vmatprep.subr.mxu0 0.0
    %449 = vmatpush1.msra.mxu0 0.0
    %450 = vmatprep.subr.mxu0 0.0
    %451 = vmatpush1.msra.mxu0 0.0
    %452 = vmatprep.subr.mxu0 0.0
    %453 = vmatpush1.msra.mxu0 0.0
    %454 = vmatprep.subr.mxu0 0.0
    %455 = vmatpush1.msra.mxu0 0.0
    %456 = vmatprep.subr.mxu0 0.0
    %457 = vmatpush1.msra.mxu0 0.0
    %458 = vmatprep.subr.mxu0 0.0
    %459 = vmatpush1.msra.mxu0 0.0
    %460 = vmatprep.subr.mxu0 0.0
    %461 = vmatpush1.msra.mxu0 0.0
    %462 = vmatprep.subr.mxu0 0.0
    %463 = vmatpush1.msra.mxu0 0.0
    %464 = vmatprep.subr.mxu0 0.0
    %465 = vmatpush1.msra.mxu0 0.0
    %466 = vmatprep.subr.mxu0 0.0
    %467 = vmatpush1.msra.mxu0 0.0
    %468 = vmatprep.subr.mxu0 0.0
    %469 = vmatpush1.msra.mxu0 0.0
    %470 = vmatprep.subr.mxu0 0.0
    %471 = vmatpush1.msra.mxu0 0.0
    %472 = vmatprep.subr.mxu0 0.0
    %473 = vmatpush1.msra.mxu0 0.0
    %474 = vmatprep.subr.mxu0 0.0
    %475 = vmatpush1.msra.mxu0 0.0
    %476 = vmatprep.subr.mxu0 0.0
    %477 = vmatpush1.msra.mxu0 0.0
    %478 = vmatprep.mubr.f32.mxu0 0.0
    %479 = vmatmul.mubr.f32.gmra.mrb[0].mxu0 %v344
    %v480 = vpop.f32.mrb[0].mxu0
    %v481 = vadd.f32 0.0, %v480
    %v482 = vpop.f32.mrb[0].mxu0
    %v483 = vadd.f32 0.0, %v482
    %484 = vdwg.mxu0
    %485 = vmatprep.subr.mxu0 %v353
    %486 = vmatpush1.msra.mxu0 %v352
    %487 = vmatprep.subr.mxu0 %v357
    %488 = vmatpush1.msra.mxu0 %v356
    %489 = vmatprep.subr.mxu0 %v361
    %490 = vmatpush1.msra.mxu0 %v360
    %491 = vmatprep.subr.mxu0 %v365
    %492 = vmatpush1.msra.mxu0 %v364
    %493 = vmatprep.subr.mxu0 %v369
    %494 = vmatpush1.msra.mxu0 %v368
    %495 = vmatprep.subr.mxu0 %v373
    %496 = vmatpush1.msra.mxu0 %v372
    %497 = vmatprep.subr.mxu0 %v377
    %498 = vmatpush1.msra.mxu0 %v376
    %499 = vmatprep.subr.mxu0 %v381
    %500 = vmatpush1.msra.mxu0 %v380
    %501 = vmatprep.subr.mxu0 %v385
    %502 = vmatpush1.msra.mxu0 %v384
    %503 = vmatprep.subr.mxu0 %v389
    %504 = vmatpush1.msra.mxu0 %v388
    %505 = vmatprep.subr.mxu0 %v393
    %506 = vmatpush1.msra.mxu0 %v392
    %507 = vmatprep.subr.mxu0 %v397
    %508 = vmatpush1.msra.mxu0 %v396
    %509 = vmatprep.subr.mxu0 %v401
    %510 = vmatpush1.msra.mxu0 %v400
    %511 = vmatprep.subr.mxu0 %v405
    %512 = vmatpush1.msra.mxu0 %v404
    %513 = vmatprep.subr.mxu0 %v409
    %514 = vmatpush1.msra.mxu0 %v408
    %515 = vmatprep.subr.mxu0 %v413
    %516 = vmatpush1.msra.mxu0 %v412
    %517 = vmatprep.subr.mxu0 0.0
    %518 = vmatpush1.msra.mxu0 0.0
    %519 = vmatprep.subr.mxu0 0.0
    %520 = vmatpush1.msra.mxu0 0.0
    %521 = vmatprep.subr.mxu0 0.0
    %522 = vmatpush1.msra.mxu0 0.0
    %523 = vmatprep.subr.mxu0 0.0
    %524 = vmatpush1.msra.mxu0 0.0
    %525 = vmatprep.subr.mxu0 0.0
    %526 = vmatpush1.msra.mxu0 0.0
    %527 = vmatprep.subr.mxu0 0.0
    %528 = vmatpush1.msra.mxu0 0.0
    %529 = vmatprep.subr.mxu0 0.0
    %530 = vmatpush1.msra.mxu0 0.0
    %531 = vmatprep.subr.mxu0 0.0
    %532 = vmatpush1.msra.mxu0 0.0
    %533 = vmatprep.subr.mxu0 0.0
    %534 = vmatpush1.msra.mxu0 0.0
    %535 = vmatprep.subr.mxu0 0.0
    %536 = vmatpush1.msra.mxu0 0.0
    %537 = vmatprep.subr.mxu0 0.0
    %538 = vmatpush1.msra.mxu0 0.0
    %539 = vmatprep.subr.mxu0 0.0
    %540 = vmatpush1.msra.mxu0 0.0
    %541 = vmatprep.subr.mxu0 0.0
    %542 = vmatpush1.msra.mxu0 0.0
    %543 = vmatprep.subr.mxu0 0.0
    %544 = vmatpush1.msra.mxu0 0.0
    %545 = vmatprep.subr.mxu0 0.0
    %546 = vmatpush1.msra.mxu0 0.0
    %547 = vmatprep.subr.mxu0 0.0
    %548 = vmatpush1.msra.mxu0 0.0
    %549 = vmatprep.mubr.f32.mxu0 0.0
    %550 = vmatmul.mubr.f32.gmra.mrb[0].mxu0 %v344
    %v551 = vpop.f32.mrb[0].mxu0
    %v552 = vadd.f32 0.0, %v551
    %v553 = vpop.f32.mrb[0].mxu0
    %v554 = vadd.f32 0.0, %v553
    %555 = vdwg.mxu0
    %v560 = vrot.slane %v481, 4
    %v561 = vrot.slane %v483, 4
    %v562 = vrot.slane %v552, 4
    %v563 = vrot.slane %v554, 4
    %v568 = vadd.f32 %v346, %v560
    %v569 = vadd.f32 %v347, %v561
    %v570 = vadd.f32 %v348, %v562
    %v571 = vadd.f32 %v349, %v563
    %v572 = vtanh.pop %v568
    %v573 = vtanh.pop %v569
    %v574 = vtanh.pop %v570
    %v575 = vtanh.pop %v571
    %v576 = vmul.f32 %v572, 0.5
    %v577 = vmul.f32 %v573, 0.5
    %v578 = vmul.f32 %v575, 0.5
    %v579 = vadd.f32 %v576, 0.5
    %v580 = vadd.f32 %v577, 0.5
    %v581 = vadd.f32 %v578, 0.5
    %v583 = vrot.slane %v345, 4
    %v585 = vmul.f32 %v580, %v583
    %v586 = vmul.f32 %v579, %v574
    %v587 = vadd.f32 %v585, %v586
    %v588 = vtanh.pop %v587
    %v589 = vmul.f32 %v581, %v588
    %v590 = vld [vmem:[#allocation2 + $0x20] sm:$0xf]
    %v591 = vld [vmem:[#allocation2 + $0x28] sm:$0xf]
    %v592 = vld [vmem:[#allocation2 + $0x30] sm:$0xf]
    %v593 = vld [vmem:[#allocation2 + $0x38] sm:$0xf]
    %v595 = vrot.slane %v589, 4
    %597 = vmatprep.subr.mxu0 %v351
    %598 = vmatpush1.msra.mxu0 %v350
    %599 = vmatprep.subr.mxu0 %v355
    %600 = vmatpush1.msra.mxu0 %v354
    %601 = vmatprep.subr.mxu0 %v359
    %602 = vmatpush1.msra.mxu0 %v358
    %603 = vmatprep.subr.mxu0 %v363
    %604 = vmatpush1.msra.mxu0 %v362
    %605 = vmatprep.subr.mxu0 %v367
    %606 = vmatpush1.msra.mxu0 %v366
    %607 = vmatprep.subr.mxu0 %v371
    %608 = vmatpush1.msra.mxu0 %v370
    %609 = vmatprep.subr.mxu0 %v375
    %610 = vmatpush1.msra.mxu0 %v374
    %611 = vmatprep.subr.mxu0 %v379
    %612 = vmatpush1.msra.mxu0 %v378
    %613 = vmatprep.subr.mxu0 %v383
    %614 = vmatpush1.msra.mxu0 %v382
    %615 = vmatprep.subr.mxu0 %v387
    %616 = vmatpush1.msra.mxu0 %v386
    %617 = vmatprep.subr.mxu0 %v391
    %618 = vmatpush1.msra.mxu0 %v390
    %619 = vmatprep.subr.mxu0 %v395
    %620 = vmatpush1.msra.mxu0 %v394
    %621 = vmatprep.subr.mxu0 %v399
    %622 = vmatpush1.msra.mxu0 %v398
    %623 = vmatprep.subr.mxu0 %v403
    %624 = vmatpush1.msra.mxu0 %v402
    %625 = vmatprep.subr.mxu0 %v407
    %626 = vmatpush1.msra.mxu0 %v406
    %627 = vmatprep.subr.mxu0 %v411
    %628 = vmatpush1.msra.mxu0 %v410
    %629 = vmatprep.subr.mxu0 0.0
    %630 = vmatpush1.msra.mxu0 0.0
    %631 = vmatprep.subr.mxu0 0.0
    %632 = vmatpush1.msra.mxu0 0.0
    %633 = vmatprep.subr.mxu0 0.0
    %634 = vmatpush1.msra.mxu0 0.0
    %635 = vmatprep.subr.mxu0 0.0
    %636 = vmatpush1.msra.mxu0 0.0
    %637 = vmatprep.subr.mxu0 0.0
    %638 = vmatpush1.msra.mxu0 0.0
    %639 = vmatprep.subr.mxu0 0.0
    %640 = vmatpush1.msra.mxu0 0.0
    %641 = vmatprep.subr.mxu0 0.0
    %642 = vmatpush1.msra.mxu0 0.0
    %643 = vmatprep.subr.mxu0 0.0
    %644 = vmatpush1.msra.mxu0 0.0
    %645 = vmatprep.subr.mxu0 0.0
    %646 = vmatpush1.msra.mxu0 0.0
    %647 = vmatprep.subr.mxu0 0.0
    %648 = vmatpush1.msra.mxu0 0.0
    %649 = vmatprep.subr.mxu0 0.0
    %650 = vmatpush1.msra.mxu0 0.0
    %651 = vmatprep.subr.mxu0 0.0
    %652 = vmatpush1.msra.mxu0 0.0
    %653 = vmatprep.subr.mxu0 0.0
    %654 = vmatpush1.msra.mxu0 0.0
    %655 = vmatprep.subr.mxu0 0.0
    %656 = vmatpush1.msra.mxu0 0.0
    %657 = vmatprep.subr.mxu0 0.0
    %658 = vmatpush1.msra.mxu0 0.0
    %659 = vmatprep.subr.mxu0 0.0
    %660 = vmatpush1.msra.mxu0 0.0
    %661 = vmatprep.mubr.f32.mxu0 0.0
    %662 = vmatmul.mubr.f32.gmra.mrb[0].mxu0 %v595
    %v663 = vpop.f32.mrb[0].mxu0
    %v664 = vadd.f32 0.0, %v663
    %v665 = vpop.f32.mrb[0].mxu0
    %v666 = vadd.f32 0.0, %v665
    %667 = vdwg.mxu0
    %668 = vmatprep.subr.mxu0 %v353
    %669 = vmatpush1.msra.mxu0 %v352
    %670 = vmatprep.subr.mxu0 %v357
    %671 = vmatpush1.msra.mxu0 %v356
    %672 = vmatprep.subr.mxu0 %v361
    %673 = vmatpush1.msra.mxu0 %v360
    %674 = vmatprep.subr.mxu0 %v365
    %675 = vmatpush1.msra.mxu0 %v364
    %676 = vmatprep.subr.mxu0 %v369
    %677 = vmatpush1.msra.mxu0 %v368
    %678 = vmatprep.subr.mxu0 %v373
    %679 = vmatpush1.msra.mxu0 %v372
    %680 = vmatprep.subr.mxu0 %v377
    %681 = vmatpush1.msra.mxu0 %v376
    %682 = vmatprep.subr.mxu0 %v381
    %683 = vmatpush1.msra.mxu0 %v380
    %684 = vmatprep.subr.mxu0 %v385
    %685 = vmatpush1.msra.mxu0 %v384
    %686 = vmatprep.subr.mxu0 %v389
    %687 = vmatpush1.msra.mxu0 %v388
    %688 = vmatprep.subr.mxu0 %v393
    %689 = vmatpush1.msra.mxu0 %v392
    %690 = vmatprep.subr.mxu0 %v397
    %691 = vmatpush1.msra.mxu0 %v396
    %692 = vmatprep.subr.mxu0 %v401
    %693 = vmatpush1.msra.mxu0 %v400
    %694 = vmatprep.subr.mxu0 %v405
    %695 = vmatpush1.msra.mxu0 %v404
    %696 = vmatprep.subr.mxu0 %v409
    %697 = vmatpush1.msra.mxu0 %v408
    %698 = vmatprep.subr.mxu0 %v413
    %699 = vmatpush1.msra.mxu0 %v412
    %700 = vmatprep.subr.mxu0 0.0
    %701 = vmatpush1.msra.mxu0 0.0
    %702 = vmatprep.subr.mxu0 0.0
    %703 = vmatpush1.msra.mxu0 0.0
    %704 = vmatprep.subr.mxu0 0.0
    %705 = vmatpush1.msra.mxu0 0.0
    %706 = vmatprep.subr.mxu0 0.0
    %707 = vmatpush1.msra.mxu0 0.0
    %708 = vmatprep.subr.mxu0 0.0
    %709 = vmatpush1.msra.mxu0 0.0
    %710 = vmatprep.subr.mxu0 0.0
    %711 = vmatpush1.msra.mxu0 0.0
    %712 = vmatprep.subr.mxu0 0.0
    %713 = vmatpush1.msra.mxu0 0.0
    %714 = vmatprep.subr.mxu0 0.0
    %715 = vmatpush1.msra.mxu0 0.0
    %716 = vmatprep.subr.mxu0 0.0
    %717 = vmatpush1.msra.mxu0 0.0
    %718 = vmatprep.subr.mxu0 0.0
    %719 = vmatpush1.msra.mxu0 0.0
    %720 = vmatprep.subr.mxu0 0.0
    %721 = vmatpush1.msra.mxu0 0.0
    %722 = vmatprep.subr.mxu0 0.0
    %723 = vmatpush1.msra.mxu0 0.0
    %724 = vmatprep.subr.mxu0 0.0
    %725 = vmatpush1.msra.mxu0 0.0
    %726 = vmatprep.subr.mxu0 0.0
    %727 = vmatpush1.msra.mxu0 0.0
    %728 = vmatprep.subr.mxu0 0.0
    %729 = vmatpush1.msra.mxu0 0.0
    %730 = vmatprep.subr.mxu0 0.0
    %731 = vmatpush1.msra.mxu0 0.0
    %732 = vmatprep.mubr.f32.mxu0 0.0
    %733 = vmatmul.mubr.f32.gmra.mrb[0].mxu0 %v595
    %v734 = vpop.f32.mrb[0].mxu0
    %v735 = vadd.f32 0.0, %v734
    %v736 = vpop.f32.mrb[0].mxu0
    %v737 = vadd.f32 0.0, %v736
    %738 = vdwg.mxu0
    %v739 = vadd.f32 %v590, %v664
    %v740 = vadd.f32 %v591, %v666
    %v741 = vadd.f32 %v592, %v735
    %v742 = vadd.f32 %v593, %v737
    %v743 = vtanh.pop %v739
    %v744 = vtanh.pop %v740
    %v745 = vtanh.pop %v741
    %v746 = vtanh.pop %v742
    %v747 = vmul.f32 %v743, 0.5
    %v748 = vmul.f32 %v744, 0.5
    %v749 = vmul.f32 %v746, 0.5
    %v750 = vadd.f32 %v747, 0.5
    %v751 = vadd.f32 %v748, 0.5
    %v752 = vadd.f32 %v749, 0.5
    %v754 = vrot.slane %v587, 4
    %v756 = vmul.f32 %v751, %v754
    %v757 = vmul.f32 %v750, %v745
    %v758 = vadd.f32 %v756, %v757
    %v759 = vtanh.pop %v758
    %v760 = vmul.f32 %v752, %v759
    %v761 = vld [vmem:[#allocation2 + $0x20] sm:$0xf0]
    %v762 = vld [vmem:[#allocation2 + $0x28] sm:$0xf0]
    %v763 = vld [vmem:[#allocation2 + $0x30] sm:$0xf0]
    %v764 = vld [vmem:[#allocation2 + $0x38] sm:$0xf0]
    %765 = vmatprep.subr.mxu0 %v351
    %766 = vmatpush1.msra.mxu0 %v350
    %767 = vmatprep.subr.mxu0 %v355
    %768 = vmatpush1.msra.mxu0 %v354
    %769 = vmatprep.subr.mxu0 %v359
    %770 = vmatpush1.msra.mxu0 %v358
    %771 = vmatprep.subr.mxu0 %v363
    %772 = vmatpush1.msra.mxu0 %v362
    %773 = vmatprep.subr.mxu0 %v367
    %774 = vmatpush1.msra.mxu0 %v366
    %775 = vmatprep.subr.mxu0 %v371
    %776 = vmatpush1.msra.mxu0 %v370
    %777 = vmatprep.subr.mxu0 %v375
    %778 = vmatpush1.msra.mxu0 %v374
    %779 = vmatprep.subr.mxu0 %v379
    %780 = vmatpush1.msra.mxu0 %v378
    %781 = vmatprep.subr.mxu0 %v383
    %782 = vmatpush1.msra.mxu0 %v382
    %783 = vmatprep.subr.mxu0 %v387
    %784 = vmatpush1.msra.mxu0 %v386
    %785 = vmatprep.subr.mxu0 %v391
    %786 = vmatpush1.msra.mxu0 %v390
    %787 = vmatprep.subr.mxu0 %v395
    %788 = vmatpush1.msra.mxu0 %v394
    %789 = vmatprep.subr.mxu0 %v399
    %790 = vmatpush1.msra.mxu0 %v398
    %791 = vmatprep.subr.mxu0 %v403
    %792 = vmatpush1.msra.mxu0 %v402
    %793 = vmatprep.subr.mxu0 %v407
    %794 = vmatpush1.msra.mxu0 %v406
    %795 = vmatprep.subr.mxu0 %v411
    %796 = vmatpush1.msra.mxu0 %v410
    %797 = vmatprep.subr.mxu0 0.0
    %798 = vmatpush1.msra.mxu0 0.0
    %799 = vmatprep.subr.mxu0 0.0
    %800 = vmatpush1.msra.mxu0 0.0
    %801 = vmatprep.subr.mxu0 0.0
    %802 = vmatpush1.msra.mxu0 0.0
    %803 = vmatprep.subr.mxu0 0.0
    %804 = vmatpush1.msra.mxu0 0.0
    %805 = vmatprep.subr.mxu0 0.0
    %806 = vmatpush1.msra.mxu0 0.0
    %807 = vmatprep.subr.mxu0 0.0
    %808 = vmatpush1.msra.mxu0 0.0
    %809 = vmatprep.subr.mxu0 0.0
    %810 = vmatpush1.msra.mxu0 0.0
    %811 = vmatprep.subr.mxu0 0.0
    %812 = vmatpush1.msra.mxu0 0.0
    %813 = vmatprep.subr.mxu0 0.0
    %814 = vmatpush1.msra.mxu0 0.0
    %815 = vmatprep.subr.mxu0 0.0
    %816 = vmatpush1.msra.mxu0 0.0
    %817 = vmatprep.subr.mxu0 0.0
    %818 = vmatpush1.msra.mxu0 0.0
    %819 = vmatprep.subr.mxu0 0.0
    %820 = vmatpush1.msra.mxu0 0.0
    %821 = vmatprep.subr.mxu0 0.0
    %822 = vmatpush1.msra.mxu0 0.0
    %823 = vmatprep.subr.mxu0 0.0
    %824 = vmatpush1.msra.mxu0 0.0
    %825 = vmatprep.subr.mxu0 0.0
    %826 = vmatpush1.msra.mxu0 0.0
    %827 = vmatprep.subr.mxu0 0.0
    %828 = vmatpush1.msra.mxu0 0.0
    %829 = vmatprep.mubr.f32.mxu0 0.0
    %830 = vmatmul.mubr.f32.gmra.mrb[0].mxu0 %v760
    %v831 = vpop.f32.mrb[0].mxu0
    %v832 = vadd.f32 0.0, %v831
    %v833 = vpop.f32.mrb[0].mxu0
    %v834 = vadd.f32 0.0, %v833
    %835 = vdwg.mxu0
    %836 = vmatprep.subr.mxu0 %v353
    %837 = vmatpush1.msra.mxu0 %v352
    %838 = vmatprep.subr.mxu0 %v357
    %839 = vmatpush1.msra.mxu0 %v356
    %840 = vmatprep.subr.mxu0 %v361
    %841 = vmatpush1.msra.mxu0 %v360
    %842 = vmatprep.subr.mxu0 %v365
    %843 = vmatpush1.msra.mxu0 %v364
    %844 = vmatprep.subr.mxu0 %v369
    %845 = vmatpush1.msra.mxu0 %v368
    %846 = vmatprep.subr.mxu0 %v373
    %847 = vmatpush1.msra.mxu0 %v372
    %848 = vmatprep.subr.mxu0 %v377
    %849 = vmatpush1.msra.mxu0 %v376
    %850 = vmatprep.subr.mxu0 %v381
    %851 = vmatpush1.msra.mxu0 %v380
    %852 = vmatprep.subr.mxu0 %v385
    %853 = vmatpush1.msra.mxu0 %v384
    %854 = vmatprep.subr.mxu0 %v389
    %855 = vmatpush1.msra.mxu0 %v388
    %856 = vmatprep.subr.mxu0 %v393
    %857 = vmatpush1.msra.mxu0 %v392
    %858 = vmatprep.subr.mxu0 %v397
    %859 = vmatpush1.msra.mxu0 %v396
    %860 = vmatprep.subr.mxu0 %v401
    %861 = vmatpush1.msra.mxu0 %v400
    %862 = vmatprep.subr.mxu0 %v405
    %863 = vmatpush1.msra.mxu0 %v404
    %864 = vmatprep.subr.mxu0 %v409
    %865 = vmatpush1.msra.mxu0 %v408
    %866 = vmatprep.subr.mxu0 %v413
    %867 = vmatpush1.msra.mxu0 %v412
    %868 = vmatprep.subr.mxu0 0.0
    %869 = vmatpush1.msra.mxu0 0.0
    %870 = vmatprep.subr.mxu0 0.0
    %871 = vmatpush1.msra.mxu0 0.0
    %872 = vmatprep.subr.mxu0 0.0
    %873 = vmatpush1.msra.mxu0 0.0
    %874 = vmatprep.subr.mxu0 0.0
    %875 = vmatpush1.msra.mxu0 0.0
    %876 = vmatprep.subr.mxu0 0.0
    %877 = vmatpush1.msra.mxu0 0.0
    %878 = vmatprep.subr.mxu0 0.0
    %879 = vmatpush1.msra.mxu0 0.0
    %880 = vmatprep.subr.mxu0 0.0
    %881 = vmatpush1.msra.mxu0 0.0
    %882 = vmatprep.subr.mxu0 0.0
    %883 = vmatpush1.msra.mxu0 0.0
    %884 = vmatprep.subr.mxu0 0.0
    %885 = vmatpush1.msra.mxu0 0.0
    %886 = vmatprep.subr.mxu0 0.0
    %887 = vmatpush1.msra.mxu0 0.0
    %888 = vmatprep.subr.mxu0 0.0
    %889 = vmatpush1.msra.mxu0 0.0
    %890 = vmatprep.subr.mxu0 0.0
    %891 = vmatpush1.msra.mxu0 0.0
    %892 = vmatprep.subr.mxu0 0.0
    %893 = vmatpush1.msra.mxu0 0.0
    %894 = vmatprep.subr.mxu0 0.0
    %895 = vmatpush1.msra.mxu0 0.0
    %896 = vmatprep.subr.mxu0 0.0
    %897 = vmatpush1.msra.mxu0 0.0
    %898 = vmatprep.subr.mxu0 0.0
    %899 = vmatpush1.msra.mxu0 0.0
    %900 = vmatprep.mubr.f32.mxu0 0.0
    %901 = vmatmul.mubr.f32.gmra.mrb[0].mxu0 %v760
    %v902 = vpop.f32.mrb[0].mxu0
    %v903 = vadd.f32 0.0, %v902
    %v904 = vpop.f32.mrb[0].mxu0
    %v905 = vadd.f32 0.0, %v904
    %906 = vdwg.mxu0
    %v911 = vrot.slane %v832, 4
    %v912 = vrot.slane %v834, 4
    %v913 = vrot.slane %v903, 4
    %v914 = vrot.slane %v905, 4
    %v919 = vadd.f32 %v761, %v911
    %v920 = vadd.f32 %v762, %v912
    %v921 = vadd.f32 %v763, %v913
    %v922 = vadd.f32 %v764, %v914
    %v923 = vtanh.pop %v919
    %v924 = vtanh.pop %v920
    %v925 = vtanh.pop %v921
    %v926 = vtanh.pop %v922
    %v927 = vmul.f32 %v923, 0.5
    %v928 = vmul.f32 %v924, 0.5
    %v929 = vmul.f32 %v926, 0.5
    %v930 = vadd.f32 %v927, 0.5
    %v931 = vadd.f32 %v928, 0.5
    %v932 = vadd.f32 %v929, 0.5
    %v934 = vrot.slane %v758, 4
    %v936 = vmul.f32 %v931, %v934
    %v937 = vmul.f32 %v930, %v925
    %v938 = vadd.f32 %v936, %v937
    %v939 = vtanh.pop %v938
    %v940 = vmul.f32 %v932, %v939
    %v941 = vld [vmem:[#allocation2 + $0x40] sm:$0xf]
    %v942 = vld [vmem:[#allocation2 + $0x48] sm:$0xf]
    %v943 = vld [vmem:[#allocation2 + $0x50] sm:$0xf]
    %v944 = vld [vmem:[#allocation2 + $0x58] sm:$0xf]
    %v946 = vrot.slane %v940, 4
    %948 = vmatprep.subr.mxu0 %v351
    %949 = vmatpush1.msra.mxu0 %v350
    %950 = vmatprep.subr.mxu0 %v355
    %951 = vmatpush1.msra.mxu0 %v354
    %952 = vmatprep.subr.mxu0 %v359
    %953 = vmatpush1.msra.mxu0 %v358
    %954 = vmatprep.subr.mxu0 %v363
    %955 = vmatpush1.msra.mxu0 %v362
    %956 = vmatprep.subr.mxu0 %v367
    %957 = vmatpush1.msra.mxu0 %v366
    %958 = vmatprep.subr.mxu0 %v371
    %959 = vmatpush1.msra.mxu0 %v370
    %960 = vmatprep.subr.mxu0 %v375
    %961 = vmatpush1.msra.mxu0 %v374
    %962 = vmatprep.subr.mxu0 %v379
    %963 = vmatpush1.msra.mxu0 %v378
    %964 = vmatprep.subr.mxu0 %v383
    %965 = vmatpush1.msra.mxu0 %v382
    %966 = vmatprep.subr.mxu0 %v387
    %967 = vmatpush1.msra.mxu0 %v386
    %968 = vmatprep.subr.mxu0 %v391
    %969 = vmatpush1.msra.mxu0 %v390
    %970 = vmatprep.subr.mxu0 %v395
    %971 = vmatpush1.msra.mxu0 %v394
    %972 = vmatprep.subr.mxu0 %v399
    %973 = vmatpush1.msra.mxu0 %v398
    %974 = vmatprep.subr.mxu0 %v403
    %975 = vmatpush1.msra.mxu0 %v402
    %976 = vmatprep.subr.mxu0 %v407
    %977 = vmatpush1.msra.mxu0 %v406
    %978 = vmatprep.subr.mxu0 %v411
    %979 = vmatpush1.msra.mxu0 %v410
    %980 = vmatprep.subr.mxu0 0.0
    %981 = vmatpush1.msra.mxu0 0.0
    %982 = vmatprep.subr.mxu0 0.0
    %983 = vmatpush1.msra.mxu0 0.0
    %984 = vmatprep.subr.mxu0 0.0
    %985 = vmatpush1.msra.mxu0 0.0
    %986 = vmatprep.subr.mxu0 0.0
    %987 = vmatpush1.msra.mxu0 0.0
    %988 = vmatprep.subr.mxu0 0.0
    %989 = vmatpush1.msra.mxu0 0.0
    %990 = vmatprep.subr.mxu0 0.0
    %991 = vmatpush1.msra.mxu0 0.0
    %992 = vmatprep.subr.mxu0 0.0
    %993 = vmatpush1.msra.mxu0 0.0
    %994 = vmatprep.subr.mxu0 0.0
    %995 = vmatpush1.msra.mxu0 0.0
    %996 = vmatprep.subr.mxu0 0.0
    %997 = vmatpush1.msra.mxu0 0.0
    %998 = vmatprep.subr.mxu0 0.0
    %999 = vmatpush1.msra.mxu0 0.0
    %1000 = vmatprep.subr.mxu0 0.0
    %1001 = vmatpush1.msra.mxu0 0.0
    %1002 = vmatprep.subr.mxu0 0.0
    %1003 = vmatpush1.msra.mxu0 0.0
    %1004 = vmatprep.subr.mxu0 0.0
    %1005 = vmatpush1.msra.mxu0 0.0
    %1006 = vmatprep.subr.mxu0 0.0
    %1007 = vmatpush1.msra.mxu0 0.0
    %1008 = vmatprep.subr.mxu0 0.0
    %1009 = vmatpush1.msra.mxu0 0.0
    %1010 = vmatprep.subr.mxu0 0.0
    %1011 = vmatpush1.msra.mxu0 0.0
    %1012 = vmatprep.mubr.f32.mxu0 0.0
    %1013 = vmatmul.mubr.f32.gmra.mrb[0].mxu0 %v946
    %v1014 = vpop.f32.mrb[0].mxu0
    %v1015 = vadd.f32 0.0, %v1014
    %v1016 = vpop.f32.mrb[0].mxu0
    %v1017 = vadd.f32 0.0, %v1016
    %1018 = vdwg.mxu0
    %1019 = vmatprep.subr.mxu0 %v353
    %1020 = vmatpush1.msra.mxu0 %v352
    %1021 = vmatprep.subr.mxu0 %v357
    %1022 = vmatpush1.msra.mxu0 %v356
    %1023 = vmatprep.subr.mxu0 %v361
    %1024 = vmatpush1.msra.mxu0 %v360
    %1025 = vmatprep.subr.mxu0 %v365
    %1026 = vmatpush1.msra.mxu0 %v364
    %1027 = vmatprep.subr.mxu0 %v369
    %1028 = vmatpush1.msra.mxu0 %v368
    %1029 = vmatprep.subr.mxu0 %v373
    %1030 = vmatpush1.msra.mxu0 %v372
    %1031 = vmatprep.subr.mxu0 %v377
    %1032 = vmatpush1.msra.mxu0 %v376
    %1033 = vmatprep.subr.mxu0 %v381
    %1034 = vmatpush1.msra.mxu0 %v380
    %1035 = vmatprep.subr.mxu0 %v385
    %1036 = vmatpush1.msra.mxu0 %v384
    %1037 = vmatprep.subr.mxu0 %v389
    %1038 = vmatpush1.msra.mxu0 %v388
    %1039 = vmatprep.subr.mxu0 %v393
    %1040 = vmatpush1.msra.mxu0 %v392
    %1041 = vmatprep.subr.mxu0 %v397
    %1042 = vmatpush1.msra.mxu0 %v396
    %1043 = vmatprep.subr.mxu0 %v401
    %1044 = vmatpush1.msra.mxu0 %v400
    %1045 = vmatprep.subr.mxu0 %v405
    %1046 = vmatpush1.msra.mxu0 %v404
    %1047 = vmatprep.subr.mxu0 %v409
    %1048 = vmatpush1.msra.mxu0 %v408
    %1049 = vmatprep.subr.mxu0 %v413
    %1050 = vmatpush1.msra.mxu0 %v412
    %1051 = vmatprep.subr.mxu0 0.0
    %1052 = vmatpush1.msra.mxu0 0.0
    %1053 = vmatprep.subr.mxu0 0.0
    %1054 = vmatpush1.msra.mxu0 0.0
    %1055 = vmatprep.subr.mxu0 0.0
    %1056 = vmatpush1.msra.mxu0 0.0
    %1057 = vmatprep.subr.mxu0 0.0
    %1058 = vmatpush1.msra.mxu0 0.0
    %1059 = vmatprep.subr.mxu0 0.0
    %1060 = vmatpush1.msra.mxu0 0.0
    %1061 = vmatprep.subr.mxu0 0.0
    %1062 = vmatpush1.msra.mxu0 0.0
    %1063 = vmatprep.subr.mxu0 0.0
    %1064 = vmatpush1.msra.mxu0 0.0
    %1065 = vmatprep.subr.mxu0 0.0
    %1066 = vmatpush1.msra.mxu0 0.0
    %1067 = vmatprep.subr.mxu0 0.0
    %1068 = vmatpush1.msra.mxu0 0.0
    %1069 = vmatprep.subr.mxu0 0.0
    %1070 = vmatpush1.msra.mxu0 0.0
    %1071 = vmatprep.subr.mxu0 0.0
    %1072 = vmatpush1.msra.mxu0 0.0
    %1073 = vmatprep.subr.mxu0 0.0
    %1074 = vmatpush1.msra.mxu0 0.0
    %1075 = vmatprep.subr.mxu0 0.0
    %1076 = vmatpush1.msra.mxu0 0.0
    %1077 = vmatprep.subr.mxu0 0.0
    %1078 = vmatpush1.msra.mxu0 0.0
    %1079 = vmatprep.subr.mxu0 0.0
    %1080 = vmatpush1.msra.mxu0 0.0
    %1081 = vmatprep.subr.mxu0 0.0
    %1082 = vmatpush1.msra.mxu0 0.0
    %1083 = vmatprep.mubr.f32.mxu0 0.0
    %1084 = vmatmul.mubr.f32.gmra.mrb[0].mxu0 %v946
    %v1085 = vpop.f32.mrb[0].mxu0
    %v1086 = vadd.f32 0.0, %v1085
    %v1087 = vpop.f32.mrb[0].mxu0
    %v1088 = vadd.f32 0.0, %v1087
    %1089 = vdwg.mxu0
    %v1090 = vadd.f32 %v941, %v1015
    %v1091 = vadd.f32 %v942, %v1017
    %v1092 = vadd.f32 %v943, %v1086
    %v1093 = vadd.f32 %v944, %v1088
    %v1094 = vtanh.pop %v1090
    %v1095 = vtanh.pop %v1091
    %v1096 = vtanh.pop %v1092
    %v1097 = vtanh.pop %v1093
    %v1098 = vmul.f32 %v1094, 0.5
    %v1099 = vmul.f32 %v1095, 0.5
    %v1100 = vmul.f32 %v1097, 0.5
    %v1101 = vadd.f32 %v1098, 0.5
    %v1102 = vadd.f32 %v1099, 0.5
    %v1103 = vadd.f32 %v1100, 0.5
    %v1105 = vrot.slane %v938, 4
    %v1107 = vmul.f32 %v1102, %v1105
    %v1108 = vmul.f32 %v1101, %v1096
    %v1109 = vadd.f32 %v1107, %v1108
    %v1110 = vtanh.pop %v1109
    %v1111 = vmul.f32 %v1103, %v1110
    %v1112 = vld [vmem:[#allocation2 + $0x40] sm:$0xf0]
    %v1113 = vld [vmem:[#allocation2 + $0x48] sm:$0xf0]
    %v1114 = vld [vmem:[#allocation2 + $0x50] sm:$0xf0]
    %v1115 = vld [vmem:[#allocation2 + $0x58] sm:$0xf0]
    %1116 = vmatprep.subr.mxu0 %v351
    %1117 = vmatpush1.msra.mxu0 %v350
    %1118 = vmatprep.subr.mxu0 %v355
    %1119 = vmatpush1.msra.mxu0 %v354
    %1120 = vmatprep.subr.mxu0 %v359
    %1121 = vmatpush1.msra.mxu0 %v358
    %1122 = vmatprep.subr.mxu0 %v363
    %1123 = vmatpush1.msra.mxu0 %v362
    %1124 = vmatprep.subr.mxu0 %v367
    %1125 = vmatpush1.msra.mxu0 %v366
    %1126 = vmatprep.subr.mxu0 %v371
    %1127 = vmatpush1.msra.mxu0 %v370
    %1128 = vmatprep.subr.mxu0 %v375
    %1129 = vmatpush1.msra.mxu0 %v374
    %1130 = vmatprep.subr.mxu0 %v379
    %1131 = vmatpush1.msra.mxu0 %v378
    %1132 = vmatprep.subr.mxu0 %v383
    %1133 = vmatpush1.msra.mxu0 %v382
    %1134 = vmatprep.subr.mxu0 %v387
    %1135 = vmatpush1.msra.mxu0 %v386
    %1136 = vmatprep.subr.mxu0 %v391
    %1137 = vmatpush1.msra.mxu0 %v390
    %1138 = vmatprep.subr.mxu0 %v395
    %1139 = vmatpush1.msra.mxu0 %v394
    %1140 = vmatprep.subr.mxu0 %v399
    %1141 = vmatpush1.msra.mxu0 %v398
    %1142 = vmatprep.subr.mxu0 %v403
    %1143 = vmatpush1.msra.mxu0 %v402
    %1144 = vmatprep.subr.mxu0 %v407
    %1145 = vmatpush1.msra.mxu0 %v406
    %1146 = vmatprep.subr.mxu0 %v411
    %1147 = vmatpush1.msra.mxu0 %v410
    %1148 = vmatprep.subr.mxu0 0.0
    %1149 = vmatpush1.msra.mxu0 0.0
    %1150 = vmatprep.subr.mxu0 0.0
    %1151 = vmatpush1.msra.mxu0 0.0
    %1152 = vmatprep.subr.mxu0 0.0
    %1153 = vmatpush1.msra.mxu0 0.0
    %1154 = vmatprep.subr.mxu0 0.0
    %1155 = vmatpush1.msra.mxu0 0.0
    %1156 = vmatprep.subr.mxu0 0.0
    %1157 = vmatpush1.msra.mxu0 0.0
    %1158 = vmatprep.subr.mxu0 0.0
    %1159 = vmatpush1.msra.mxu0 0.0
    %1160 = vmatprep.subr.mxu0 0.0
    %1161 = vmatpush1.msra.mxu0 0.0
    %1162 = vmatprep.subr.mxu0 0.0
    %1163 = vmatpush1.msra.mxu0 0.0
    %1164 = vmatprep.subr.mxu0 0.0
    %1165 = vmatpush1.msra.mxu0 0.0
    %1166 = vmatprep.subr.mxu0 0.0
    %1167 = vmatpush1.msra.mxu0 0.0
    %1168 = vmatprep.subr.mxu0 0.0
    %1169 = vmatpush1.msra.mxu0 0.0
    %1170 = vmatprep.subr.mxu0 0.0
    %1171 = vmatpush1.msra.mxu0 0.0
    %1172 = vmatprep.subr.mxu0 0.0
    %1173 = vmatpush1.msra.mxu0 0.0
    %1174 = vmatprep.subr.mxu0 0.0
    %1175 = vmatpush1.msra.mxu0 0.0
    %1176 = vmatprep.subr.mxu0 0.0
    %1177 = vmatpush1.msra.mxu0 0.0
    %1178 = vmatprep.subr.mxu0 0.0
    %1179 = vmatpush1.msra.mxu0 0.0
    %1180 = vmatprep.mubr.f32.mxu0 0.0
    %1181 = vmatmul.mubr.f32.gmra.mrb[0].mxu0 %v1111
    %v1182 = vpop.f32.mrb[0].mxu0
    %v1183 = vadd.f32 0.0, %v1182
    %v1184 = vpop.f32.mrb[0].mxu0
    %v1185 = vadd.f32 0.0, %v1184
    %1186 = vdwg.mxu0
    %1187 = vmatprep.subr.mxu0 %v353
    %1188 = vmatpush1.msra.mxu0 %v352
    %1189 = vmatprep.subr.mxu0 %v357
    %1190 = vmatpush1.msra.mxu0 %v356
    %1191 = vmatprep.subr.mxu0 %v361
    %1192 = vmatpush1.msra.mxu0 %v360
    %1193 = vmatprep.subr.mxu0 %v365
    %1194 = vmatpush1.msra.mxu0 %v364
    %1195 = vmatprep.subr.mxu0 %v369
    %1196 = vmatpush1.msra.mxu0 %v368
    %1197 = vmatprep.subr.mxu0 %v373
    %1198 = vmatpush1.msra.mxu0 %v372
    %1199 = vmatprep.subr.mxu0 %v377
    %1200 = vmatpush1.msra.mxu0 %v376
    %1201 = vmatprep.subr.mxu0 %v381
    %1202 = vmatpush1.msra.mxu0 %v380
    %1203 = vmatprep.subr.mxu0 %v385
    %1204 = vmatpush1.msra.mxu0 %v384
    %1205 = vmatprep.subr.mxu0 %v389
    %1206 = vmatpush1.msra.mxu0 %v388
    %1207 = vmatprep.subr.mxu0 %v393
    %1208 = vmatpush1.msra.mxu0 %v392
    %1209 = vmatprep.subr.mxu0 %v397
    %1210 = vmatpush1.msra.mxu0 %v396
    %1211 = vmatprep.subr.mxu0 %v401
    %1212 = vmatpush1.msra.mxu0 %v400
    %1213 = vmatprep.subr.mxu0 %v405
    %1214 = vmatpush1.msra.mxu0 %v404
    %1215 = vmatprep.subr.mxu0 %v409
    %1216 = vmatpush1.msra.mxu0 %v408
    %1217 = vmatprep.subr.mxu0 %v413
    %1218 = vmatpush1.msra.mxu0 %v412
    %1219 = vmatprep.subr.mxu0 0.0
    %1220 = vmatpush1.msra.mxu0 0.0
    %1221 = vmatprep.subr.mxu0 0.0
    %1222 = vmatpush1.msra.mxu0 0.0
    %1223 = vmatprep.subr.mxu0 0.0
    %1224 = vmatpush1.msra.mxu0 0.0
    %1225 = vmatprep.subr.mxu0 0.0
    %1226 = vmatpush1.msra.mxu0 0.0
    %1227 = vmatprep.subr.mxu0 0.0
    %1228 = vmatpush1.msra.mxu0 0.0
    %1229 = vmatprep.subr.mxu0 0.0
    %1230 = vmatpush1.msra.mxu0 0.0
    %1231 = vmatprep.subr.mxu0 0.0
    %1232 = vmatpush1.msra.mxu0 0.0
    %1233 = vmatprep.subr.mxu0 0.0
    %1234 = vmatpush1.msra.mxu0 0.0
    %1235 = vmatprep.subr.mxu0 0.0
    %1236 = vmatpush1.msra.mxu0 0.0
    %1237 = vmatprep.subr.mxu0 0.0
    %1238 = vmatpush1.msra.mxu0 0.0
    %1239 = vmatprep.subr.mxu0 0.0
    %1240 = vmatpush1.msra.mxu0 0.0
    %1241 = vmatprep.subr.mxu0 0.0
    %1242 = vmatpush1.msra.mxu0 0.0
    %1243 = vmatprep.subr.mxu0 0.0
    %1244 = vmatpush1.msra.mxu0 0.0
    %1245 = vmatprep.subr.mxu0 0.0
    %1246 = vmatpush1.msra.mxu0 0.0
    %1247 = vmatprep.subr.mxu0 0.0
    %1248 = vmatpush1.msra.mxu0 0.0
    %1249 = vmatprep.subr.mxu0 0.0
    %1250 = vmatpush1.msra.mxu0 0.0
    %1251 = vmatprep.mubr.f32.mxu0 0.0
    %1252 = vmatmul.mubr.f32.gmra.mrb[0].mxu0 %v1111
    %v1253 = vpop.f32.mrb[0].mxu0
    %v1254 = vadd.f32 0.0, %v1253
    %v1255 = vpop.f32.mrb[0].mxu0
    %v1256 = vadd.f32 0.0, %v1255
    %1257 = vdwg.mxu0
    %v1262 = vrot.slane %v1183, 4
    %v1263 = vrot.slane %v1185, 4
    %v1264 = vrot.slane %v1254, 4
    %v1265 = vrot.slane %v1256, 4
    %v1270 = vadd.f32 %v1112, %v1262
    %v1271 = vadd.f32 %v1113, %v1263
    %v1272 = vadd.f32 %v1114, %v1264
    %v1273 = vadd.f32 %v1115, %v1265
    %v1274 = vtanh.pop %v1270
    %v1275 = vtanh.pop %v1271
    %v1276 = vtanh.pop %v1272
    %v1277 = vtanh.pop %v1273
    %v1278 = vmul.f32 %v1274, 0.5
    %v1279 = vmul.f32 %v1275, 0.5
    %v1280 = vmul.f32 %v1277, 0.5
    %v1281 = vadd.f32 %v1278, 0.5
    %v1282 = vadd.f32 %v1279, 0.5
    %v1283 = vadd.f32 %v1280, 0.5
    %v1285 = vrot.slane %v1109, 4
    %v1287 = vmul.f32 %v1282, %v1285
    %v1288 = vmul.f32 %v1281, %v1276
    %v1289 = vadd.f32 %v1287, %v1288
    %v1290 = vtanh.pop %v1289
    %v1291 = vmul.f32 %v1283, %v1290
    %v1292 = vld [vmem:[#allocation2 + $0x60] sm:$0xf]
    %v1293 = vld [vmem:[#allocation2 + $0x68] sm:$0xf]
    %v1294 = vld [vmem:[#allocation2 + $0x70] sm:$0xf]
    %v1295 = vld [vmem:[#allocation2 + $0x78] sm:$0xf]
    %v1297 = vrot.slane %v1291, 4
    %1299 = vmatprep.subr.mxu0 %v351
    %1300 = vmatpush1.msra.mxu0 %v350
    %1301 = vmatprep.subr.mxu0 %v355
    %1302 = vmatpush1.msra.mxu0 %v354
    %1303 = vmatprep.subr.mxu0 %v359
    %1304 = vmatpush1.msra.mxu0 %v358
    %1305 = vmatprep.subr.mxu0 %v363
    %1306 = vmatpush1.msra.mxu0 %v362
    %1307 = vmatprep.subr.mxu0 %v367
    %1308 = vmatpush1.msra.mxu0 %v366
    %1309 = vmatprep.subr.mxu0 %v371
    %1310 = vmatpush1.msra.mxu0 %v370
    %1311 = vmatprep.subr.mxu0 %v375
    %1312 = vmatpush1.msra.mxu0 %v374
    %1313 = vmatprep.subr.mxu0 %v379
    %1314 = vmatpush1.msra.mxu0 %v378
    %1315 = vmatprep.subr.mxu0 %v383
    %1316 = vmatpush1.msra.mxu0 %v382
    %1317 = vmatprep.subr.mxu0 %v387
    %1318 = vmatpush1.msra.mxu0 %v386
    %1319 = vmatprep.subr.mxu0 %v391
    %1320 = vmatpush1.msra.mxu0 %v390
    %1321 = vmatprep.subr.mxu0 %v395
    %1322 = vmatpush1.msra.mxu0 %v394
    %1323 = vmatprep.subr.mxu0 %v399
    %1324 = vmatpush1.msra.mxu0 %v398
    %1325 = vmatprep.subr.mxu0 %v403
    %1326 = vmatpush1.msra.mxu0 %v402
    %1327 = vmatprep.subr.mxu0 %v407
    %1328 = vmatpush1.msra.mxu0 %v406
    %1329 = vmatprep.subr.mxu0 %v411
    %1330 = vmatpush1.msra.mxu0 %v410
    %1331 = vmatprep.subr.mxu0 0.0
    %1332 = vmatpush1.msra.mxu0 0.0
    %1333 = vmatprep.subr.mxu0 0.0
    %1334 = vmatpush1.msra.mxu0 0.0
    %1335 = vmatprep.subr.mxu0 0.0
    %1336 = vmatpush1.msra.mxu0 0.0
    %1337 = vmatprep.subr.mxu0 0.0
    %1338 = vmatpush1.msra.mxu0 0.0
    %1339 = vmatprep.subr.mxu0 0.0
    %1340 = vmatpush1.msra.mxu0 0.0
    %1341 = vmatprep.subr.mxu0 0.0
    %1342 = vmatpush1.msra.mxu0 0.0
    %1343 = vmatprep.subr.mxu0 0.0
    %1344 = vmatpush1.msra.mxu0 0.0
    %1345 = vmatprep.subr.mxu0 0.0
    %1346 = vmatpush1.msra.mxu0 0.0
    %1347 = vmatprep.subr.mxu0 0.0
    %1348 = vmatpush1.msra.mxu0 0.0
    %1349 = vmatprep.subr.mxu0 0.0
    %1350 = vmatpush1.msra.mxu0 0.0
    %1351 = vmatprep.subr.mxu0 0.0
    %1352 = vmatpush1.msra.mxu0 0.0
    %1353 = vmatprep.subr.mxu0 0.0
    %1354 = vmatpush1.msra.mxu0 0.0
    %1355 = vmatprep.subr.mxu0 0.0
    %1356 = vmatpush1.msra.mxu0 0.0
    %1357 = vmatprep.subr.mxu0 0.0
    %1358 = vmatpush1.msra.mxu0 0.0
    %1359 = vmatprep.subr.mxu0 0.0
    %1360 = vmatpush1.msra.mxu0 0.0
    %1361 = vmatprep.subr.mxu0 0.0
    %1362 = vmatpush1.msra.mxu0 0.0
    %1363 = vmatprep.mubr.f32.mxu0 0.0
    %1364 = vmatmul.mubr.f32.gmra.mrb[0].mxu0 %v1297
    %v1365 = vpop.f32.mrb[0].mxu0
    %v1366 = vadd.f32 0.0, %v1365
    %v1367 = vpop.f32.mrb[0].mxu0
    %v1368 = vadd.f32 0.0, %v1367
    %1369 = vdwg.mxu0
    %1370 = vmatprep.subr.mxu0 %v353
    %1371 = vmatpush1.msra.mxu0 %v352
    %1372 = vmatprep.subr.mxu0 %v357
    %1373 = vmatpush1.msra.mxu0 %v356
    %1374 = vmatprep.subr.mxu0 %v361
    %1375 = vmatpush1.msra.mxu0 %v360
    %1376 = vmatprep.subr.mxu0 %v365
    %1377 = vmatpush1.msra.mxu0 %v364
    %1378 = vmatprep.subr.mxu0 %v369
    %1379 = vmatpush1.msra.mxu0 %v368
    %1380 = vmatprep.subr.mxu0 %v373
    %1381 = vmatpush1.msra.mxu0 %v372
    %1382 = vmatprep.subr.mxu0 %v377
    %1383 = vmatpush1.msra.mxu0 %v376
    %1384 = vmatprep.subr.mxu0 %v381
    %1385 = vmatpush1.msra.mxu0 %v380
    %1386 = vmatprep.subr.mxu0 %v385
    %1387 = vmatpush1.msra.mxu0 %v384
    %1388 = vmatprep.subr.mxu0 %v389
    %1389 = vmatpush1.msra.mxu0 %v388
    %1390 = vmatprep.subr.mxu0 %v393
    %1391 = vmatpush1.msra.mxu0 %v392
    %1392 = vmatprep.subr.mxu0 %v397
    %1393 = vmatpush1.msra.mxu0 %v396
    %1394 = vmatprep.subr.mxu0 %v401
    %1395 = vmatpush1.msra.mxu0 %v400
    %1396 = vmatprep.subr.mxu0 %v405
    %1397 = vmatpush1.msra.mxu0 %v404
    %1398 = vmatprep.subr.mxu0 %v409
    %1399 = vmatpush1.msra.mxu0 %v408
    %1400 = vmatprep.subr.mxu0 %v413
    %1401 = vmatpush1.msra.mxu0 %v412
    %1402 = vmatprep.subr.mxu0 0.0
    %1403 = vmatpush1.msra.mxu0 0.0
    %1404 = vmatprep.subr.mxu0 0.0
    %1405 = vmatpush1.msra.mxu0 0.0
    %1406 = vmatprep.subr.mxu0 0.0
    %1407 = vmatpush1.msra.mxu0 0.0
    %1408 = vmatprep.subr.mxu0 0.0
    %1409 = vmatpush1.msra.mxu0 0.0
    %1410 = vmatprep.subr.mxu0 0.0
    %1411 = vmatpush1.msra.mxu0 0.0
    %1412 = vmatprep.subr.mxu0 0.0
    %1413 = vmatpush1.msra.mxu0 0.0
    %1414 = vmatprep.subr.mxu0 0.0
    %1415 = vmatpush1.msra.mxu0 0.0
    %1416 = vmatprep.subr.mxu0 0.0
    %1417 = vmatpush1.msra.mxu0 0.0
    %1418 = vmatprep.subr.mxu0 0.0
    %1419 = vmatpush1.msra.mxu0 0.0
    %1420 = vmatprep.subr.mxu0 0.0
    %1421 = vmatpush1.msra.mxu0 0.0
    %1422 = vmatprep.subr.mxu0 0.0
    %1423 = vmatpush1.msra.mxu0 0.0
    %1424 = vmatprep.subr.mxu0 0.0
    %1425 = vmatpush1.msra.mxu0 0.0
    %1426 = vmatprep.subr.mxu0 0.0
    %1427 = vmatpush1.msra.mxu0 0.0
    %1428 = vmatprep.subr.mxu0 0.0
    %1429 = vmatpush1.msra.mxu0 0.0
    %1430 = vmatprep.subr.mxu0 0.0
    %1431 = vmatpush1.msra.mxu0 0.0
    %1432 = vmatprep.subr.mxu0 0.0
    %1433 = vmatpush1.msra.mxu0 0.0
    %1434 = vmatprep.mubr.f32.mxu0 0.0
    %1435 = vmatmul.mubr.f32.gmra.mrb[0].mxu0 %v1297
    %v1436 = vpop.f32.mrb[0].mxu0
    %v1437 = vadd.f32 0.0, %v1436
    %v1438 = vpop.f32.mrb[0].mxu0
    %v1439 = vadd.f32 0.0, %v1438
    %1440 = vdwg.mxu0
    %v1441 = vadd.f32 %v1292, %v1366
    %v1442 = vadd.f32 %v1293, %v1368
    %v1443 = vadd.f32 %v1294, %v1437
    %v1444 = vadd.f32 %v1295, %v1439
    %v1445 = vtanh.pop %v1441
    %v1446 = vtanh.pop %v1442
    %v1447 = vtanh.pop %v1443
    %v1448 = vtanh.pop %v1444
    %v1449 = vmul.f32 %v1445, 0.5
    %v1450 = vmul.f32 %v1446, 0.5
    %v1451 = vmul.f32 %v1448, 0.5
    %v1452 = vadd.f32 %v1449, 0.5
    %v1453 = vadd.f32 %v1450, 0.5
    %v1454 = vadd.f32 %v1451, 0.5
    %v1456 = vrot.slane %v1289, 4
    %v1458 = vmul.f32 %v1453, %v1456
    %v1459 = vmul.f32 %v1452, %v1447
    %v1460 = vadd.f32 %v1458, %v1459
    %v1461 = vtanh.pop %v1460
    %v1462 = vmul.f32 %v1454, %v1461
    %v1463 = vld [vmem:[#allocation2 + $0x60] sm:$0xf0]
    %v1464 = vld [vmem:[#allocation2 + $0x68] sm:$0xf0]
    %v1465 = vld [vmem:[#allocation2 + $0x70] sm:$0xf0]
    %v1466 = vld [vmem:[#allocation2 + $0x78] sm:$0xf0]
    %1467 = vmatprep.subr.mxu0 %v351
    %1468 = vmatpush1.msra.mxu0 %v350
    %1469 = vmatprep.subr.mxu0 %v355
    %1470 = vmatpush1.msra.mxu0 %v354
    %1471 = vmatprep.subr.mxu0 %v359
    %1472 = vmatpush1.msra.mxu0 %v358
    %1473 = vmatprep.subr.mxu0 %v363
    %1474 = vmatpush1.msra.mxu0 %v362
    %1475 = vmatprep.subr.mxu0 %v367
    %1476 = vmatpush1.msra.mxu0 %v366
    %1477 = vmatprep.subr.mxu0 %v371
    %1478 = vmatpush1.msra.mxu0 %v370
    %1479 = vmatprep.subr.mxu0 %v375
    %1480 = vmatpush1.msra.mxu0 %v374
    %1481 = vmatprep.subr.mxu0 %v379
    %1482 = vmatpush1.msra.mxu0 %v378
    %1483 = vmatprep.subr.mxu0 %v383
    %1484 = vmatpush1.msra.mxu0 %v382
    %1485 = vmatprep.subr.mxu0 %v387
    %1486 = vmatpush1.msra.mxu0 %v386
    %1487 = vmatprep.subr.mxu0 %v391
    %1488 = vmatpush1.msra.mxu0 %v390
    %1489 = vmatprep.subr.mxu0 %v395
    %1490 = vmatpush1.msra.mxu0 %v394
    %1491 = vmatprep.subr.mxu0 %v399
    %1492 = vmatpush1.msra.mxu0 %v398
    %1493 = vmatprep.subr.mxu0 %v403
    %1494 = vmatpush1.msra.mxu0 %v402
    %1495 = vmatprep.subr.mxu0 %v407
    %1496 = vmatpush1.msra.mxu0 %v406
    %1497 = vmatprep.subr.mxu0 %v411
    %1498 = vmatpush1.msra.mxu0 %v410
    %1499 = vmatprep.subr.mxu0 0.0
    %1500 = vmatpush1.msra.mxu0 0.0
    %1501 = vmatprep.subr.mxu0 0.0
    %1502 = vmatpush1.msra.mxu0 0.0
    %1503 = vmatprep.subr.mxu0 0.0
    %1504 = vmatpush1.msra.mxu0 0.0
    %1505 = vmatprep.subr.mxu0 0.0
    %1506 = vmatpush1.msra.mxu0 0.0
    %1507 = vmatprep.subr.mxu0 0.0
    %1508 = vmatpush1.msra.mxu0 0.0
    %1509 = vmatprep.subr.mxu0 0.0
    %1510 = vmatpush1.msra.mxu0 0.0
    %1511 = vmatprep.subr.mxu0 0.0
    %1512 = vmatpush1.msra.mxu0 0.0
    %1513 = vmatprep.subr.mxu0 0.0
    %1514 = vmatpush1.msra.mxu0 0.0
    %1515 = vmatprep.subr.mxu0 0.0
    %1516 = vmatpush1.msra.mxu0 0.0
    %1517 = vmatprep.subr.mxu0 0.0
    %1518 = vmatpush1.msra.mxu0 0.0
    %1519 = vmatprep.subr.mxu0 0.0
    %1520 = vmatpush1.msra.mxu0 0.0
    %1521 = vmatprep.subr.mxu0 0.0
    %1522 = vmatpush1.msra.mxu0 0.0
    %1523 = vmatprep.subr.mxu0 0.0
    %1524 = vmatpush1.msra.mxu0 0.0
    %1525 = vmatprep.subr.mxu0 0.0
    %1526 = vmatpush1.msra.mxu0 0.0
    %1527 = vmatprep.subr.mxu0 0.0
    %1528 = vmatpush1.msra.mxu0 0.0
    %1529 = vmatprep.subr.mxu0 0.0
    %1530 = vmatpush1.msra.mxu0 0.0
    %1531 = vmatprep.mubr.f32.mxu0 0.0
    %1532 = vmatmul.mubr.f32.gmra.mrb[0].mxu0 %v1462
    %v1533 = vpop.f32.mrb[0].mxu0
    %v1534 = vadd.f32 0.0, %v1533
    %v1535 = vpop.f32.mrb[0].mxu0
    %v1536 = vadd.f32 0.0, %v1535
    %1537 = vdwg.mxu0
    %1538 = vmatprep.subr.mxu0 %v353
    %1539 = vmatpush1.msra.mxu0 %v352
    %1540 = vmatprep.subr.mxu0 %v357
    %1541 = vmatpush1.msra.mxu0 %v356
    %1542 = vmatprep.subr.mxu0 %v361
    %1543 = vmatpush1.msra.mxu0 %v360
    %1544 = vmatprep.subr.mxu0 %v365
    %1545 = vmatpush1.msra.mxu0 %v364
    %1546 = vmatprep.subr.mxu0 %v369
    %1547 = vmatpush1.msra.mxu0 %v368
    %1548 = vmatprep.subr.mxu0 %v373
    %1549 = vmatpush1.msra.mxu0 %v372
    %1550 = vmatprep.subr.mxu0 %v377
    %1551 = vmatpush1.msra.mxu0 %v376
    %1552 = vmatprep.subr.mxu0 %v381
    %1553 = vmatpush1.msra.mxu0 %v380
    %1554 = vmatprep.subr.mxu0 %v385
    %1555 = vmatpush1.msra.mxu0 %v384
    %1556 = vmatprep.subr.mxu0 %v389
    %1557 = vmatpush1.msra.mxu0 %v388
    %1558 = vmatprep.subr.mxu0 %v393
    %1559 = vmatpush1.msra.mxu0 %v392
    %1560 = vmatprep.subr.mxu0 %v397
    %1561 = vmatpush1.msra.mxu0 %v396
    %1562 = vmatprep.subr.mxu0 %v401
    %1563 = vmatpush1.msra.mxu0 %v400
    %1564 = vmatprep.subr.mxu0 %v405
    %1565 = vmatpush1.msra.mxu0 %v404
    %1566 = vmatprep.subr.mxu0 %v409
    %1567 = vmatpush1.msra.mxu0 %v408
    %1568 = vmatprep.subr.mxu0 %v413
    %1569 = vmatpush1.msra.mxu0 %v412
    %1570 = vmatprep.subr.mxu0 0.0
    %1571 = vmatpush1.msra.mxu0 0.0
    %1572 = vmatprep.subr.mxu0 0.0
    %1573 = vmatpush1.msra.mxu0 0.0
    %1574 = vmatprep.subr.mxu0 0.0
    %1575 = vmatpush1.msra.mxu0 0.0
    %1576 = vmatprep.subr.mxu0 0.0
    %1577 = vmatpush1.msra.mxu0 0.0
    %1578 = vmatprep.subr.mxu0 0.0
    %1579 = vmatpush1.msra.mxu0 0.0
    %1580 = vmatprep.subr.mxu0 0.0
    %1581 = vmatpush1.msra.mxu0 0.0
    %1582 = vmatprep.subr.mxu0 0.0
    %1583 = vmatpush1.msra.mxu0 0.0
    %1584 = vmatprep.subr.mxu0 0.0
    %1585 = vmatpush1.msra.mxu0 0.0
    %1586 = vmatprep.subr.mxu0 0.0
    %1587 = vmatpush1.msra.mxu0 0.0
    %1588 = vmatprep.subr.mxu0 0.0
    %1589 = vmatpush1.msra.mxu0 0.0
    %1590 = vmatprep.subr.mxu0 0.0
    %1591 = vmatpush1.msra.mxu0 0.0
    %1592 = vmatprep.subr.mxu0 0.0
    %1593 = vmatpush1.msra.mxu0 0.0
    %1594 = vmatprep.subr.mxu0 0.0
    %1595 = vmatpush1.msra.mxu0 0.0
    %1596 = vmatprep.subr.mxu0 0.0
    %1597 = vmatpush1.msra.mxu0 0.0
    %1598 = vmatprep.subr.mxu0 0.0
    %1599 = vmatpush1.msra.mxu0 0.0
    %1600 = vmatprep.subr.mxu0 0.0
    %1601 = vmatpush1.msra.mxu0 0.0
    %1602 = vmatprep.mubr.f32.mxu0 0.0
    %1603 = vmatmul.mubr.f32.gmra.mrb[0].mxu0 %v1462
    %v1604 = vpop.f32.mrb[0].mxu0
    %v1605 = vadd.f32 0.0, %v1604
    %v1606 = vpop.f32.mrb[0].mxu0
    %v1607 = vadd.f32 0.0, %v1606
    %1608 = vdwg.mxu0
    %v1613 = vrot.slane %v1534, 4
    %v1614 = vrot.slane %v1536, 4
    %v1615 = vrot.slane %v1605, 4
    %v1616 = vrot.slane %v1607, 4
    %v1621 = vadd.f32 %v1463, %v1613
    %v1622 = vadd.f32 %v1464, %v1614
    %v1623 = vadd.f32 %v1465, %v1615
    %v1624 = vadd.f32 %v1466, %v1616
    %v1625 = vtanh.pop %v1621
    %v1626 = vtanh.pop %v1622
    %v1627 = vtanh.pop %v1623
    %v1628 = vtanh.pop %v1624
    %v1629 = vmul.f32 %v1625, 0.5
    %v1630 = vmul.f32 %v1626, 0.5
    %v1631 = vmul.f32 %v1628, 0.5
    %v1632 = vadd.f32 %v1629, 0.5
    %v1633 = vadd.f32 %v1630, 0.5
    %v1634 = vadd.f32 %v1631, 0.5
    %v1636 = vrot.slane %v1460, 4
    %v1638 = vmul.f32 %v1633, %v1636
    %v1639 = vmul.f32 %v1632, %v1627
    %v1640 = vadd.f32 %v1638, %v1639
    %v1641 = vtanh.pop %v1640
    %v1642 = vmul.f32 %v1634, %v1641
    %v1643 = vld [vmem:[#allocation2 + $0x80] sm:$0xf]
    %v1644 = vld [vmem:[#allocation2 + $0x88] sm:$0xf]
    %v1645 = vld [vmem:[#allocation2 + $0x90] sm:$0xf]
    %v1646 = vld [vmem:[#allocation2 + $0x98] sm:$0xf]
    %v1648 = vrot.slane %v1642, 4
    %1650 = vmatprep.subr.mxu0 %v351
    %1651 = vmatpush1.msra.mxu0 %v350
    %1652 = vmatprep.subr.mxu0 %v355
    %1653 = vmatpush1.msra.mxu0 %v354
    %1654 = vmatprep.subr.mxu0 %v359
    %1655 = vmatpush1.msra.mxu0 %v358
    %1656 = vmatprep.subr.mxu0 %v363
    %1657 = vmatpush1.msra.mxu0 %v362
    %1658 = vmatprep.subr.mxu0 %v367
    %1659 = vmatpush1.msra.mxu0 %v366
    %1660 = vmatprep.subr.mxu0 %v371
    %1661 = vmatpush1.msra.mxu0 %v370
    %1662 = vmatprep.subr.mxu0 %v375
    %1663 = vmatpush1.msra.mxu0 %v374
    %1664 = vmatprep.subr.mxu0 %v379
    %1665 = vmatpush1.msra.mxu0 %v378
    %1666 = vmatprep.subr.mxu0 %v383
    %1667 = vmatpush1.msra.mxu0 %v382
    %1668 = vmatprep.subr.mxu0 %v387
    %1669 = vmatpush1.msra.mxu0 %v386
    %1670 = vmatprep.subr.mxu0 %v391
    %1671 = vmatpush1.msra.mxu0 %v390
    %1672 = vmatprep.subr.mxu0 %v395
    %1673 = vmatpush1.msra.mxu0 %v394
    %1674 = vmatprep.subr.mxu0 %v399
    %1675 = vmatpush1.msra.mxu0 %v398
    %1676 = vmatprep.subr.mxu0 %v403
    %1677 = vmatpush1.msra.mxu0 %v402
    %1678 = vmatprep.subr.mxu0 %v407
    %1679 = vmatpush1.msra.mxu0 %v406
    %1680 = vmatprep.subr.mxu0 %v411
    %1681 = vmatpush1.msra.mxu0 %v410
    %1682 = vmatprep.subr.mxu0 0.0
    %1683 = vmatpush1.msra.mxu0 0.0
    %1684 = vmatprep.subr.mxu0 0.0
    %1685 = vmatpush1.msra.mxu0 0.0
    %1686 = vmatprep.subr.mxu0 0.0
    %1687 = vmatpush1.msra.mxu0 0.0
    %1688 = vmatprep.subr.mxu0 0.0
    %1689 = vmatpush1.msra.mxu0 0.0
    %1690 = vmatprep.subr.mxu0 0.0
    %1691 = vmatpush1.msra.mxu0 0.0
    %1692 = vmatprep.subr.mxu0 0.0
    %1693 = vmatpush1.msra.mxu0 0.0
    %1694 = vmatprep.subr.mxu0 0.0
    %1695 = vmatpush1.msra.mxu0 0.0
    %1696 = vmatprep.subr.mxu0 0.0
    %1697 = vmatpush1.msra.mxu0 0.0
    %1698 = vmatprep.subr.mxu0 0.0
    %1699 = vmatpush1.msra.mxu0 0.0
    %1700 = vmatprep.subr.mxu0 0.0
    %1701 = vmatpush1.msra.mxu0 0.0
    %1702 = vmatprep.subr.mxu0 0.0
    %1703 = vmatpush1.msra.mxu0 0.0
    %1704 = vmatprep.subr.mxu0 0.0
    %1705 = vmatpush1.msra.mxu0 0.0
    %1706 = vmatprep.subr.mxu0 0.0
    %1707 = vmatpush1.msra.mxu0 0.0
    %1708 = vmatprep.subr.mxu0 0.0
    %1709 = vmatpush1.msra.mxu0 0.0
    %1710 = vmatprep.subr.mxu0 0.0
    %1711 = vmatpush1.msra.mxu0 0.0
    %1712 = vmatprep.subr.mxu0 0.0
    %1713 = vmatpush1.msra.mxu0 0.0
    %1714 = vmatprep.mubr.f32.mxu0 0.0
    %1715 = vmatmul.mubr.f32.gmra.mrb[0].mxu0 %v1648
    %v1716 = vpop.f32.mrb[0].mxu0
    %v1717 = vadd.f32 0.0, %v1716
    %v1718 = vpop.f32.mrb[0].mxu0
    %v1719 = vadd.f32 0.0, %v1718
    %1720 = vdwg.mxu0
    %1721 = vmatprep.subr.mxu0 %v353
    %1722 = vmatpush1.msra.mxu0 %v352
    %1723 = vmatprep.subr.mxu0 %v357
    %1724 = vmatpush1.msra.mxu0 %v356
    %1725 = vmatprep.subr.mxu0 %v361
    %1726 = vmatpush1.msra.mxu0 %v360
    %1727 = vmatprep.subr.mxu0 %v365
    %1728 = vmatpush1.msra.mxu0 %v364
    %1729 = vmatprep.subr.mxu0 %v369
    %1730 = vmatpush1.msra.mxu0 %v368
    %1731 = vmatprep.subr.mxu0 %v373
    %1732 = vmatpush1.msra.mxu0 %v372
    %1733 = vmatprep.subr.mxu0 %v377
    %1734 = vmatpush1.msra.mxu0 %v376
    %1735 = vmatprep.subr.mxu0 %v381
    %1736 = vmatpush1.msra.mxu0 %v380
    %1737 = vmatprep.subr.mxu0 %v385
    %1738 = vmatpush1.msra.mxu0 %v384
    %1739 = vmatprep.subr.mxu0 %v389
    %1740 = vmatpush1.msra.mxu0 %v388
    %1741 = vmatprep.subr.mxu0 %v393
    %1742 = vmatpush1.msra.mxu0 %v392
    %1743 = vmatprep.subr.mxu0 %v397
    %1744 = vmatpush1.msra.mxu0 %v396
    %1745 = vmatprep.subr.mxu0 %v401
    %1746 = vmatpush1.msra.mxu0 %v400
    %1747 = vmatprep.subr.mxu0 %v405
    %1748 = vmatpush1.msra.mxu0 %v404
    %1749 = vmatprep.subr.mxu0 %v409
    %1750 = vmatpush1.msra.mxu0 %v408
    %1751 = vmatprep.subr.mxu0 %v413
    %1752 = vmatpush1.msra.mxu0 %v412
    %1753 = vmatprep.subr.mxu0 0.0
    %1754 = vmatpush1.msra.mxu0 0.0
    %1755 = vmatprep.subr.mxu0 0.0
    %1756 = vmatpush1.msra.mxu0 0.0
    %1757 = vmatprep.subr.mxu0 0.0
    %1758 = vmatpush1.msra.mxu0 0.0
    %1759 = vmatprep.subr.mxu0 0.0
    %1760 = vmatpush1.msra.mxu0 0.0
    %1761 = vmatprep.subr.mxu0 0.0
    %1762 = vmatpush1.msra.mxu0 0.0
    %1763 = vmatprep.subr.mxu0 0.0
    %1764 = vmatpush1.msra.mxu0 0.0
    %1765 = vmatprep.subr.mxu0 0.0
    %1766 = vmatpush1.msra.mxu0 0.0
    %1767 = vmatprep.subr.mxu0 0.0
    %1768 = vmatpush1.msra.mxu0 0.0
    %1769 = vmatprep.subr.mxu0 0.0
    %1770 = vmatpush1.msra.mxu0 0.0
    %1771 = vmatprep.subr.mxu0 0.0
    %1772 = vmatpush1.msra.mxu0 0.0
    %1773 = vmatprep.subr.mxu0 0.0
    %1774 = vmatpush1.msra.mxu0 0.0
    %1775 = vmatprep.subr.mxu0 0.0
    %1776 = vmatpush1.msra.mxu0 0.0
    %1777 = vmatprep.subr.mxu0 0.0
    %1778 = vmatpush1.msra.mxu0 0.0
    %1779 = vmatprep.subr.mxu0 0.0
    %1780 = vmatpush1.msra.mxu0 0.0
    %1781 = vmatprep.subr.mxu0 0.0
    %1782 = vmatpush1.msra.mxu0 0.0
    %1783 = vmatprep.subr.mxu0 0.0
    %1784 = vmatpush1.msra.mxu0 0.0
    %1785 = vmatprep.mubr.f32.mxu0 0.0
    %1786 = vmatmul.mubr.f32.gmra.mrb[0].mxu0 %v1648
    %v1787 = vpop.f32.mrb[0].mxu0
    %v1788 = vadd.f32 0.0, %v1787
    %v1789 = vpop.f32.mrb[0].mxu0
    %v1790 = vadd.f32 0.0, %v1789
    %1791 = vdwg.mxu0
    %v1792 = vadd.f32 %v1643, %v1717
    %v1793 = vadd.f32 %v1644, %v1719
    %v1794 = vadd.f32 %v1645, %v1788
    %v1795 = vadd.f32 %v1646, %v1790
    %v1796 = vtanh.pop %v1792
    %v1797 = vtanh.pop %v1793
    %v1798 = vtanh.pop %v1794
    %v1799 = vtanh.pop %v1795
    %v1800 = vmul.f32 %v1796, 0.5
    %v1801 = vmul.f32 %v1797, 0.5
    %v1802 = vmul.f32 %v1799, 0.5
    %v1803 = vadd.f32 %v1800, 0.5
    %v1804 = vadd.f32 %v1801, 0.5
    %v1805 = vadd.f32 %v1802, 0.5
    %v1807 = vrot.slane %v1640, 4
    %v1809 = vmul.f32 %v1804, %v1807
    %v1810 = vmul.f32 %v1803, %v1798
    %v1811 = vadd.f32 %v1809, %v1810
    %v1812 = vtanh.pop %v1811
    %v1813 = vmul.f32 %v1805, %v1812
    %v1814 = vld [vmem:[#allocation2 + $0x80] sm:$0xf0]
    %v1815 = vld [vmem:[#allocation2 + $0x88] sm:$0xf0]
    %v1816 = vld [vmem:[#allocation2 + $0x90] sm:$0xf0]
    %v1817 = vld [vmem:[#allocation2 + $0x98] sm:$0xf0]
    %1818 = vmatprep.subr.mxu0 %v351
    %1819 = vmatpush1.msra.mxu0 %v350
    %1820 = vmatprep.subr.mxu0 %v355
    %1821 = vmatpush1.msra.mxu0 %v354
    %1822 = vmatprep.subr.mxu0 %v359
    %1823 = vmatpush1.msra.mxu0 %v358
    %1824 = vmatprep.subr.mxu0 %v363
    %1825 = vmatpush1.msra.mxu0 %v362
    %1826 = vmatprep.subr.mxu0 %v367
    %1827 = vmatpush1.msra.mxu0 %v366
    %1828 = vmatprep.subr.mxu0 %v371
    %1829 = vmatpush1.msra.mxu0 %v370
    %1830 = vmatprep.subr.mxu0 %v375
    %1831 = vmatpush1.msra.mxu0 %v374
    %1832 = vmatprep.subr.mxu0 %v379
    %1833 = vmatpush1.msra.mxu0 %v378
    %1834 = vmatprep.subr.mxu0 %v383
    %1835 = vmatpush1.msra.mxu0 %v382
    %1836 = vmatprep.subr.mxu0 %v387
    %1837 = vmatpush1.msra.mxu0 %v386
    %1838 = vmatprep.subr.mxu0 %v391
    %1839 = vmatpush1.msra.mxu0 %v390
    %1840 = vmatprep.subr.mxu0 %v395
    %1841 = vmatpush1.msra.mxu0 %v394
    %1842 = vmatprep.subr.mxu0 %v399
    %1843 = vmatpush1.msra.mxu0 %v398
    %1844 = vmatprep.subr.mxu0 %v403
    %1845 = vmatpush1.msra.mxu0 %v402
    %1846 = vmatprep.subr.mxu0 %v407
    %1847 = vmatpush1.msra.mxu0 %v406
    %1848 = vmatprep.subr.mxu0 %v411
    %1849 = vmatpush1.msra.mxu0 %v410
    %1850 = vmatprep.subr.mxu0 0.0
    %1851 = vmatpush1.msra.mxu0 0.0
    %1852 = vmatprep.subr.mxu0 0.0
    %1853 = vmatpush1.msra.mxu0 0.0
    %1854 = vmatprep.subr.mxu0 0.0
    %1855 = vmatpush1.msra.mxu0 0.0
    %1856 = vmatprep.subr.mxu0 0.0
    %1857 = vmatpush1.msra.mxu0 0.0
    %1858 = vmatprep.subr.mxu0 0.0
    %1859 = vmatpush1.msra.mxu0 0.0
    %1860 = vmatprep.subr.mxu0 0.0
    %1861 = vmatpush1.msra.mxu0 0.0
    %1862 = vmatprep.subr.mxu0 0.0
    %1863 = vmatpush1.msra.mxu0 0.0
    %1864 = vmatprep.subr.mxu0 0.0
    %1865 = vmatpush1.msra.mxu0 0.0
    %1866 = vmatprep.subr.mxu0 0.0
    %1867 = vmatpush1.msra.mxu0 0.0
    %1868 = vmatprep.subr.mxu0 0.0
    %1869 = vmatpush1.msra.mxu0 0.0
    %1870 = vmatprep.subr.mxu0 0.0
    %1871 = vmatpush1.msra.mxu0 0.0
    %1872 = vmatprep.subr.mxu0 0.0
    %1873 = vmatpush1.msra.mxu0 0.0
    %1874 = vmatprep.subr.mxu0 0.0
    %1875 = vmatpush1.msra.mxu0 0.0
    %1876 = vmatprep.subr.mxu0 0.0
    %1877 = vmatpush1.msra.mxu0 0.0
    %1878 = vmatprep.subr.mxu0 0.0
    %1879 = vmatpush1.msra.mxu0 0.0
    %1880 = vmatprep.subr.mxu0 0.0
    %1881 = vmatpush1.msra.mxu0 0.0
    %1882 = vmatprep.mubr.f32.mxu0 0.0
    %1883 = vmatmul.mubr.f32.gmra.mrb[0].mxu0 %v1813
    %v1884 = vpop.f32.mrb[0].mxu0
    %v1885 = vadd.f32 0.0, %v1884
    %v1886 = vpop.f32.mrb[0].mxu0
    %v1887 = vadd.f32 0.0, %v1886
    %1888 = vdwg.mxu0
    %1889 = vmatprep.subr.mxu0 %v353
    %1890 = vmatpush1.msra.mxu0 %v352
    %1891 = vmatprep.subr.mxu0 %v357
    %1892 = vmatpush1.msra.mxu0 %v356
    %1893 = vmatprep.subr.mxu0 %v361
    %1894 = vmatpush1.msra.mxu0 %v360
    %1895 = vmatprep.subr.mxu0 %v365
    %1896 = vmatpush1.msra.mxu0 %v364
    %1897 = vmatprep.subr.mxu0 %v369
    %1898 = vmatpush1.msra.mxu0 %v368
    %1899 = vmatprep.subr.mxu0 %v373
    %1900 = vmatpush1.msra.mxu0 %v372
    %1901 = vmatprep.subr.mxu0 %v377
    %1902 = vmatpush1.msra.mxu0 %v376
    %1903 = vmatprep.subr.mxu0 %v381
    %1904 = vmatpush1.msra.mxu0 %v380
    %1905 = vmatprep.subr.mxu0 %v385
    %1906 = vmatpush1.msra.mxu0 %v384
    %1907 = vmatprep.subr.mxu0 %v389
    %1908 = vmatpush1.msra.mxu0 %v388
    %1909 = vmatprep.subr.mxu0 %v393
    %1910 = vmatpush1.msra.mxu0 %v392
    %1911 = vmatprep.subr.mxu0 %v397
    %1912 = vmatpush1.msra.mxu0 %v396
    %1913 = vmatprep.subr.mxu0 %v401
    %1914 = vmatpush1.msra.mxu0 %v400
    %1915 = vmatprep.subr.mxu0 %v405
    %1916 = vmatpush1.msra.mxu0 %v404
    %1917 = vmatprep.subr.mxu0 %v409
    %1918 = vmatpush1.msra.mxu0 %v408
    %1919 = vmatprep.subr.mxu0 %v413
    %1920 = vmatpush1.msra.mxu0 %v412
    %1921 = vmatprep.subr.mxu0 0.0
    %1922 = vmatpush1.msra.mxu0 0.0
    %1923 = vmatprep.subr.mxu0 0.0
    %1924 = vmatpush1.msra.mxu0 0.0
    %1925 = vmatprep.subr.mxu0 0.0
    %1926 = vmatpush1.msra.mxu0 0.0
    %1927 = vmatprep.subr.mxu0 0.0
    %1928 = vmatpush1.msra.mxu0 0.0
    %1929 = vmatprep.subr.mxu0 0.0
    %1930 = vmatpush1.msra.mxu0 0.0
    %1931 = vmatprep.subr.mxu0 0.0
    %1932 = vmatpush1.msra.mxu0 0.0
    %1933 = vmatprep.subr.mxu0 0.0
    %1934 = vmatpush1.msra.mxu0 0.0
    %1935 = vmatprep.subr.mxu0 0.0
    %1936 = vmatpush1.msra.mxu0 0.0
    %1937 = vmatprep.subr.mxu0 0.0
    %1938 = vmatpush1.msra.mxu0 0.0
    %1939 = vmatprep.subr.mxu0 0.0
    %1940 = vmatpush1.msra.mxu0 0.0
    %1941 = vmatprep.subr.mxu0 0.0
    %1942 = vmatpush1.msra.mxu0 0.0
    %1943 = vmatprep.subr.mxu0 0.0
    %1944 = vmatpush1.msra.mxu0 0.0
    %1945 = vmatprep.subr.mxu0 0.0
    %1946 = vmatpush1.msra.mxu0 0.0
    %1947 = vmatprep.subr.mxu0 0.0
    %1948 = vmatpush1.msra.mxu0 0.0
    %1949 = vmatprep.subr.mxu0 0.0
    %1950 = vmatpush1.msra.mxu0 0.0
    %1951 = vmatprep.subr.mxu0 0.0
    %1952 = vmatpush1.msra.mxu0 0.0
    %1953 = vmatprep.mubr.f32.mxu0 0.0
    %1954 = vmatmul.mubr.f32.gmra.mrb[0].mxu0 %v1813
    %v1955 = vpop.f32.mrb[0].mxu0
    %v1956 = vadd.f32 0.0, %v1955
    %v1957 = vpop.f32.mrb[0].mxu0
    %v1958 = vadd.f32 0.0, %v1957
    %1959 = vdwg.mxu0
    %v1964 = vrot.slane %v1885, 4
    %v1965 = vrot.slane %v1887, 4
    %v1966 = vrot.slane %v1956, 4
    %v1967 = vrot.slane %v1958, 4
    %v1972 = vadd.f32 %v1814, %v1964
    %v1973 = vadd.f32 %v1815, %v1965
    %v1974 = vadd.f32 %v1816, %v1966
    %v1975 = vadd.f32 %v1817, %v1967
    %v1976 = vtanh.pop %v1972
    %v1977 = vtanh.pop %v1973
    %v1978 = vtanh.pop %v1974
    %v1979 = vtanh.pop %v1975
    %v1980 = vmul.f32 %v1976, 0.5
    %v1981 = vmul.f32 %v1977, 0.5
    %v1982 = vmul.f32 %v1979, 0.5
    %v1983 = vadd.f32 %v1980, 0.5
    %v1984 = vadd.f32 %v1981, 0.5
    %v1985 = vadd.f32 %v1982, 0.5
    %v1987 = vrot.slane %v1811, 4
    %v1989 = vmul.f32 %v1984, %v1987
    %v1990 = vmul.f32 %v1983, %v1978
    %v1991 = vadd.f32 %v1989, %v1990
    %v1992 = vtanh.pop %v1991
    %v1993 = vmul.f32 %v1985, %v1992
    %v1994 = vld [vmem:[#allocation2 + $0xa0] sm:$0xf]
    %v1995 = vld [vmem:[#allocation2 + $0xa8] sm:$0xf]
    %v1996 = vld [vmem:[#allocation2 + $0xb0] sm:$0xf]
    %v1997 = vld [vmem:[#allocation2 + $0xb8] sm:$0xf]
    %v1999 = vrot.slane %v1993, 4
    %2001 = vmatprep.subr.mxu0 %v351
    %2002 = vmatpush1.msra.mxu0 %v350
    %2003 = vmatprep.subr.mxu0 %v355
    %2004 = vmatpush1.msra.mxu0 %v354
    %2005 = vmatprep.subr.mxu0 %v359
    %2006 = vmatpush1.msra.mxu0 %v358
    %2007 = vmatprep.subr.mxu0 %v363
    %2008 = vmatpush1.msra.mxu0 %v362
    %2009 = vmatprep.subr.mxu0 %v367
    %2010 = vmatpush1.msra.mxu0 %v366
    %2011 = vmatprep.subr.mxu0 %v371
    %2012 = vmatpush1.msra.mxu0 %v370
    %2013 = vmatprep.subr.mxu0 %v375
    %2014 = vmatpush1.msra.mxu0 %v374
    %2015 = vmatprep.subr.mxu0 %v379
    %2016 = vmatpush1.msra.mxu0 %v378
    %2017 = vmatprep.subr.mxu0 %v383
    %2018 = vmatpush1.msra.mxu0 %v382
    %2019 = vmatprep.subr.mxu0 %v387
    %2020 = vmatpush1.msra.mxu0 %v386
    %2021 = vmatprep.subr.mxu0 %v391
    %2022 = vmatpush1.msra.mxu0 %v390
    %2023 = vmatprep.subr.mxu0 %v395
    %2024 = vmatpush1.msra.mxu0 %v394
    %2025 = vmatprep.subr.mxu0 %v399
    %2026 = vmatpush1.msra.mxu0 %v398
    %2027 = vmatprep.subr.mxu0 %v403
    %2028 = vmatpush1.msra.mxu0 %v402
    %2029 = vmatprep.subr.mxu0 %v407
    %2030 = vmatpush1.msra.mxu0 %v406
    %2031 = vmatprep.subr.mxu0 %v411
    %2032 = vmatpush1.msra.mxu0 %v410
    %2033 = vmatprep.subr.mxu0 0.0
    %2034 = vmatpush1.msra.mxu0 0.0
    %2035 = vmatprep.subr.mxu0 0.0
    %2036 = vmatpush1.msra.mxu0 0.0
    %2037 = vmatprep.subr.mxu0 0.0
    %2038 = vmatpush1.msra.mxu0 0.0
    %2039 = vmatprep.subr.mxu0 0.0
    %2040 = vmatpush1.msra.mxu0 0.0
    %2041 = vmatprep.subr.mxu0 0.0
    %2042 = vmatpush1.msra.mxu0 0.0
    %2043 = vmatprep.subr.mxu0 0.0
    %2044 = vmatpush1.msra.mxu0 0.0
    %2045 = vmatprep.subr.mxu0 0.0
    %2046 = vmatpush1.msra.mxu0 0.0
    %2047 = vmatprep.subr.mxu0 0.0
    %2048 = vmatpush1.msra.mxu0 0.0
    %2049 = vmatprep.subr.mxu0 0.0
    %2050 = vmatpush1.msra.mxu0 0.0
    %2051 = vmatprep.subr.mxu0 0.0
    %2052 = vmatpush1.msra.mxu0 0.0
    %2053 = vmatprep.subr.mxu0 0.0
    %2054 = vmatpush1.msra.mxu0 0.0
    %2055 = vmatprep.subr.mxu0 0.0
    %2056 = vmatpush1.msra.mxu0 0.0
    %2057 = vmatprep.subr.mxu0 0.0
    %2058 = vmatpush1.msra.mxu0 0.0
    %2059 = vmatprep.subr.mxu0 0.0
    %2060 = vmatpush1.msra.mxu0 0.0
    %2061 = vmatprep.subr.mxu0 0.0
    %2062 = vmatpush1.msra.mxu0 0.0
    %2063 = vmatprep.subr.mxu0 0.0
    %2064 = vmatpush1.msra.mxu0 0.0
    %2065 = vmatprep.mubr.f32.mxu0 0.0
    %2066 = vmatmul.mubr.f32.gmra.mrb[0].mxu0 %v1999
    %v2067 = vpop.f32.mrb[0].mxu0
    %v2068 = vadd.f32 0.0, %v2067
    %v2069 = vpop.f32.mrb[0].mxu0
    %v2070 = vadd.f32 0.0, %v2069
    %2071 = vdwg.mxu0
    %2072 = vmatprep.subr.mxu0 %v353
    %2073 = vmatpush1.msra.mxu0 %v352
    %2074 = vmatprep.subr.mxu0 %v357
    %2075 = vmatpush1.msra.mxu0 %v356
    %2076 = vmatprep.subr.mxu0 %v361
    %2077 = vmatpush1.msra.mxu0 %v360
    %2078 = vmatprep.subr.mxu0 %v365
    %2079 = vmatpush1.msra.mxu0 %v364
    %2080 = vmatprep.subr.mxu0 %v369
    %2081 = vmatpush1.msra.mxu0 %v368
    %2082 = vmatprep.subr.mxu0 %v373
    %2083 = vmatpush1.msra.mxu0 %v372
    %2084 = vmatprep.subr.mxu0 %v377
    %2085 = vmatpush1.msra.mxu0 %v376
    %2086 = vmatprep.subr.mxu0 %v381
    %2087 = vmatpush1.msra.mxu0 %v380
    %2088 = vmatprep.subr.mxu0 %v385
    %2089 = vmatpush1.msra.mxu0 %v384
    %2090 = vmatprep.subr.mxu0 %v389
    %2091 = vmatpush1.msra.mxu0 %v388
    %2092 = vmatprep.subr.mxu0 %v393
    %2093 = vmatpush1.msra.mxu0 %v392
    %2094 = vmatprep.subr.mxu0 %v397
    %2095 = vmatpush1.msra.mxu0 %v396
    %2096 = vmatprep.subr.mxu0 %v401
    %2097 = vmatpush1.msra.mxu0 %v400
    %2098 = vmatprep.subr.mxu0 %v405
    %2099 = vmatpush1.msra.mxu0 %v404
    %2100 = vmatprep.subr.mxu0 %v409
    %2101 = vmatpush1.msra.mxu0 %v408
    %2102 = vmatprep.subr.mxu0 %v413
    %2103 = vmatpush1.msra.mxu0 %v412
    %2104 = vmatprep.subr.mxu0 0.0
    %2105 = vmatpush1.msra.mxu0 0.0
    %2106 = vmatprep.subr.mxu0 0.0
    %2107 = vmatpush1.msra.mxu0 0.0
    %2108 = vmatprep.subr.mxu0 0.0
    %2109 = vmatpush1.msra.mxu0 0.0
    %2110 = vmatprep.subr.mxu0 0.0
    %2111 = vmatpush1.msra.mxu0 0.0
    %2112 = vmatprep.subr.mxu0 0.0
    %2113 = vmatpush1.msra.mxu0 0.0
    %2114 = vmatprep.subr.mxu0 0.0
    %2115 = vmatpush1.msra.mxu0 0.0
    %2116 = vmatprep.subr.mxu0 0.0
    %2117 = vmatpush1.msra.mxu0 0.0
    %2118 = vmatprep.subr.mxu0 0.0
    %2119 = vmatpush1.msra.mxu0 0.0
    %2120 = vmatprep.subr.mxu0 0.0
    %2121 = vmatpush1.msra.mxu0 0.0
    %2122 = vmatprep.subr.mxu0 0.0
    %2123 = vmatpush1.msra.mxu0 0.0
    %2124 = vmatprep.subr.mxu0 0.0
    %2125 = vmatpush1.msra.mxu0 0.0
    %2126 = vmatprep.subr.mxu0 0.0
    %2127 = vmatpush1.msra.mxu0 0.0
    %2128 = vmatprep.subr.mxu0 0.0
    %2129 = vmatpush1.msra.mxu0 0.0
    %2130 = vmatprep.subr.mxu0 0.0
    %2131 = vmatpush1.msra.mxu0 0.0
    %2132 = vmatprep.subr.mxu0 0.0
    %2133 = vmatpush1.msra.mxu0 0.0
    %2134 = vmatprep.subr.mxu0 0.0
    %2135 = vmatpush1.msra.mxu0 0.0
    %2136 = vmatprep.mubr.f32.mxu0 0.0
    %2137 = vmatmul.mubr.f32.gmra.mrb[0].mxu0 %v1999
    %v2138 = vpop.f32.mrb[0].mxu0
    %v2139 = vadd.f32 0.0, %v2138
    %v2140 = vpop.f32.mrb[0].mxu0
    %v2141 = vadd.f32 0.0, %v2140
    %2142 = vdwg.mxu0
    %v2143 = vadd.f32 %v1994, %v2068
    %v2144 = vadd.f32 %v1995, %v2070
    %v2145 = vadd.f32 %v1996, %v2139
    %v2146 = vadd.f32 %v1997, %v2141
    %v2147 = vtanh.pop %v2143
    %v2148 = vtanh.pop %v2144
    %v2149 = vtanh.pop %v2145
    %v2150 = vtanh.pop %v2146
    %v2151 = vmul.f32 %v2147, 0.5
    %v2152 = vmul.f32 %v2148, 0.5
    %v2153 = vmul.f32 %v2150, 0.5
    %v2154 = vadd.f32 %v2151, 0.5
    %v2155 = vadd.f32 %v2152, 0.5
    %v2156 = vadd.f32 %v2153, 0.5
    %v2158 = vrot.slane %v1991, 4
    %v2160 = vmul.f32 %v2155, %v2158
    %v2161 = vmul.f32 %v2154, %v2149
    %v2162 = vadd.f32 %v2160, %v2161
    %v2163 = vtanh.pop %v2162
    %v2164 = vmul.f32 %v2156, %v2163
    %v2165 = vld [vmem:[#allocation2 + $0xa0] sm:$0xf0]
    %v2166 = vld [vmem:[#allocation2 + $0xa8] sm:$0xf0]
    %v2167 = vld [vmem:[#allocation2 + $0xb0] sm:$0xf0]
    %v2168 = vld [vmem:[#allocation2 + $0xb8] sm:$0xf0]
    %2169 = vmatprep.subr.mxu0 %v351
    %2170 = vmatpush1.msra.mxu0 %v350
    %2171 = vmatprep.subr.mxu0 %v355
    %2172 = vmatpush1.msra.mxu0 %v354
    %2173 = vmatprep.subr.mxu0 %v359
    %2174 = vmatpush1.msra.mxu0 %v358
    %2175 = vmatprep.subr.mxu0 %v363
    %2176 = vmatpush1.msra.mxu0 %v362
    %2177 = vmatprep.subr.mxu0 %v367
    %2178 = vmatpush1.msra.mxu0 %v366
    %2179 = vmatprep.subr.mxu0 %v371
    %2180 = vmatpush1.msra.mxu0 %v370
    %2181 = vmatprep.subr.mxu0 %v375
    %2182 = vmatpush1.msra.mxu0 %v374
    %2183 = vmatprep.subr.mxu0 %v379
    %2184 = vmatpush1.msra.mxu0 %v378
    %2185 = vmatprep.subr.mxu0 %v383
    %2186 = vmatpush1.msra.mxu0 %v382
    %2187 = vmatprep.subr.mxu0 %v387
    %2188 = vmatpush1.msra.mxu0 %v386
    %2189 = vmatprep.subr.mxu0 %v391
    %2190 = vmatpush1.msra.mxu0 %v390
    %2191 = vmatprep.subr.mxu0 %v395
    %2192 = vmatpush1.msra.mxu0 %v394
    %2193 = vmatprep.subr.mxu0 %v399
    %2194 = vmatpush1.msra.mxu0 %v398
    %2195 = vmatprep.subr.mxu0 %v403
    %2196 = vmatpush1.msra.mxu0 %v402
    %2197 = vmatprep.subr.mxu0 %v407
    %2198 = vmatpush1.msra.mxu0 %v406
    %2199 = vmatprep.subr.mxu0 %v411
    %2200 = vmatpush1.msra.mxu0 %v410
    %2201 = vmatprep.subr.mxu0 0.0
    %2202 = vmatpush1.msra.mxu0 0.0
    %2203 = vmatprep.subr.mxu0 0.0
    %2204 = vmatpush1.msra.mxu0 0.0
    %2205 = vmatprep.subr.mxu0 0.0
    %2206 = vmatpush1.msra.mxu0 0.0
    %2207 = vmatprep.subr.mxu0 0.0
    %2208 = vmatpush1.msra.mxu0 0.0
    %2209 = vmatprep.subr.mxu0 0.0
    %2210 = vmatpush1.msra.mxu0 0.0
    %2211 = vmatprep.subr.mxu0 0.0
    %2212 = vmatpush1.msra.mxu0 0.0
    %2213 = vmatprep.subr.mxu0 0.0
    %2214 = vmatpush1.msra.mxu0 0.0
    %2215 = vmatprep.subr.mxu0 0.0
    %2216 = vmatpush1.msra.mxu0 0.0
    %2217 = vmatprep.subr.mxu0 0.0
    %2218 = vmatpush1.msra.mxu0 0.0
    %2219 = vmatprep.subr.mxu0 0.0
    %2220 = vmatpush1.msra.mxu0 0.0
    %2221 = vmatprep.subr.mxu0 0.0
    %2222 = vmatpush1.msra.mxu0 0.0
    %2223 = vmatprep.subr.mxu0 0.0
    %2224 = vmatpush1.msra.mxu0 0.0
    %2225 = vmatprep.subr.mxu0 0.0
    %2226 = vmatpush1.msra.mxu0 0.0
    %2227 = vmatprep.subr.mxu0 0.0
    %2228 = vmatpush1.msra.mxu0 0.0
    %2229 = vmatprep.subr.mxu0 0.0
    %2230 = vmatpush1.msra.mxu0 0.0
    %2231 = vmatprep.subr.mxu0 0.0
    %2232 = vmatpush1.msra.mxu0 0.0
    %2233 = vmatprep.mubr.f32.mxu0 0.0
    %2234 = vmatmul.mubr.f32.gmra.mrb[0].mxu0 %v2164
    %v2235 = vpop.f32.mrb[0].mxu0
    %v2236 = vadd.f32 0.0, %v2235
    %v2237 = vpop.f32.mrb[0].mxu0
    %v2238 = vadd.f32 0.0, %v2237
    %2239 = vdwg.mxu0
    %2240 = vmatprep.subr.mxu0 %v353
    %2241 = vmatpush1.msra.mxu0 %v352
    %2242 = vmatprep.subr.mxu0 %v357
    %2243 = vmatpush1.msra.mxu0 %v356
    %2244 = vmatprep.subr.mxu0 %v361
    %2245 = vmatpush1.msra.mxu0 %v360
    %2246 = vmatprep.subr.mxu0 %v365
    %2247 = vmatpush1.msra.mxu0 %v364
    %2248 = vmatprep.subr.mxu0 %v369
    %2249 = vmatpush1.msra.mxu0 %v368
    %2250 = vmatprep.subr.mxu0 %v373
    %2251 = vmatpush1.msra.mxu0 %v372
    %2252 = vmatprep.subr.mxu0 %v377
    %2253 = vmatpush1.msra.mxu0 %v376
    %2254 = vmatprep.subr.mxu0 %v381
    %2255 = vmatpush1.msra.mxu0 %v380
    %2256 = vmatprep.subr.mxu0 %v385
    %2257 = vmatpush1.msra.mxu0 %v384
    %2258 = vmatprep.subr.mxu0 %v389
    %2259 = vmatpush1.msra.mxu0 %v388
    %2260 = vmatprep.subr.mxu0 %v393
    %2261 = vmatpush1.msra.mxu0 %v392
    %2262 = vmatprep.subr.mxu0 %v397
    %2263 = vmatpush1.msra.mxu0 %v396
    %2264 = vmatprep.subr.mxu0 %v401
    %2265 = vmatpush1.msra.mxu0 %v400
    %2266 = vmatprep.subr.mxu0 %v405
    %2267 = vmatpush1.msra.mxu0 %v404
    %2268 = vmatprep.subr.mxu0 %v409
    %2269 = vmatpush1.msra.mxu0 %v408
    %2270 = vmatprep.subr.mxu0 %v413
    %2271 = vmatpush1.msra.mxu0 %v412
    %2272 = vmatprep.subr.mxu0 0.0
    %2273 = vmatpush1.msra.mxu0 0.0
    %2274 = vmatprep.subr.mxu0 0.0
    %2275 = vmatpush1.msra.mxu0 0.0
    %2276 = vmatprep.subr.mxu0 0.0
    %2277 = vmatpush1.msra.mxu0 0.0
    %2278 = vmatprep.subr.mxu0 0.0
    %2279 = vmatpush1.msra.mxu0 0.0
    %2280 = vmatprep.subr.mxu0 0.0
    %2281 = vmatpush1.msra.mxu0 0.0
    %2282 = vmatprep.subr.mxu0 0.0
    %2283 = vmatpush1.msra.mxu0 0.0
    %2284 = vmatprep.subr.mxu0 0.0
    %2285 = vmatpush1.msra.mxu0 0.0
    %2286 = vmatprep.subr.mxu0 0.0
    %2287 = vmatpush1.msra.mxu0 0.0
    %2288 = vmatprep.subr.mxu0 0.0
    %2289 = vmatpush1.msra.mxu0 0.0
    %2290 = vmatprep.subr.mxu0 0.0
    %2291 = vmatpush1.msra.mxu0 0.0
    %2292 = vmatprep.subr.mxu0 0.0
    %2293 = vmatpush1.msra.mxu0 0.0
    %2294 = vmatprep.subr.mxu0 0.0
    %2295 = vmatpush1.msra.mxu0 0.0
    %2296 = vmatprep.subr.mxu0 0.0
    %2297 = vmatpush1.msra.mxu0 0.0
    %2298 = vmatprep.subr.mxu0 0.0
    %2299 = vmatpush1.msra.mxu0 0.0
    %2300 = vmatprep.subr.mxu0 0.0
    %2301 = vmatpush1.msra.mxu0 0.0
    %2302 = vmatprep.subr.mxu0 0.0
    %2303 = vmatpush1.msra.mxu0 0.0
    %2304 = vmatprep.mubr.f32.mxu0 0.0
    %2305 = vmatmul.mubr.f32.gmra.mrb[0].mxu0 %v2164
    %v2306 = vpop.f32.mrb[0].mxu0
    %v2307 = vadd.f32 0.0, %v2306
    %v2308 = vpop.f32.mrb[0].mxu0
    %v2309 = vadd.f32 0.0, %v2308
    %2310 = vdwg.mxu0
    %v2315 = vrot.slane %v2236, 4
    %v2316 = vrot.slane %v2238, 4
    %v2317 = vrot.slane %v2307, 4
    %v2318 = vrot.slane %v2309, 4
    %v2323 = vadd.f32 %v2165, %v2315
    %v2324 = vadd.f32 %v2166, %v2316
    %v2325 = vadd.f32 %v2167, %v2317
    %v2326 = vadd.f32 %v2168, %v2318
    %v2327 = vtanh.pop %v2323
    %v2328 = vtanh.pop %v2324
    %v2329 = vtanh.pop %v2325
    %v2330 = vtanh.pop %v2326
    %v2331 = vmul.f32 %v2327, 0.5
    %v2332 = vmul.f32 %v2328, 0.5
    %v2333 = vmul.f32 %v2330, 0.5
    %v2334 = vadd.f32 %v2331, 0.5
    %v2335 = vadd.f32 %v2332, 0.5
    %v2336 = vadd.f32 %v2333, 0.5
    %v2338 = vrot.slane %v2162, 4
    %v2340 = vmul.f32 %v2335, %v2338
    %v2341 = vmul.f32 %v2334, %v2329
    %v2342 = vadd.f32 %v2340, %v2341
    %v2343 = vtanh.pop %v2342
    %v2344 = vmul.f32 %v2336, %v2343
    %v2345 = vld [vmem:[#allocation2 + $0xc0] sm:$0xf]
    %v2346 = vld [vmem:[#allocation2 + $0xc8] sm:$0xf]
    %v2347 = vld [vmem:[#allocation2 + $0xd0] sm:$0xf]
    %v2348 = vld [vmem:[#allocation2 + $0xd8] sm:$0xf]
    %v2350 = vrot.slane %v2344, 4
    %2352 = vmatprep.subr.mxu0 %v351
    %2353 = vmatpush1.msra.mxu0 %v350
    %2354 = vmatprep.subr.mxu0 %v355
    %2355 = vmatpush1.msra.mxu0 %v354
    %2356 = vmatprep.subr.mxu0 %v359
    %2357 = vmatpush1.msra.mxu0 %v358
    %2358 = vmatprep.subr.mxu0 %v363
    %2359 = vmatpush1.msra.mxu0 %v362
    %2360 = vmatprep.subr.mxu0 %v367
    %2361 = vmatpush1.msra.mxu0 %v366
    %2362 = vmatprep.subr.mxu0 %v371
    %2363 = vmatpush1.msra.mxu0 %v370
    %2364 = vmatprep.subr.mxu0 %v375
    %2365 = vmatpush1.msra.mxu0 %v374
    %2366 = vmatprep.subr.mxu0 %v379
    %2367 = vmatpush1.msra.mxu0 %v378
    %2368 = vmatprep.subr.mxu0 %v383
    %2369 = vmatpush1.msra.mxu0 %v382
    %2370 = vmatprep.subr.mxu0 %v387
    %2371 = vmatpush1.msra.mxu0 %v386
    %2372 = vmatprep.subr.mxu0 %v391
    %2373 = vmatpush1.msra.mxu0 %v390
    %2374 = vmatprep.subr.mxu0 %v395
    %2375 = vmatpush1.msra.mxu0 %v394
    %2376 = vmatprep.subr.mxu0 %v399
    %2377 = vmatpush1.msra.mxu0 %v398
    %2378 = vmatprep.subr.mxu0 %v403
    %2379 = vmatpush1.msra.mxu0 %v402
    %2380 = vmatprep.subr.mxu0 %v407
    %2381 = vmatpush1.msra.mxu0 %v406
    %2382 = vmatprep.subr.mxu0 %v411
    %2383 = vmatpush1.msra.mxu0 %v410
    %2384 = vmatprep.subr.mxu0 0.0
    %2385 = vmatpush1.msra.mxu0 0.0
    %2386 = vmatprep.subr.mxu0 0.0
    %2387 = vmatpush1.msra.mxu0 0.0
    %2388 = vmatprep.subr.mxu0 0.0
    %2389 = vmatpush1.msra.mxu0 0.0
    %2390 = vmatprep.subr.mxu0 0.0
    %2391 = vmatpush1.msra.mxu0 0.0
    %2392 = vmatprep.subr.mxu0 0.0
    %2393 = vmatpush1.msra.mxu0 0.0
    %2394 = vmatprep.subr.mxu0 0.0
    %2395 = vmatpush1.msra.mxu0 0.0
    %2396 = vmatprep.subr.mxu0 0.0
    %2397 = vmatpush1.msra.mxu0 0.0
    %2398 = vmatprep.subr.mxu0 0.0
    %2399 = vmatpush1.msra.mxu0 0.0
    %2400 = vmatprep.subr.mxu0 0.0
    %2401 = vmatpush1.msra.mxu0 0.0
    %2402 = vmatprep.subr.mxu0 0.0
    %2403 = vmatpush1.msra.mxu0 0.0
    %2404 = vmatprep.subr.mxu0 0.0
    %2405 = vmatpush1.msra.mxu0 0.0
    %2406 = vmatprep.subr.mxu0 0.0
    %2407 = vmatpush1.msra.mxu0 0.0
    %2408 = vmatprep.subr.mxu0 0.0
    %2409 = vmatpush1.msra.mxu0 0.0
    %2410 = vmatprep.subr.mxu0 0.0
    %2411 = vmatpush1.msra.mxu0 0.0
    %2412 = vmatprep.subr.mxu0 0.0
    %2413 = vmatpush1.msra.mxu0 0.0
    %2414 = vmatprep.subr.mxu0 0.0
    %2415 = vmatpush1.msra.mxu0 0.0
    %2416 = vmatprep.mubr.f32.mxu0 0.0
    %2417 = vmatmul.mubr.f32.gmra.mrb[0].mxu0 %v2350
    %v2418 = vpop.f32.mrb[0].mxu0
    %v2419 = vadd.f32 0.0, %v2418
    %v2420 = vpop.f32.mrb[0].mxu0
    %v2421 = vadd.f32 0.0, %v2420
    %2422 = vdwg.mxu0
    %2423 = vmatprep.subr.mxu0 %v353
    %2424 = vmatpush1.msra.mxu0 %v352
    %2425 = vmatprep.subr.mxu0 %v357
    %2426 = vmatpush1.msra.mxu0 %v356
    %2427 = vmatprep.subr.mxu0 %v361
    %2428 = vmatpush1.msra.mxu0 %v360
    %2429 = vmatprep.subr.mxu0 %v365
    %2430 = vmatpush1.msra.mxu0 %v364
    %2431 = vmatprep.subr.mxu0 %v369
    %2432 = vmatpush1.msra.mxu0 %v368
    %2433 = vmatprep.subr.mxu0 %v373
    %2434 = vmatpush1.msra.mxu0 %v372
    %2435 = vmatprep.subr.mxu0 %v377
    %2436 = vmatpush1.msra.mxu0 %v376
    %2437 = vmatprep.subr.mxu0 %v381
    %2438 = vmatpush1.msra.mxu0 %v380
    %2439 = vmatprep.subr.mxu0 %v385
    %2440 = vmatpush1.msra.mxu0 %v384
    %2441 = vmatprep.subr.mxu0 %v389
    %2442 = vmatpush1.msra.mxu0 %v388
    %2443 = vmatprep.subr.mxu0 %v393
    %2444 = vmatpush1.msra.mxu0 %v392
    %2445 = vmatprep.subr.mxu0 %v397
    %2446 = vmatpush1.msra.mxu0 %v396
    %2447 = vmatprep.subr.mxu0 %v401
    %2448 = vmatpush1.msra.mxu0 %v400
    %2449 = vmatprep.subr.mxu0 %v405
    %2450 = vmatpush1.msra.mxu0 %v404
    %2451 = vmatprep.subr.mxu0 %v409
    %2452 = vmatpush1.msra.mxu0 %v408
    %2453 = vmatprep.subr.mxu0 %v413
    %2454 = vmatpush1.msra.mxu0 %v412
    %2455 = vmatprep.subr.mxu0 0.0
    %2456 = vmatpush1.msra.mxu0 0.0
    %2457 = vmatprep.subr.mxu0 0.0
    %2458 = vmatpush1.msra.mxu0 0.0
    %2459 = vmatprep.subr.mxu0 0.0
    %2460 = vmatpush1.msra.mxu0 0.0
    %2461 = vmatprep.subr.mxu0 0.0
    %2462 = vmatpush1.msra.mxu0 0.0
    %2463 = vmatprep.subr.mxu0 0.0
    %2464 = vmatpush1.msra.mxu0 0.0
    %2465 = vmatprep.subr.mxu0 0.0
    %2466 = vmatpush1.msra.mxu0 0.0
    %2467 = vmatprep.subr.mxu0 0.0
    %2468 = vmatpush1.msra.mxu0 0.0
    %2469 = vmatprep.subr.mxu0 0.0
    %2470 = vmatpush1.msra.mxu0 0.0
    %2471 = vmatprep.subr.mxu0 0.0
    %2472 = vmatpush1.msra.mxu0 0.0
    %2473 = vmatprep.subr.mxu0 0.0
    %2474 = vmatpush1.msra.mxu0 0.0
    %2475 = vmatprep.subr.mxu0 0.0
    %2476 = vmatpush1.msra.mxu0 0.0
    %2477 = vmatprep.subr.mxu0 0.0
    %2478 = vmatpush1.msra.mxu0 0.0
    %2479 = vmatprep.subr.mxu0 0.0
    %2480 = vmatpush1.msra.mxu0 0.0
    %2481 = vmatprep.subr.mxu0 0.0
    %2482 = vmatpush1.msra.mxu0 0.0
    %2483 = vmatprep.subr.mxu0 0.0
    %2484 = vmatpush1.msra.mxu0 0.0
    %2485 = vmatprep.subr.mxu0 0.0
    %2486 = vmatpush1.msra.mxu0 0.0
    %2487 = vmatprep.mubr.f32.mxu0 0.0
    %2488 = vmatmul.mubr.f32.gmra.mrb[0].mxu0 %v2350
    %v2489 = vpop.f32.mrb[0].mxu0
    %v2490 = vadd.f32 0.0, %v2489
    %v2491 = vpop.f32.mrb[0].mxu0
    %v2492 = vadd.f32 0.0, %v2491
    %2493 = vdwg.mxu0
    %v2494 = vadd.f32 %v2345, %v2419
    %v2495 = vadd.f32 %v2346, %v2421
    %v2496 = vadd.f32 %v2347, %v2490
    %v2497 = vadd.f32 %v2348, %v2492
    %v2498 = vtanh.pop %v2494
    %v2499 = vtanh.pop %v2495
    %v2500 = vtanh.pop %v2496
    %v2501 = vtanh.pop %v2497
    %v2502 = vmul.f32 %v2498, 0.5
    %v2503 = vmul.f32 %v2499, 0.5
    %v2504 = vmul.f32 %v2501, 0.5
    %v2505 = vadd.f32 %v2502, 0.5
    %v2506 = vadd.f32 %v2503, 0.5
    %v2507 = vadd.f32 %v2504, 0.5
    %v2509 = vrot.slane %v2342, 4
    %v2511 = vmul.f32 %v2506, %v2509
    %v2512 = vmul.f32 %v2505, %v2500
    %v2513 = vadd.f32 %v2511, %v2512
    %v2514 = vtanh.pop %v2513
    %v2515 = vmul.f32 %v2507, %v2514
    %v2516 = vld [vmem:[#allocation2 + $0xc0] sm:$0xf0]
    %v2517 = vld [vmem:[#allocation2 + $0xc8] sm:$0xf0]
    %v2518 = vld [vmem:[#allocation2 + $0xd0] sm:$0xf0]
    %v2519 = vld [vmem:[#allocation2 + $0xd8] sm:$0xf0]
    %2520 = vmatprep.subr.mxu0 %v351
    %2521 = vmatpush1.msra.mxu0 %v350
    %2522 = vmatprep.subr.mxu0 %v355
    %2523 = vmatpush1.msra.mxu0 %v354
    %2524 = vmatprep.subr.mxu0 %v359
    %2525 = vmatpush1.msra.mxu0 %v358
    %2526 = vmatprep.subr.mxu0 %v363
    %2527 = vmatpush1.msra.mxu0 %v362
    %2528 = vmatprep.subr.mxu0 %v367
    %2529 = vmatpush1.msra.mxu0 %v366
    %2530 = vmatprep.subr.mxu0 %v371
    %2531 = vmatpush1.msra.mxu0 %v370
    %2532 = vmatprep.subr.mxu0 %v375
    %2533 = vmatpush1.msra.mxu0 %v374
    %2534 = vmatprep.subr.mxu0 %v379
    %2535 = vmatpush1.msra.mxu0 %v378
    %2536 = vmatprep.subr.mxu0 %v383
    %2537 = vmatpush1.msra.mxu0 %v382
    %2538 = vmatprep.subr.mxu0 %v387
    %2539 = vmatpush1.msra.mxu0 %v386
    %2540 = vmatprep.subr.mxu0 %v391
    %2541 = vmatpush1.msra.mxu0 %v390
    %2542 = vmatprep.subr.mxu0 %v395
    %2543 = vmatpush1.msra.mxu0 %v394
    %2544 = vmatprep.subr.mxu0 %v399
    %2545 = vmatpush1.msra.mxu0 %v398
    %2546 = vmatprep.subr.mxu0 %v403
    %2547 = vmatpush1.msra.mxu0 %v402
    %2548 = vmatprep.subr.mxu0 %v407
    %2549 = vmatpush1.msra.mxu0 %v406
    %2550 = vmatprep.subr.mxu0 %v411
    %2551 = vmatpush1.msra.mxu0 %v410
    %2552 = vmatprep.subr.mxu0 0.0
    %2553 = vmatpush1.msra.mxu0 0.0
    %2554 = vmatprep.subr.mxu0 0.0
    %2555 = vmatpush1.msra.mxu0 0.0
    %2556 = vmatprep.subr.mxu0 0.0
    %2557 = vmatpush1.msra.mxu0 0.0
    %2558 = vmatprep.subr.mxu0 0.0
    %2559 = vmatpush1.msra.mxu0 0.0
    %2560 = vmatprep.subr.mxu0 0.0
    %2561 = vmatpush1.msra.mxu0 0.0
    %2562 = vmatprep.subr.mxu0 0.0
    %2563 = vmatpush1.msra.mxu0 0.0
    %2564 = vmatprep.subr.mxu0 0.0
    %2565 = vmatpush1.msra.mxu0 0.0
    %2566 = vmatprep.subr.mxu0 0.0
    %2567 = vmatpush1.msra.mxu0 0.0
    %2568 = vmatprep.subr.mxu0 0.0
    %2569 = vmatpush1.msra.mxu0 0.0
    %2570 = vmatprep.subr.mxu0 0.0
    %2571 = vmatpush1.msra.mxu0 0.0
    %2572 = vmatprep.subr.mxu0 0.0
    %2573 = vmatpush1.msra.mxu0 0.0
    %2574 = vmatprep.subr.mxu0 0.0
    %2575 = vmatpush1.msra.mxu0 0.0
    %2576 = vmatprep.subr.mxu0 0.0
    %2577 = vmatpush1.msra.mxu0 0.0
    %2578 = vmatprep.subr.mxu0 0.0
    %2579 = vmatpush1.msra.mxu0 0.0
    %2580 = vmatprep.subr.mxu0 0.0
    %2581 = vmatpush1.msra.mxu0 0.0
    %2582 = vmatprep.subr.mxu0 0.0
    %2583 = vmatpush1.msra.mxu0 0.0
    %2584 = vmatprep.mubr.f32.mxu0 0.0
    %2585 = vmatmul.mubr.f32.gmra.mrb[0].mxu0 %v2515
    %v2586 = vpop.f32.mrb[0].mxu0
    %v2587 = vadd.f32 0.0, %v2586
    %v2588 = vpop.f32.mrb[0].mxu0
    %v2589 = vadd.f32 0.0, %v2588
    %2590 = vdwg.mxu0
    %2591 = vmatprep.subr.mxu0 %v353
    %2592 = vmatpush1.msra.mxu0 %v352
    %2593 = vmatprep.subr.mxu0 %v357
    %2594 = vmatpush1.msra.mxu0 %v356
    %2595 = vmatprep.subr.mxu0 %v361
    %2596 = vmatpush1.msra.mxu0 %v360
    %2597 = vmatprep.subr.mxu0 %v365
    %2598 = vmatpush1.msra.mxu0 %v364
    %2599 = vmatprep.subr.mxu0 %v369
    %2600 = vmatpush1.msra.mxu0 %v368
    %2601 = vmatprep.subr.mxu0 %v373
    %2602 = vmatpush1.msra.mxu0 %v372
    %2603 = vmatprep.subr.mxu0 %v377
    %2604 = vmatpush1.msra.mxu0 %v376
    %2605 = vmatprep.subr.mxu0 %v381
    %2606 = vmatpush1.msra.mxu0 %v380
    %2607 = vmatprep.subr.mxu0 %v385
    %2608 = vmatpush1.msra.mxu0 %v384
    %2609 = vmatprep.subr.mxu0 %v389
    %2610 = vmatpush1.msra.mxu0 %v388
    %2611 = vmatprep.subr.mxu0 %v393
    %2612 = vmatpush1.msra.mxu0 %v392
    %2613 = vmatprep.subr.mxu0 %v397
    %2614 = vmatpush1.msra.mxu0 %v396
    %2615 = vmatprep.subr.mxu0 %v401
    %2616 = vmatpush1.msra.mxu0 %v400
    %2617 = vmatprep.subr.mxu0 %v405
    %2618 = vmatpush1.msra.mxu0 %v404
    %2619 = vmatprep.subr.mxu0 %v409
    %2620 = vmatpush1.msra.mxu0 %v408
    %2621 = vmatprep.subr.mxu0 %v413
    %2622 = vmatpush1.msra.mxu0 %v412
    %2623 = vmatprep.subr.mxu0 0.0
    %2624 = vmatpush1.msra.mxu0 0.0
    %2625 = vmatprep.subr.mxu0 0.0
    %2626 = vmatpush1.msra.mxu0 0.0
    %2627 = vmatprep.subr.mxu0 0.0
    %2628 = vmatpush1.msra.mxu0 0.0
    %2629 = vmatprep.subr.mxu0 0.0
    %2630 = vmatpush1.msra.mxu0 0.0
    %2631 = vmatprep.subr.mxu0 0.0
    %2632 = vmatpush1.msra.mxu0 0.0
    %2633 = vmatprep.subr.mxu0 0.0
    %2634 = vmatpush1.msra.mxu0 0.0
    %2635 = vmatprep.subr.mxu0 0.0
    %2636 = vmatpush1.msra.mxu0 0.0
    %2637 = vmatprep.subr.mxu0 0.0
    %2638 = vmatpush1.msra.mxu0 0.0
    %2639 = vmatprep.subr.mxu0 0.0
    %2640 = vmatpush1.msra.mxu0 0.0
    %2641 = vmatprep.subr.mxu0 0.0
    %2642 = vmatpush1.msra.mxu0 0.0
    %2643 = vmatprep.subr.mxu0 0.0
    %2644 = vmatpush1.msra.mxu0 0.0
    %2645 = vmatprep.subr.mxu0 0.0
    %2646 = vmatpush1.msra.mxu0 0.0
    %2647 = vmatprep.subr.mxu0 0.0
    %2648 = vmatpush1.msra.mxu0 0.0
    %2649 = vmatprep.subr.mxu0 0.0
    %2650 = vmatpush1.msra.mxu0 0.0
    %2651 = vmatprep.subr.mxu0 0.0
    %2652 = vmatpush1.msra.mxu0 0.0
    %2653 = vmatprep.subr.mxu0 0.0
    %2654 = vmatpush1.msra.mxu0 0.0
    %2655 = vmatprep.mubr.f32.mxu0 0.0
    %2656 = vmatmul.mubr.f32.gmra.mrb[0].mxu0 %v2515
    %v2657 = vpop.f32.mrb[0].mxu0
    %v2658 = vadd.f32 0.0, %v2657
    %v2659 = vpop.f32.mrb[0].mxu0
    %v2660 = vadd.f32 0.0, %v2659
    %2661 = vdwg.mxu0
    %v2666 = vrot.slane %v2587, 4
    %v2667 = vrot.slane %v2589, 4
    %v2668 = vrot.slane %v2658, 4
    %v2669 = vrot.slane %v2660, 4
    %v2674 = vadd.f32 %v2516, %v2666
    %v2675 = vadd.f32 %v2517, %v2667
    %v2676 = vadd.f32 %v2518, %v2668
    %v2677 = vadd.f32 %v2519, %v2669
    %v2678 = vtanh.pop %v2674
    %v2679 = vtanh.pop %v2675
    %v2680 = vtanh.pop %v2676
    %v2681 = vtanh.pop %v2677
    %v2682 = vmul.f32 %v2678, 0.5
    %v2683 = vmul.f32 %v2679, 0.5
    %v2684 = vmul.f32 %v2681, 0.5
    %v2685 = vadd.f32 %v2682, 0.5
    %v2686 = vadd.f32 %v2683, 0.5
    %v2687 = vadd.f32 %v2684, 0.5
    %v2689 = vrot.slane %v2513, 4
    %v2691 = vmul.f32 %v2686, %v2689
    %v2692 = vmul.f32 %v2685, %v2680
    %v2693 = vadd.f32 %v2691, %v2692
    %v2694 = vtanh.pop %v2693
    %v2695 = vmul.f32 %v2687, %v2694
    %v2696 = vld [vmem:[#allocation2 + $0xe0] sm:$0xf]
    %v2697 = vld [vmem:[#allocation2 + $0xe8] sm:$0xf]
    %v2698 = vld [vmem:[#allocation2 + $0xf0] sm:$0xf]
    %v2699 = vld [vmem:[#allocation2 + $0xf8] sm:$0xf]
    %v2701 = vrot.slane %v2695, 4
    %2703 = vmatprep.subr.mxu0 %v351
    %2704 = vmatpush1.msra.mxu0 %v350
    %2705 = vmatprep.subr.mxu0 %v355
    %2706 = vmatpush1.msra.mxu0 %v354
    %2707 = vmatprep.subr.mxu0 %v359
    %2708 = vmatpush1.msra.mxu0 %v358
    %2709 = vmatprep.subr.mxu0 %v363
    %2710 = vmatpush1.msra.mxu0 %v362
    %2711 = vmatprep.subr.mxu0 %v367
    %2712 = vmatpush1.msra.mxu0 %v366
    %2713 = vmatprep.subr.mxu0 %v371
    %2714 = vmatpush1.msra.mxu0 %v370
    %2715 = vmatprep.subr.mxu0 %v375
    %2716 = vmatpush1.msra.mxu0 %v374
    %2717 = vmatprep.subr.mxu0 %v379
    %2718 = vmatpush1.msra.mxu0 %v378
    %2719 = vmatprep.subr.mxu0 %v383
    %2720 = vmatpush1.msra.mxu0 %v382
    %2721 = vmatprep.subr.mxu0 %v387
    %2722 = vmatpush1.msra.mxu0 %v386
    %2723 = vmatprep.subr.mxu0 %v391
    %2724 = vmatpush1.msra.mxu0 %v390
    %2725 = vmatprep.subr.mxu0 %v395
    %2726 = vmatpush1.msra.mxu0 %v394
    %2727 = vmatprep.subr.mxu0 %v399
    %2728 = vmatpush1.msra.mxu0 %v398
    %2729 = vmatprep.subr.mxu0 %v403
    %2730 = vmatpush1.msra.mxu0 %v402
    %2731 = vmatprep.subr.mxu0 %v407
    %2732 = vmatpush1.msra.mxu0 %v406
    %2733 = vmatprep.subr.mxu0 %v411
    %2734 = vmatpush1.msra.mxu0 %v410
    %2735 = vmatprep.subr.mxu0 0.0
    %2736 = vmatpush1.msra.mxu0 0.0
    %2737 = vmatprep.subr.mxu0 0.0
    %2738 = vmatpush1.msra.mxu0 0.0
    %2739 = vmatprep.subr.mxu0 0.0
    %2740 = vmatpush1.msra.mxu0 0.0
    %2741 = vmatprep.subr.mxu0 0.0
    %2742 = vmatpush1.msra.mxu0 0.0
    %2743 = vmatprep.subr.mxu0 0.0
    %2744 = vmatpush1.msra.mxu0 0.0
    %2745 = vmatprep.subr.mxu0 0.0
    %2746 = vmatpush1.msra.mxu0 0.0
    %2747 = vmatprep.subr.mxu0 0.0
    %2748 = vmatpush1.msra.mxu0 0.0
    %2749 = vmatprep.subr.mxu0 0.0
    %2750 = vmatpush1.msra.mxu0 0.0
    %2751 = vmatprep.subr.mxu0 0.0
    %2752 = vmatpush1.msra.mxu0 0.0
    %2753 = vmatprep.subr.mxu0 0.0
    %2754 = vmatpush1.msra.mxu0 0.0
    %2755 = vmatprep.subr.mxu0 0.0
    %2756 = vmatpush1.msra.mxu0 0.0
    %2757 = vmatprep.subr.mxu0 0.0
    %2758 = vmatpush1.msra.mxu0 0.0
    %2759 = vmatprep.subr.mxu0 0.0
    %2760 = vmatpush1.msra.mxu0 0.0
    %2761 = vmatprep.subr.mxu0 0.0
    %2762 = vmatpush1.msra.mxu0 0.0
    %2763 = vmatprep.subr.mxu0 0.0
    %2764 = vmatpush1.msra.mxu0 0.0
    %2765 = vmatprep.subr.mxu0 0.0
    %2766 = vmatpush1.msra.mxu0 0.0
    %2767 = vmatprep.mubr.f32.mxu0 0.0
    %2768 = vmatmul.mubr.f32.gmra.mrb[0].mxu0 %v2701
    %v2769 = vpop.f32.mrb[0].mxu0
    %v2770 = vadd.f32 0.0, %v2769
    %v2771 = vpop.f32.mrb[0].mxu0
    %v2772 = vadd.f32 0.0, %v2771
    %2773 = vdwg.mxu0
    %2774 = vmatprep.subr.mxu0 %v353
    %2775 = vmatpush1.msra.mxu0 %v352
    %2776 = vmatprep.subr.mxu0 %v357
    %2777 = vmatpush1.msra.mxu0 %v356
    %2778 = vmatprep.subr.mxu0 %v361
    %2779 = vmatpush1.msra.mxu0 %v360
    %2780 = vmatprep.subr.mxu0 %v365
    %2781 = vmatpush1.msra.mxu0 %v364
    %2782 = vmatprep.subr.mxu0 %v369
    %2783 = vmatpush1.msra.mxu0 %v368
    %2784 = vmatprep.subr.mxu0 %v373
    %2785 = vmatpush1.msra.mxu0 %v372
    %2786 = vmatprep.subr.mxu0 %v377
    %2787 = vmatpush1.msra.mxu0 %v376
    %2788 = vmatprep.subr.mxu0 %v381
    %2789 = vmatpush1.msra.mxu0 %v380
    %2790 = vmatprep.subr.mxu0 %v385
    %2791 = vmatpush1.msra.mxu0 %v384
    %2792 = vmatprep.subr.mxu0 %v389
    %2793 = vmatpush1.msra.mxu0 %v388
    %2794 = vmatprep.subr.mxu0 %v393
    %2795 = vmatpush1.msra.mxu0 %v392
    %2796 = vmatprep.subr.mxu0 %v397
    %2797 = vmatpush1.msra.mxu0 %v396
    %2798 = vmatprep.subr.mxu0 %v401
    %2799 = vmatpush1.msra.mxu0 %v400
    %2800 = vmatprep.subr.mxu0 %v405
    %2801 = vmatpush1.msra.mxu0 %v404
    %2802 = vmatprep.subr.mxu0 %v409
    %2803 = vmatpush1.msra.mxu0 %v408
    %2804 = vmatprep.subr.mxu0 %v413
    %2805 = vmatpush1.msra.mxu0 %v412
    %2806 = vmatprep.subr.mxu0 0.0
    %2807 = vmatpush1.msra.mxu0 0.0
    %2808 = vmatprep.subr.mxu0 0.0
    %2809 = vmatpush1.msra.mxu0 0.0
    %2810 = vmatprep.subr.mxu0 0.0
    %2811 = vmatpush1.msra.mxu0 0.0
    %2812 = vmatprep.subr.mxu0 0.0
    %2813 = vmatpush1.msra.mxu0 0.0
    %2814 = vmatprep.subr.mxu0 0.0
    %2815 = vmatpush1.msra.mxu0 0.0
    %2816 = vmatprep.subr.mxu0 0.0
    %2817 = vmatpush1.msra.mxu0 0.0
    %2818 = vmatprep.subr.mxu0 0.0
    %2819 = vmatpush1.msra.mxu0 0.0
    %2820 = vmatprep.subr.mxu0 0.0
    %2821 = vmatpush1.msra.mxu0 0.0
    %2822 = vmatprep.subr.mxu0 0.0
    %2823 = vmatpush1.msra.mxu0 0.0
    %2824 = vmatprep.subr.mxu0 0.0
    %2825 = vmatpush1.msra.mxu0 0.0
    %2826 = vmatprep.subr.mxu0 0.0
    %2827 = vmatpush1.msra.mxu0 0.0
    %2828 = vmatprep.subr.mxu0 0.0
    %2829 = vmatpush1.msra.mxu0 0.0
    %2830 = vmatprep.subr.mxu0 0.0
    %2831 = vmatpush1.msra.mxu0 0.0
    %2832 = vmatprep.subr.mxu0 0.0
    %2833 = vmatpush1.msra.mxu0 0.0
    %2834 = vmatprep.subr.mxu0 0.0
    %2835 = vmatpush1.msra.mxu0 0.0
    %2836 = vmatprep.subr.mxu0 0.0
    %2837 = vmatpush1.msra.mxu0 0.0
    %2838 = vmatprep.mubr.f32.mxu0 0.0
    %2839 = vmatmul.mubr.f32.gmra.mrb[0].mxu0 %v2701
    %v2840 = vpop.f32.mrb[0].mxu0
    %v2841 = vadd.f32 0.0, %v2840
    %v2842 = vpop.f32.mrb[0].mxu0
    %v2843 = vadd.f32 0.0, %v2842
    %2844 = vdwg.mxu0
    %v2845 = vadd.f32 %v2696, %v2770
    %v2846 = vadd.f32 %v2697, %v2772
    %v2847 = vadd.f32 %v2698, %v2841
    %v2848 = vadd.f32 %v2699, %v2843
    %v2849 = vtanh.pop %v2845
    %v2850 = vtanh.pop %v2846
    %v2851 = vtanh.pop %v2847
    %v2852 = vtanh.pop %v2848
    %v2853 = vmul.f32 %v2849, 0.5
    %v2854 = vmul.f32 %v2850, 0.5
    %v2855 = vmul.f32 %v2852, 0.5
    %v2856 = vadd.f32 %v2853, 0.5
    %v2857 = vadd.f32 %v2854, 0.5
    %v2858 = vadd.f32 %v2855, 0.5
    %v2860 = vrot.slane %v2693, 4
    %v2862 = vmul.f32 %v2857, %v2860
    %v2863 = vmul.f32 %v2856, %v2851
    %v2864 = vadd.f32 %v2862, %v2863
    %v2865 = vtanh.pop %v2864
    %v2866 = vmul.f32 %v2858, %v2865
    %v2867 = vld [vmem:[#allocation2 + $0xe0] sm:$0xf0]
    %v2868 = vld [vmem:[#allocation2 + $0xe8] sm:$0xf0]
    %v2869 = vld [vmem:[#allocation2 + $0xf0] sm:$0xf0]
    %v2870 = vld [vmem:[#allocation2 + $0xf8] sm:$0xf0]
    %2871 = vmatprep.subr.mxu0 %v351
    %2872 = vmatpush1.msra.mxu0 %v350
    %2873 = vmatprep.subr.mxu0 %v355
    %2874 = vmatpush1.msra.mxu0 %v354
    %2875 = vmatprep.subr.mxu0 %v359
    %2876 = vmatpush1.msra.mxu0 %v358
    %2877 = vmatprep.subr.mxu0 %v363
    %2878 = vmatpush1.msra.mxu0 %v362
    %2879 = vmatprep.subr.mxu0 %v367
    %2880 = vmatpush1.msra.mxu0 %v366
    %2881 = vmatprep.subr.mxu0 %v371
    %2882 = vmatpush1.msra.mxu0 %v370
    %2883 = vmatprep.subr.mxu0 %v375
    %2884 = vmatpush1.msra.mxu0 %v374
    %2885 = vmatprep.subr.mxu0 %v379
    %2886 = vmatpush1.msra.mxu0 %v378
    %2887 = vmatprep.subr.mxu0 %v383
    %2888 = vmatpush1.msra.mxu0 %v382
    %2889 = vmatprep.subr.mxu0 %v387
    %2890 = vmatpush1.msra.mxu0 %v386
    %2891 = vmatprep.subr.mxu0 %v391
    %2892 = vmatpush1.msra.mxu0 %v390
    %2893 = vmatprep.subr.mxu0 %v395
    %2894 = vmatpush1.msra.mxu0 %v394
    %2895 = vmatprep.subr.mxu0 %v399
    %2896 = vmatpush1.msra.mxu0 %v398
    %2897 = vmatprep.subr.mxu0 %v403
    %2898 = vmatpush1.msra.mxu0 %v402
    %2899 = vmatprep.subr.mxu0 %v407
    %2900 = vmatpush1.msra.mxu0 %v406
    %2901 = vmatprep.subr.mxu0 %v411
    %2902 = vmatpush1.msra.mxu0 %v410
    %2903 = vmatprep.subr.mxu0 0.0
    %2904 = vmatpush1.msra.mxu0 0.0
    %2905 = vmatprep.subr.mxu0 0.0
    %2906 = vmatpush1.msra.mxu0 0.0
    %2907 = vmatprep.subr.mxu0 0.0
    %2908 = vmatpush1.msra.mxu0 0.0
    %2909 = vmatprep.subr.mxu0 0.0
    %2910 = vmatpush1.msra.mxu0 0.0
    %2911 = vmatprep.subr.mxu0 0.0
    %2912 = vmatpush1.msra.mxu0 0.0
    %2913 = vmatprep.subr.mxu0 0.0
    %2914 = vmatpush1.msra.mxu0 0.0
    %2915 = vmatprep.subr.mxu0 0.0
    %2916 = vmatpush1.msra.mxu0 0.0
    %2917 = vmatprep.subr.mxu0 0.0
    %2918 = vmatpush1.msra.mxu0 0.0
    %2919 = vmatprep.subr.mxu0 0.0
    %2920 = vmatpush1.msra.mxu0 0.0
    %2921 = vmatprep.subr.mxu0 0.0
    %2922 = vmatpush1.msra.mxu0 0.0
    %2923 = vmatprep.subr.mxu0 0.0
    %2924 = vmatpush1.msra.mxu0 0.0
    %2925 = vmatprep.subr.mxu0 0.0
    %2926 = vmatpush1.msra.mxu0 0.0
    %2927 = vmatprep.subr.mxu0 0.0
    %2928 = vmatpush1.msra.mxu0 0.0
    %2929 = vmatprep.subr.mxu0 0.0
    %2930 = vmatpush1.msra.mxu0 0.0
    %2931 = vmatprep.subr.mxu0 0.0
    %2932 = vmatpush1.msra.mxu0 0.0
    %2933 = vmatprep.subr.mxu0 0.0
    %2934 = vmatpush1.msra.mxu0 0.0
    %2935 = vmatprep.mubr.f32.mxu0 0.0
    %2936 = vmatmul.mubr.f32.gmra.mrb[0].mxu0 %v2866
    %v2937 = vpop.f32.mrb[0].mxu0
    %v2938 = vadd.f32 0.0, %v2937
    %v2939 = vpop.f32.mrb[0].mxu0
    %v2940 = vadd.f32 0.0, %v2939
    %2941 = vdwg.mxu0
    %2942 = vmatprep.subr.mxu0 %v353
    %2943 = vmatpush1.msra.mxu0 %v352
    %2944 = vmatprep.subr.mxu0 %v357
    %2945 = vmatpush1.msra.mxu0 %v356
    %2946 = vmatprep.subr.mxu0 %v361
    %2947 = vmatpush1.msra.mxu0 %v360
    %2948 = vmatprep.subr.mxu0 %v365
    %2949 = vmatpush1.msra.mxu0 %v364
    %2950 = vmatprep.subr.mxu0 %v369
    %2951 = vmatpush1.msra.mxu0 %v368
    %2952 = vmatprep.subr.mxu0 %v373
    %2953 = vmatpush1.msra.mxu0 %v372
    %2954 = vmatprep.subr.mxu0 %v377
    %2955 = vmatpush1.msra.mxu0 %v376
    %2956 = vmatprep.subr.mxu0 %v381
    %2957 = vmatpush1.msra.mxu0 %v380
    %2958 = vmatprep.subr.mxu0 %v385
    %2959 = vmatpush1.msra.mxu0 %v384
    %2960 = vmatprep.subr.mxu0 %v389
    %2961 = vmatpush1.msra.mxu0 %v388
    %2962 = vmatprep.subr.mxu0 %v393
    %2963 = vmatpush1.msra.mxu0 %v392
    %2964 = vmatprep.subr.mxu0 %v397
    %2965 = vmatpush1.msra.mxu0 %v396
    %2966 = vmatprep.subr.mxu0 %v401
    %2967 = vmatpush1.msra.mxu0 %v400
    %2968 = vmatprep.subr.mxu0 %v405
    %2969 = vmatpush1.msra.mxu0 %v404
    %2970 = vmatprep.subr.mxu0 %v409
    %2971 = vmatpush1.msra.mxu0 %v408
    %2972 = vmatprep.subr.mxu0 %v413
    %2973 = vmatpush1.msra.mxu0 %v412
    %2974 = vmatprep.subr.mxu0 0.0
    %2975 = vmatpush1.msra.mxu0 0.0
    %2976 = vmatprep.subr.mxu0 0.0
    %2977 = vmatpush1.msra.mxu0 0.0
    %2978 = vmatprep.subr.mxu0 0.0
    %2979 = vmatpush1.msra.mxu0 0.0
    %2980 = vmatprep.subr.mxu0 0.0
    %2981 = vmatpush1.msra.mxu0 0.0
    %2982 = vmatprep.subr.mxu0 0.0
    %2983 = vmatpush1.msra.mxu0 0.0
    %2984 = vmatprep.subr.mxu0 0.0
    %2985 = vmatpush1.msra.mxu0 0.0
    %2986 = vmatprep.subr.mxu0 0.0
    %2987 = vmatpush1.msra.mxu0 0.0
    %2988 = vmatprep.subr.mxu0 0.0
    %2989 = vmatpush1.msra.mxu0 0.0
    %2990 = vmatprep.subr.mxu0 0.0
    %2991 = vmatpush1.msra.mxu0 0.0
    %2992 = vmatprep.subr.mxu0 0.0
    %2993 = vmatpush1.msra.mxu0 0.0
    %2994 = vmatprep.subr.mxu0 0.0
    %2995 = vmatpush1.msra.mxu0 0.0
    %2996 = vmatprep.subr.mxu0 0.0
    %2997 = vmatpush1.msra.mxu0 0.0
    %2998 = vmatprep.subr.mxu0 0.0
    %2999 = vmatpush1.msra.mxu0 0.0
    %3000 = vmatprep.subr.mxu0 0.0
    %3001 = vmatpush1.msra.mxu0 0.0
    %3002 = vmatprep.subr.mxu0 0.0
    %3003 = vmatpush1.msra.mxu0 0.0
    %3004 = vmatprep.subr.mxu0 0.0
    %3005 = vmatpush1.msra.mxu0 0.0
    %3006 = vmatprep.mubr.f32.mxu0 0.0
    %3007 = vmatmul.mubr.f32.gmra.mrb[0].mxu0 %v2866
    %v3008 = vpop.f32.mrb[0].mxu0
    %v3009 = vadd.f32 0.0, %v3008
    %v3010 = vpop.f32.mrb[0].mxu0
    %v3011 = vadd.f32 0.0, %v3010
    %3012 = vdwg.mxu0
    %v3017 = vrot.slane %v2938, 4
    %v3018 = vrot.slane %v2940, 4
    %v3019 = vrot.slane %v3009, 4
    %v3020 = vrot.slane %v3011, 4
    %v3025 = vadd.f32 %v2867, %v3017
    %v3026 = vadd.f32 %v2868, %v3018
    %v3027 = vadd.f32 %v2869, %v3019
    %v3028 = vadd.f32 %v2870, %v3020
    %v3029 = vtanh.pop %v3025
    %v3030 = vtanh.pop %v3026
    %v3031 = vtanh.pop %v3027
    %v3032 = vtanh.pop %v3028
    %v3033 = vmul.f32 %v3029, 0.5
    %v3034 = vmul.f32 %v3030, 0.5
    %v3035 = vmul.f32 %v3032, 0.5
    %v3036 = vadd.f32 %v3033, 0.5
    %v3037 = vadd.f32 %v3034, 0.5
    %v3038 = vadd.f32 %v3035, 0.5
    %v3040 = vrot.slane %v2864, 4
    %v3042 = vmul.f32 %v3037, %v3040
    %v3043 = vmul.f32 %v3036, %v3031
    %v3044 = vadd.f32 %v3042, %v3043
    %v3045 = vtanh.pop %v3044
    %v3046 = vmul.f32 %v3038, %v3045
    %v3048 = vrot.slane %v3046, 4
    %3050 = vmatprep.subr.mxu0 %v351
    %3051 = vmatpush1.msra.mxu0 %v350
    %3052 = vmatprep.subr.mxu0 %v355
    %3053 = vmatpush1.msra.mxu0 %v354
    %3054 = vmatprep.subr.mxu0 %v359
    %3055 = vmatpush1.msra.mxu0 %v358
    %3056 = vmatprep.subr.mxu0 %v363
    %3057 = vmatpush1.msra.mxu0 %v362
    %3058 = vmatprep.subr.mxu0 %v367
    %3059 = vmatpush1.msra.mxu0 %v366
    %3060 = vmatprep.subr.mxu0 %v371
    %3061 = vmatpush1.msra.mxu0 %v370
    %3062 = vmatprep.subr.mxu0 %v375
    %3063 = vmatpush1.msra.mxu0 %v374
    %3064 = vmatprep.subr.mxu0 %v379
    %3065 = vmatpush1.msra.mxu0 %v378
    %3066 = vmatprep.subr.mxu0 %v383
    %3067 = vmatpush1.msra.mxu0 %v382
    %3068 = vmatprep.subr.mxu0 %v387
    %3069 = vmatpush1.msra.mxu0 %v386
    %3070 = vmatprep.subr.mxu0 %v391
    %3071 = vmatpush1.msra.mxu0 %v390
    %3072 = vmatprep.subr.mxu0 %v395
    %3073 = vmatpush1.msra.mxu0 %v394
    %3074 = vmatprep.subr.mxu0 %v399
    %3075 = vmatpush1.msra.mxu0 %v398
    %3076 = vmatprep.subr.mxu0 %v403
    %3077 = vmatpush1.msra.mxu0 %v402
    %3078 = vmatprep.subr.mxu0 %v407
    %3079 = vmatpush1.msra.mxu0 %v406
    %3080 = vmatprep.subr.mxu0 %v411
    %3081 = vmatpush1.msra.mxu0 %v410
    %3082 = vmatprep.subr.mxu0 0.0
    %3083 = vmatpush1.msra.mxu0 0.0
    %3084 = vmatprep.subr.mxu0 0.0
    %3085 = vmatpush1.msra.mxu0 0.0
    %3086 = vmatprep.subr.mxu0 0.0
    %3087 = vmatpush1.msra.mxu0 0.0
    %3088 = vmatprep.subr.mxu0 0.0
    %3089 = vmatpush1.msra.mxu0 0.0
    %3090 = vmatprep.subr.mxu0 0.0
    %3091 = vmatpush1.msra.mxu0 0.0
    %3092 = vmatprep.subr.mxu0 0.0
    %3093 = vmatpush1.msra.mxu0 0.0
    %3094 = vmatprep.subr.mxu0 0.0
    %3095 = vmatpush1.msra.mxu0 0.0
    %3096 = vmatprep.subr.mxu0 0.0
    %3097 = vmatpush1.msra.mxu0 0.0
    %3098 = vmatprep.subr.mxu0 0.0
    %3099 = vmatpush1.msra.mxu0 0.0
    %3100 = vmatprep.subr.mxu0 0.0
    %3101 = vmatpush1.msra.mxu0 0.0
    %3102 = vmatprep.subr.mxu0 0.0
    %3103 = vmatpush1.msra.mxu0 0.0
    %3104 = vmatprep.subr.mxu0 0.0
    %3105 = vmatpush1.msra.mxu0 0.0
    %3106 = vmatprep.subr.mxu0 0.0
    %3107 = vmatpush1.msra.mxu0 0.0
    %3108 = vmatprep.subr.mxu0 0.0
    %3109 = vmatpush1.msra.mxu0 0.0
    %3110 = vmatprep.subr.mxu0 0.0
    %3111 = vmatpush1.msra.mxu0 0.0
    %3112 = vmatprep.subr.mxu0 0.0
    %3113 = vmatpush1.msra.mxu0 0.0
    %3114 = vmatprep.mubr.f32.mxu0 0.0
    %3115 = vmatmul.mubr.f32.gmra.mrb[0].mxu0 %v3048
    %v3116 = vpop.f32.mrb[0].mxu0
    %v3117 = vadd.f32 0.0, %v3116
    %v3118 = vpop.f32.mrb[0].mxu0
    %v3119 = vadd.f32 0.0, %v3118
    %3120 = vdwg.mxu0
    %3121 = vmatprep.subr.mxu0 %v353
    %3122 = vmatpush1.msra.mxu0 %v352
    %3123 = vmatprep.subr.mxu0 %v357
    %3124 = vmatpush1.msra.mxu0 %v356
    %3125 = vmatprep.subr.mxu0 %v361
    %3126 = vmatpush1.msra.mxu0 %v360
    %3127 = vmatprep.subr.mxu0 %v365
    %3128 = vmatpush1.msra.mxu0 %v364
    %3129 = vmatprep.subr.mxu0 %v369
    %3130 = vmatpush1.msra.mxu0 %v368
    %3131 = vmatprep.subr.mxu0 %v373
    %3132 = vmatpush1.msra.mxu0 %v372
    %3133 = vmatprep.subr.mxu0 %v377
    %3134 = vmatpush1.msra.mxu0 %v376
    %3135 = vmatprep.subr.mxu0 %v381
    %3136 = vmatpush1.msra.mxu0 %v380
    %3137 = vmatprep.subr.mxu0 %v385
    %3138 = vmatpush1.msra.mxu0 %v384
    %3139 = vmatprep.subr.mxu0 %v389
    %3140 = vmatpush1.msra.mxu0 %v388
    %3141 = vmatprep.subr.mxu0 %v393
    %3142 = vmatpush1.msra.mxu0 %v392
    %3143 = vmatprep.subr.mxu0 %v397
    %3144 = vmatpush1.msra.mxu0 %v396
    %3145 = vmatprep.subr.mxu0 %v401
    %3146 = vmatpush1.msra.mxu0 %v400
    %3147 = vmatprep.subr.mxu0 %v405
    %3148 = vmatpush1.msra.mxu0 %v404
    %3149 = vmatprep.subr.mxu0 %v409
    %3150 = vmatpush1.msra.mxu0 %v408
    %3151 = vmatprep.subr.mxu0 %v413
    %3152 = vmatpush1.msra.mxu0 %v412
    %3153 = vmatprep.subr.mxu0 0.0
    %3154 = vmatpush1.msra.mxu0 0.0
    %3155 = vmatprep.subr.mxu0 0.0
    %3156 = vmatpush1.msra.mxu0 0.0
    %3157 = vmatprep.subr.mxu0 0.0
    %3158 = vmatpush1.msra.mxu0 0.0
    %3159 = vmatprep.subr.mxu0 0.0
    %3160 = vmatpush1.msra.mxu0 0.0
    %3161 = vmatprep.subr.mxu0 0.0
    %3162 = vmatpush1.msra.mxu0 0.0
    %3163 = vmatprep.subr.mxu0 0.0
    %3164 = vmatpush1.msra.mxu0 0.0
    %3165 = vmatprep.subr.mxu0 0.0
    %3166 = vmatpush1.msra.mxu0 0.0
    %3167 = vmatprep.subr.mxu0 0.0
    %3168 = vmatpush1.msra.mxu0 0.0
    %3169 = vmatprep.subr.mxu0 0.0
    %3170 = vmatpush1.msra.mxu0 0.0
    %3171 = vmatprep.subr.mxu0 0.0
    %3172 = vmatpush1.msra.mxu0 0.0
    %3173 = vmatprep.subr.mxu0 0.0
    %3174 = vmatpush1.msra.mxu0 0.0
    %3175 = vmatprep.subr.mxu0 0.0
    %3176 = vmatpush1.msra.mxu0 0.0
    %3177 = vmatprep.subr.mxu0 0.0
    %3178 = vmatpush1.msra.mxu0 0.0
    %3179 = vmatprep.subr.mxu0 0.0
    %3180 = vmatpush1.msra.mxu0 0.0
    %3181 = vmatprep.subr.mxu0 0.0
    %3182 = vmatpush1.msra.mxu0 0.0
    %3183 = vmatprep.subr.mxu0 0.0
    %3184 = vmatpush1.msra.mxu0 0.0
    %3185 = vmatprep.mubr.f32.mxu0 0.0
    %3186 = vmatmul.mubr.f32.gmra.mrb[0].mxu0 %v3048
    %v3187 = vpop.f32.mrb[0].mxu0
    %v3188 = vadd.f32 0.0, %v3187
    %v3189 = vpop.f32.mrb[0].mxu0
    %v3190 = vadd.f32 0.0, %v3189
    %3191 = vdwg.mxu0
    %v3192 = vadd.f32 %v325, %v3117
    %v3193 = vadd.f32 %v326, %v3119
    %v3194 = vadd.f32 %v327, %v3188
    %v3195 = vadd.f32 %v328, %v3190
    %v3196 = vtanh.pop %v3192
    %v3197 = vtanh.pop %v3193
    %v3198 = vtanh.pop %v3194
    %v3199 = vtanh.pop %v3195
    %v3200 = vmul.f32 %v3196, 0.5
    %v3201 = vmul.f32 %v3197, 0.5
    %v3202 = vmul.f32 %v3199, 0.5
    %v3203 = vadd.f32 %v3200, 0.5
    %v3204 = vadd.f32 %v3201, 0.5
    %v3205 = vadd.f32 %v3202, 0.5
    %v3207 = vrot.slane %v3044, 4
    %v3209 = vmul.f32 %v3204, %v3207
    %v3210 = vmul.f32 %v3203, %v3198
    %v3211 = vadd.f32 %v3209, %v3210
    %v3212 = vtanh.pop %v3211
    %v3213 = vmul.f32 %v3205, %v3212
    %v3214 = vld [vmem:[#allocation3 + $0x20] sm:$0xff]
    %3216 = vrot.lane.b32.xlu0 %v3213, 64
    %v3217 = vpop.permute.xlu0 %3216
    %vm3219 = vcmask 519168
    %v3220 = vsel %vm3219, %v3217, 0.0
    %3221 = vadd.xlane.f32.xlu0 %v3220
    %v3222 = vpop.xlane.xlu0 %3221
    %v3223 = vrcp.pop 64.0
    %v3224 = vmul.f32 %v3222, %v3223
    %v3225 = vsub.f32 %v3213, %v3224
    %v3226 = vmul.f32 %v3225, %v3225
    %3228 = vrot.lane.b32.xlu0 %v3226, 64
    %v3229 = vpop.permute.xlu0 %3228
    %v3231 = vsel %vm3219, %v3229, 0.0
    %3232 = vadd.xlane.f32.xlu0 %v3231
    %v3233 = vpop.xlane.xlu0 %3232
    %v3234 = vmul.f32 %v3233, %v3223
    %v3235 = vadd.f32 %v3234, 1e-05
    %v3236 = vrsqrt.pop %v3235
    %v3237 = vmul.f32 %v3225, %v3236
    %v3238 = vlaneseq
    %v3239 = vshrl.u32 %v3238, 7
    %v3240 = vsub.s32 0, %v3239
    %v3241 = vrot.slane %v3214, %v3240
    %3243 = vrot.lane.b32.xlu0 %v3241, 64
    %v3244 = vpop.permute.xlu0 %3243
    %v3246 = vmul.f32 %v3237, %v3244
    %v3247 = vlaneseq
    %v3248 = vshrl.u32 %v3247, 7
    %v3249 = vsub.s32 1, %v3248
    %v3250 = vrot.slane %v3214, %v3249
    %3252 = vrot.lane.b32.xlu0 %v3250, 64
    %v3253 = vpop.permute.xlu0 %3252
    %v3255 = vadd.f32 %v3246, %v3253
    %v3256 = vlaneseq
    %v3257 = vshrl.u32 %v3256, 7
    %v3258 = vsub.s32 2, %v3257
    %v3259 = vrot.slane %v3214, %v3258
    %3261 = vrot.lane.b32.xlu0 %v3259, 64
    %v3262 = vpop.permute.xlu0 %3261
    %v3264 = vmul.f32 %v3255, %v3262
    %3266 = vrot.lane.b32.xlu0 %v3264, 64
    %v3267 = vpop.permute.xlu0 %3266
    %v3269 = vsel %vm3219, %v3267, 0.0
    %3270 = vadd.xlane.f32.xlu0 %v3269
    %v3271 = vpop.xlane.xlu0 %3270
    %v3272 = vlaneseq
    %v3273 = vshrl.u32 %v3272, 7
    %v3274 = vsub.s32 3, %v3273
    %v3275 = vrot.slane %v3214, %v3274
    %v3276 = vadd.f32 %v3271, %v3275
    %vm3277 = vcmask 3072
    %3278 = vst.msk [vmem:[%s2] sm:$0xf] %vm3277, %v3276
    // Predicated region
    $region14: #{tpu_custom_call.1} parent=1 // pred_check
      _
    $region15: #{tpu_custom_call.1} parent=1 // pred_check_branch
      %3280 = sbr.rel (0) target = $region17
    $region16: #{tpu_custom_call.1} parent=1 // pred_region
      _
    $region17: #{tpu_custom_call.1} parent=1 // pred_fallthru
      _
    // Predicated region
    $region18: #{tpu_custom_call.1} parent=1 // pred_check
      _
    $region19: #{tpu_custom_call.1} parent=1 // pred_check_branch
      %3282 = sbr.rel (0) target = $region21
    $region20: #{tpu_custom_call.1} parent=1 // pred_region
      _
    $region21: #{tpu_custom_call.1} parent=1 // pred_fallthru
      _
    %3283 = vsyncpa [#allocation4], 1

</llo_original>
